<compile_context>
chip_gen: v5e
topology: v5e:2x2
jax: 0.10.0
libtpu: 0.0.40
codegen_flags: <defaults>
</compile_context>

<pallas_src>
import functools

import jax
import jax.numpy as jnp
from jax import lax
from jax.experimental import pallas as pl
from jax.experimental.pallas import tpu as pltpu


# ----------------------------------------------------------------------------
# Pallas kernel: base_feat_transform + bias + LeakyReLU, native NCTHW input.
#   x_ref : (1, Cb, tm)  f32   -- one channels-first activation slab
#   w_ref : (Cb, N)      bf16  -- resident weight
#   b_ref : (1, N)       f32
#   o_ref : (1, tm, N)   f32   -- channels-last output tile
# ----------------------------------------------------------------------------
def _bft_kernel(x_ref, w_ref, b_ref, o_ref, *, neg_slope):
    x = x_ref[0].astype(jnp.bfloat16)                  # (Cb, tm), cast in VMEM
    # contract Cb (sublane axis of the activation slab): (Cb,tm)x(Cb,N)->(tm,N)
    out = lax.dot_general(x, w_ref[...], (((0,), (0,)), ((), ())),
                          preferred_element_type=jnp.float32)
    out = out + b_ref[...]
    out = jnp.where(out >= 0, out, neg_slope * out)    # LeakyReLU in f32
    o_ref[0] = out.astype(o_ref.dtype)


def _choose_tm(M):
    if M <= 512:
        return M                       # single full-extent block per batch
    for tm in (512, 256, 128):         # largest tile that divides M (no pad)
        if M % tm == 0:
            return tm
    return 512                         # ragged tail: OOB output rows dropped


def base_feat_transform(base_feat, w, b, *, neg_slope=0.01):
    """(B, Cb, T, h, w) -> (B, T*h*w, N) with y = LeakyReLU(x @ w + b)."""
    B, Cb, T, h, w_sp = base_feat.shape
    M = T * h * w_sp
    Cb2, N = w.shape
    assert Cb == Cb2 and Cb % 8 == 0 and N % 128 == 0

    x = base_feat.reshape(B, Cb, M)          # contiguous view, no copy
    tm = _choose_tm(M)
    grid = (B, pl.cdiv(M, tm))

    kernel = functools.partial(_bft_kernel, neg_slope=neg_slope)
    out = pl.pallas_call(
        kernel,
        out_shape=jax.ShapeDtypeStruct((B, M, N), jnp.float32),
        grid_spec=pltpu.PrefetchScalarGridSpec(
            num_scalar_prefetch=0,
            grid=grid,
            in_specs=[
                pl.BlockSpec((1, Cb, tm), lambda bi, mi: (bi, 0, mi)),  # x slab
                pl.BlockSpec((Cb, N), lambda bi, mi: (0, 0)),           # weight
                pl.BlockSpec((1, N), lambda bi, mi: (0, 0)),            # bias
            ],
            out_specs=pl.BlockSpec((1, tm, N), lambda bi, mi: (bi, mi, 0)),
        ),
        compiler_params=pltpu.CompilerParams(
            dimension_semantics=("parallel", "parallel")),
    )(x, w.astype(jnp.bfloat16), b.reshape(1, N).astype(jnp.float32))
    return out


# ----------------------------------------------------------------------------
# Box pooling weights (stand-in for RoIAlign(7,7,1/32) + AvgPool2d(7))
# ----------------------------------------------------------------------------
def box_pool_weights(box, h, w, spatial_scale):
    # box: (B, T, n_box, 4) pixel coords (x1, y1, x2, y2)
    B, T, n_box, _ = box.shape
    fx1 = box[..., 0] * spatial_scale
    fy1 = box[..., 1] * spatial_scale
    fx2 = box[..., 2] * spatial_scale
    fy2 = box[..., 3] * spatial_scale
    xs = jnp.arange(w, dtype=jnp.float32) + 0.5
    ys = jnp.arange(h, dtype=jnp.float32) + 0.5
    in_x = (xs[None, None, None, :] >= fx1[..., None]) & \
           (xs[None, None, None, :] <= fx2[..., None])        # (B,T,n_box,w)
    in_y = (ys[None, None, None, :] >= fy1[..., None]) & \
           (ys[None, None, None, :] <= fy2[..., None])        # (B,T,n_box,h)
    mask = (in_y[..., :, None] & in_x[..., None, :]).astype(jnp.float32)
    mask = mask.reshape(B, T, n_box, h * w)
    count = jnp.maximum(mask.sum(-1, keepdims=True), 1.0)
    return (mask / count).reshape(B * T, n_box, h * w)


# ----------------------------------------------------------------------------
# NAS_layer (JAX glue; MixedOp is undefined upstream)
# ----------------------------------------------------------------------------
def nas_layer(local_feat, global_feat, pos, ops_weights, steps, training=True):
    # local_feat: (B, T, n_box, C); ops_weights: (B, k, num_ops)
    if training:
        w = jax.nn.softmax(
            ops_weights - jnp.max(ops_weights, axis=-1, keepdims=True), axis=-1)
    else:
        wmax = jnp.max(ops_weights, axis=-1, keepdims=True)
        # TODO(synk): on tied max weights this marks several ops (matches the
        # torch.where formulation in the source, not an argmax one-hot).
        w = jnp.where(ops_weights < wmax, 0.0, 1.0)
    # torch.var defaults to unbiased (ddof=1)
    var_loss = jnp.mean(jnp.var(jnp.sum(w, axis=1), axis=1, ddof=1))

    states = [local_feat]
    offset = 0
    for i in range(steps):
        l_f = []
        for j, h in enumerate(states):
            # TODO(synk): MixedOp / PRIMITIVES are not defined in the source;
            # each mixed op is stood in by an identity op scaled by the sum of
            # its softmaxed architecture weights.
            w_sum = jnp.sum(w[:, offset + j, :], axis=-1)      # (B,)
            l_f.append(h * w_sum[:, None, None, None])
        l_f = jnp.sum(jnp.stack(l_f, axis=-1), axis=-1)
        offset += len(states)
        states.append(l_f)
    local_out = jnp.concatenate(states[1:], axis=-1)
    return local_out, var_loss


# ----------------------------------------------------------------------------
# NASGCN forward
# ----------------------------------------------------------------------------
def nasgcn_forward(params, base_feat, box, *, n_box_per_frame, steps, num_ops,
                   time_length, height, width, training=True):
    # base_feat: (B, 2048, T, h, w) -- output of the (external) CNN backbone.
    B, Cb, T, h, w = base_feat.shape

    # base_feat_transform (2048 -> 256) + LeakyReLU, reading NCTHW directly.
    out = base_feat_transform(base_feat, params["w_bft"], params["b_bft"])
    C = out.shape[-1]
    global_nodes = out.reshape(B, T, h * w, C)                  # (B,T,HW,256)

    # temporal subsampling of boxes to the backbone's temporal length
    stride = time_length // T
    box = box[:, ::stride]                                      # (B,T,n_box,4)

    # TODO(synk): local_layout() is undefined upstream; pos (normalized boxes)
    # is only consumed by the undefined MixedOp, so it is passed through unused.
    pos = box / jnp.array([width, height, width, height], jnp.float32)

    # TODO(synk): RoIAlign(7,7,1/32) + AvgPool2d(7) (and add_index) replaced by
    # a box-interior masked average over feature cells.  Total work is well
    # below pallas_call overhead, so it is left to XLA to fuse (per review).
    pool_w = box_pool_weights(box, h, w, 1.0 / 32.0)            # (B*T,n_box,HW)
    local_nodes = jnp.einsum("bnk,bkc->bnc", pool_w,
                             global_nodes.reshape(B * T, h * w, C))
    local_nodes = local_nodes.reshape(B, T, n_box_per_frame, C)

    pooled_global = global_nodes.mean(axis=1).mean(axis=1)      # (B, 256)

    # arch_weights: (B,256)@(256,num_ops*k) -- too small for a Pallas call.
    ops_weights = pooled_global @ params["w_arch"] + params["b_arch"]
    ops_weights = ops_weights.reshape(B, -1, num_ops)           # (B, k, num_ops)

    local_nodes, op_loss = nas_layer(local_nodes, global_nodes, pos,
                                     ops_weights, steps, training)

    feat = jnp.concatenate(
        [local_nodes.mean(axis=1).mean(axis=1), pooled_global], axis=-1)  # (B,1024)
    # cls_fc: (B,1024)@(1024,num_classes) -- also tiny; plain JAX.
    score = feat @ params["w_cls"] + params["b_cls"]
    return score, op_loss


if __name__ == "__main__":
    B = 2
    time_length = 8
    H = W = 128
    T = 4              # backbone temporal length (time // 2)
    h = w = 4          # H/32, W/32
    n_box = 4
    steps = 3          # cat of 3 states of 256ch -> 768; +256 global = 1024
    num_ops = 8        # TODO(synk): len(PRIMITIVES) unavailable; assume 8.
    num_classes = 10

    key = jax.random.PRNGKey(0)
    k_feat, k_box, k1, k2, k3 = jax.random.split(key, 5)

    # TODO(synk): CNN_base backbone is supplied externally via _init_modules;
    # its output feature map (B, 2048, T, h, w) is synthesized directly here.
    base_feat = jax.random.normal(
        jax.random.fold_in(k_feat, 1), (B, 2048, T, h, w), jnp.float32) * 0.1

    # boxes (x1, y1, x2, y2) in pixel coordinates
    cx = jax.random.uniform(k_box, (B, time_length, n_box, 1),
                            minval=32.0, maxval=96.0)
    cy = jax.random.uniform(jax.random.fold_in(k_box, 1),
                            (B, time_length, n_box, 1), minval=32.0, maxval=96.0)
    half = jax.random.uniform(jax.random.fold_in(k_box, 2),
                              (B, time_length, n_box, 2), minval=24.0, maxval=48.0)
    box = jnp.concatenate([
        jnp.clip(cx - half[..., :1], 0.0, W - 1.0),
        jnp.clip(cy - half[..., 1:], 0.0, H - 1.0),
        jnp.clip(cx + half[..., :1], 0.0, W - 1.0),
        jnp.clip(cy + half[..., 1:], 0.0, H - 1.0),
    ], axis=-1)

    k_arch = sum(1 for i in range(steps) for _ in range(1 + i))  # = 6
    params = {
        "w_bft": jax.random.normal(k1, (2048, 256), jnp.float32) * (2.0 / 2048) ** 0.5,
        "b_bft": jnp.zeros((256,), jnp.float32),
        "w_arch": jax.random.normal(k2, (256, num_ops * k_arch), jnp.float32) * (2.0 / 256) ** 0.5,
        "b_arch": jnp.zeros((num_ops * k_arch,), jnp.float32),
        "w_cls": jax.random.normal(k3, (1024, num_classes), jnp.float32) * (2.0 / 1024) ** 0.5,
        "b_cls": jnp.zeros((1024 if False else 1024, num_classes), jnp.float32)[0] * 0.0
                 + jnp.zeros((num_classes,), jnp.float32),
    }

    score, op_loss = nasgcn_forward(
        params, base_feat, box,
        n_box_per_frame=n_box, steps=steps, num_ops=num_ops,
        time_length=time_length, height=H, width=W, training=True)
    jax.block_until_ready((score, op_loss))
    assert score.shape == (B, num_classes)
    assert op_loss.shape == ()
    print("KERNEL_OK")
</pallas_src>

<mosaic_0001>
module attributes {stable_mosaic.version = 11 : i64} {
  func.func @_bft_kernel(%arg0: i32, %arg1: i32, %arg2: memref<1x2048x64xf32, #tpu.memory_space<vmem>>, %arg3: memref<2048x256xbf16, #tpu.memory_space<vmem>>, %arg4: memref<1x256xf32, #tpu.memory_space<vmem>>, %arg5: memref<1x64x256xf32, #tpu.memory_space<vmem>>) attributes {dimension_semantics = [#tpu.dimension_semantics<parallel>, #tpu.dimension_semantics<parallel>], iteration_bounds = array<i64: 2, 1>, scalar_prefetch = 0 : i64, scratch_operands = 0 : i64, tpu.core_type = #tpu.core_type<tc>, window_params = [{transform_indices = @transform_0, window_bounds = array<i64: 1, 2048, 64>}, {pipeline_mode = #tpu.pipeline_mode<synchronous>, transform_indices = @transform_1, window_bounds = array<i64: 2048, 256>}, {pipeline_mode = #tpu.pipeline_mode<synchronous>, transform_indices = @transform_2, window_bounds = array<i64: 1, 256>}, {transform_indices = @transform_3, window_bounds = array<i64: 1, 64, 256>}]} {
    %c0 = arith.constant 0 : index
    %c0_0 = arith.constant 0 : index
    %c0_1 = arith.constant 0 : index
    %0 = vector.load %arg2[%c0, %c0_0, %c0_1] : memref<1x2048x64xf32, #tpu.memory_space<vmem>>, vector<1x2048x64xf32>
    %1 = vector.shape_cast %0 : vector<1x2048x64xf32> to vector<2048x64xf32>
    %2 = arith.truncf %1 : vector<2048x64xf32> to vector<2048x64xbf16>
    %c0_2 = arith.constant 0 : index
    %c0_3 = arith.constant 0 : index
    %3 = vector.load %arg3[%c0_2, %c0_3] : memref<2048x256xbf16, #tpu.memory_space<vmem>>, vector<2048x256xbf16>
    %cst = arith.constant dense<0.000000e+00> : vector<64x256xf32>
    %4 = tpu.matmul %2, %3, %cst {dimension_numbers = #tpu.dot_dimension_numbers<[0], [0], [1], [1], [0, 1, 1, 1], [], []>} : vector<2048x64xbf16>, vector<2048x256xbf16>, vector<64x256xf32> -> vector<64x256xf32>
    %c0_4 = arith.constant 0 : index
    %c0_5 = arith.constant 0 : index
    %5 = vector.load %arg4[%c0_4, %c0_5] : memref<1x256xf32, #tpu.memory_space<vmem>>, vector<1x256xf32>
    %6 = vector.broadcast %5 : vector<1x256xf32> to vector<64x256xf32>
    %7 = arith.addf %4, %6 : vector<64x256xf32>
    %cst_6 = arith.constant 0.000000e+00 : f32
    %8 = vector.broadcast %cst_6 : f32 to vector<64x256xf32>
    %9 = arith.cmpf oge, %7, %8 : vector<64x256xf32>
    %cst_7 = arith.constant 0.00999999977 : f32
    %10 = vector.broadcast %cst_7 : f32 to vector<64x256xf32>
    %11 = arith.mulf %10, %7 : vector<64x256xf32>
    %12 = arith.select %9, %7, %11 : vector<64x256xi1>, vector<64x256xf32>
    %c0_8 = arith.constant 0 : index
    %c0_9 = arith.constant 0 : index
    %c0_10 = arith.constant 0 : index
    %13 = vector.load %arg5[%c0_8, %c0_9, %c0_10] : memref<1x64x256xf32, #tpu.memory_space<vmem>>, vector<1x64x256xf32>
    %14 = vector.shape_cast %13 : vector<1x64x256xf32> to vector<64x256xf32>
    %15 = vector.shape_cast %12 : vector<64x256xf32> to vector<1x64x256xf32>
    tpu.vector_store %arg5[%c0_8, %c0_9, %c0_10], %15 {strides = array<i32>} : memref<1x64x256xf32, #tpu.memory_space<vmem>>, vector<1x64x256xf32>,
    return
  }
  func.func @transform_0(%arg0: i32, %arg1: i32) -> (i32, i32, i32) {
    %c0_i32 = arith.constant 0 : i32
    %c0_i32_0 = arith.constant 0 : i32
    return %arg0, %c0_i32, %arg1 : i32, i32, i32
  }
  func.func @transform_1(%arg0: i32, %arg1: i32) -> (i32, i32) {
    %c0_i32 = arith.constant 0 : i32
    %c0_i32_0 = arith.constant 0 : i32
    %c0_i32_1 = arith.constant 0 : i32
    return %c0_i32, %c0_i32_0 : i32, i32
  }
  func.func @transform_2(%arg0: i32, %arg1: i32) -> (i32, i32) {
    %c0_i32 = arith.constant 0 : i32
    %c0_i32_0 = arith.constant 0 : i32
    %c0_i32_1 = arith.constant 0 : i32
    return %c0_i32, %c0_i32_0 : i32, i32
  }
  func.func @transform_3(%arg0: i32, %arg1: i32) -> (i32, i32, i32) {
    %c0_i32 = arith.constant 0 : i32
    %c0_i32_0 = arith.constant 0 : i32
    return %arg0, %arg1, %c0_i32 : i32, i32, i32
  }
}

</mosaic_0001>

<llo_original>
// kernel: tpu_custom_call.1
$region0: #{tpu_custom_call.1}
  #allocation0 [shape = 'u32[]', space=smem, size = 0x4, offset = 0x4, fixed_abs, tag = 'smem constant byte address 0x4 - core index']
  #allocation1 [shape = 'u32[72,128]{1,0:T(1,128)}', space=vmem, size = 0x9000, scoped, tag = 'internal scratch']
  %s0 = inlined_call_operand.vmem [shape: f32[2,2048,64], index: 0, kind: input, shape index: {}]
  %s1 = inlined_call_operand.vmem [shape: bf16[2048,256], index: 1, kind: input, shape index: {}]
  %s2 = inlined_call_operand.vmem [shape: f32[1,256], index: 2, kind: input, shape index: {}]
  %s3 = inlined_call_operand.hbm [shape: f32[2,64,256], index: 3, kind: output, shape index: {}]
  %s4 = sld [smem:[#allocation0]]
  $region45: #{tpu_custom_call.1} parent=0
    _
  %s6 = ssub.s32 1, %s4
  %s7 = scalar_select 0, %s6, %s4
  $region1: #{tpu_custom_call.1} parent=0
    #allocation2 [shape = 'u8[131072]{0}', space=vmem, size = 0x20000, scoped, tag = 'output window, operand 0']
    #allocation3 [shape = 's32[2]{0}', space=sflag, size = 0x8, scoped, tag = 'scoped memory for tpu_custom_call.1']
    %8 = vsyncpa [#allocation3], 0
    %s9 = scalar_lea.sflag [#allocation3], 1
    %10 = vsyncpa %s9, 0
    loop: start=0, step=1, limit=4
    $region2: #{tpu_custom_call.1} parent=1 // loop_pre_header
      _
    $region3: #{tpu_custom_call.1} parent=1 // loop_header
      %s12 = sphi 0, %s16
      %p13 = scmp.ge.s32.totalorder %s12, 4
      %s19 = sphi 0, %s31
      %s20 = sphi 0, %s27
      %s21 = sphi 0, %s19
      %s22 = sphi 0, %s20
      %s23 = sphi 0, %s21
      %s24 = sphi 0, %s22
      %s36 = sphi 0, %s38
      %s39 = sphi 0, %s36
      %s40 = sphi 0, %s39
      %s56 = sphi 0, %s40
      %s60 = sphi 0, %s60
      %s62 = sphi 0, %s60
      %s63 = sphi 0, %s62
      %s77 = sphi 0, %s63
      %s81 = sphi 0, %s81
      %s83 = sphi 0, %s81
      %s84 = sphi 0, %s83
      %s98 = sphi 0, %s84
      %s106 = sphi 0, %s108
      %s109 = sphi 0, %s106
      %s110 = sphi 0, %s109
      %s126 = sphi 0, %s110
    $region4: #{tpu_custom_call.1} parent=1 // loop_header_branch
      %15 = sbr.rel (%p13) target = $region8
    $region5: #{tpu_custom_call.1} parent=1 // loop_body
      %s17 = ssub.s32 %s12, 1
      %s18 = ssub.s32 %s12, 2
      %s25 = sadd.s32 1, %s20
      %p26 = scmp.ge.s32.totalorder %s25, 1
      %s27 = scalar_select %p26, 0, %s25
      %s28 = sadd.s32 1, %s19
      %s29 = scalar_select %p26, %s28, %s19
      %p30 = scmp.ge.s32.totalorder %s29, 2
      %s31 = scalar_select %p30, 0, %s29
      %s32 = ssub.s32 %s19, %s31
      %s33 = ssub.s32 %s20, %s27
      %s34 = sor.u32 %s32, %s33
      %p35 = scmp.eq.s32.totalorder %s34, 0
      %s37 = sadd.s32 %s36, 1
      %s38 = scalar_select %p35, %s36, %s37
      %p41 = pneg %p35
      %p42 = scmp.eq.s32.totalorder %s12, 1
      %p43 = por %p41, %p42
      %p44 = scmp.ne.s32.totalorder %s36, %s39
      %p45 = scmp.eq.s32.totalorder %s12, 0
      %p46 = por %p44, %p45
      %p47 = scmp.ne.s32.totalorder %s36, %s39
      %p48 = scmp.eq.s32.totalorder %s17, 1
      %p49 = por %p47, %p48
      %p50 = scmp.ne.s32.totalorder %s39, %s40
      %p51 = scmp.eq.s32.totalorder %s17, 0
      %p52 = por %p50, %p51
      %p53 = scmp.ne.s32.totalorder %s39, %s40
      %p54 = scmp.eq.s32.totalorder %s18, 1
      %p55 = por %p53, %p54
      %p57 = scmp.ne.s32.totalorder %s40, %s56
      %p58 = scmp.eq.s32.totalorder %s18, 0
      %p59 = por %p57, %p58
      %s61 = sadd.s32 %s60, 1
      %p64 = scmp.eq.s32.totalorder %s12, 1
      %p65 = scmp.ne.s32.totalorder %s60, %s62
      %p66 = scmp.eq.s32.totalorder %s12, 0
      %p67 = por %p65, %p66
      %p68 = scmp.ne.s32.totalorder %s60, %s62
      %p69 = scmp.eq.s32.totalorder %s17, 1
      %p70 = por %p68, %p69
      %p71 = scmp.ne.s32.totalorder %s62, %s63
      %p72 = scmp.eq.s32.totalorder %s17, 0
      %p73 = por %p71, %p72
      %p74 = scmp.ne.s32.totalorder %s62, %s63
      %p75 = scmp.eq.s32.totalorder %s18, 1
      %p76 = por %p74, %p75
      %p78 = scmp.ne.s32.totalorder %s63, %s77
      %p79 = scmp.eq.s32.totalorder %s18, 0
      %p80 = por %p78, %p79
      %s82 = sadd.s32 %s81, 1
      %p85 = scmp.eq.s32.totalorder %s12, 1
      %p86 = scmp.ne.s32.totalorder %s81, %s83
      %p87 = scmp.eq.s32.totalorder %s12, 0
      %p88 = por %p86, %p87
      %p89 = scmp.ne.s32.totalorder %s81, %s83
      %p90 = scmp.eq.s32.totalorder %s17, 1
      %p91 = por %p89, %p90
      %p92 = scmp.ne.s32.totalorder %s83, %s84
      %p93 = scmp.eq.s32.totalorder %s17, 0
      %p94 = por %p92, %p93
      %p95 = scmp.ne.s32.totalorder %s83, %s84
      %p96 = scmp.eq.s32.totalorder %s18, 1
      %p97 = por %p95, %p96
      %p99 = scmp.ne.s32.totalorder %s84, %s98
      %p100 = scmp.eq.s32.totalorder %s18, 0
      %p101 = por %p99, %p100
      %s102 = ssub.s32 %s19, %s31
      %s103 = ssub.s32 %s20, %s27
      %s104 = sor.u32 %s102, %s103
      %p105 = scmp.eq.s32.totalorder %s104, 0
      %s107 = sadd.s32 %s106, 1
      %s108 = scalar_select %p105, %s106, %s107
      %p111 = pneg %p105
      %p112 = scmp.eq.s32.totalorder %s12, 1
      %p113 = por %p111, %p112
      %p114 = scmp.ne.s32.totalorder %s106, %s109
      %p115 = scmp.eq.s32.totalorder %s12, 0
      %p116 = por %p114, %p115
      %p117 = scmp.ne.s32.totalorder %s106, %s109
      %p118 = scmp.eq.s32.totalorder %s17, 1
      %p119 = por %p117, %p118
      %p120 = scmp.ne.s32.totalorder %s109, %s110
      %p121 = scmp.eq.s32.totalorder %s17, 0
      %p122 = por %p120, %p121
      %p123 = scmp.ne.s32.totalorder %s109, %s110
      %p124 = scmp.eq.s32.totalorder %s18, 1
      %p125 = por %p123, %p124
      %p127 = scmp.ne.s32.totalorder %s110, %s126
      %p128 = scmp.eq.s32.totalorder %s18, 0
      %p129 = por %p127, %p128
      %p130 = scmp.le.s32.totalorder 1, %s12
      %p131 = scmp.lt.s32.totalorder %s12, 3
      %p132 = pnand %p130, %p131
      %p133 = pneg %p132
      // Predicated region
      $region9: #{tpu_custom_call.1} parent=5 // pred_check
        _
      $region10: #{tpu_custom_call.1} parent=5 // pred_check_branch
        %135 = sbr.rel (%p132) target = $region12
      $region11: #{tpu_custom_call.1} parent=5 // pred_region
        %s136 = ssub.s32 %s12, 1
        // Predicated region
        $region13: #{tpu_custom_call.1} parent=11 // pred_check
          %p137 = pneg %p73
        $region14: #{tpu_custom_call.1} parent=11 // pred_check_branch
          %139 = sbr.rel (%p137) target = $region16
        $region15: #{tpu_custom_call.1} parent=11 // pred_region
          _
        $region16: #{tpu_custom_call.1} parent=11 // pred_fallthru
          _
        // Predicated region
        $region17: #{tpu_custom_call.1} parent=11 // pred_check
          %p140 = pneg %p94
        $region18: #{tpu_custom_call.1} parent=11 // pred_check_branch
          %142 = sbr.rel (%p140) target = $region20
        $region19: #{tpu_custom_call.1} parent=11 // pred_region
          _
        $region20: #{tpu_custom_call.1} parent=11 // pred_fallthru
          _
      $region12: #{tpu_custom_call.1} parent=5 // pred_fallthru
        _
      %p143 = scmp.lt.s32.totalorder %s12, 2
      // Predicated region
      $region21: #{tpu_custom_call.1} parent=5 // pred_check
        %p144 = pneg %p143
      $region22: #{tpu_custom_call.1} parent=5 // pred_check_branch
        %146 = sbr.rel (%p144) target = $region24
      $region23: #{tpu_custom_call.1} parent=5 // pred_region
        // Predicated region
        $region25: #{tpu_custom_call.1} parent=23 // pred_check
          %p147 = pneg %p46
        $region26: #{tpu_custom_call.1} parent=23 // pred_check_branch
          %149 = sbr.rel (%p147) target = $region28
        $region27: #{tpu_custom_call.1} parent=23 // pred_region
          %p150 = scmp.lt.s32.totalorder %s19, 1
          %s151 = scalar_select %p150, %s19, 1
          %p152 = scmp.lt.s32.totalorder %s20, 0
          %s153 = scalar_select %p152, %s20, 0
          %s154 = smul.addr %s151, 256
          %s155 = sadd.s32 %s153, %s154
          %s156 = smul.addr %s155, 8
          %s157 = scalar_lea.vmem %s0, %s156
        $region28: #{tpu_custom_call.1} parent=23 // pred_fallthru
          _
      $region24: #{tpu_custom_call.1} parent=5 // pred_fallthru
        _
      %p158 = scmp.le.s32.totalorder 1, %s12
      %p159 = scmp.lt.s32.totalorder %s12, 3
      %p160 = pnand %p158, %p159
      %p161 = pneg %p160
      // Predicated region
      $region29: #{tpu_custom_call.1} parent=5 // pred_check
        _
      $region30: #{tpu_custom_call.1} parent=5 // pred_check_branch
        %163 = sbr.rel (%p160) target = $region32
      $region31: #{tpu_custom_call.1} parent=5 // pred_region
        %s164 = ssub.s32 %s12, 1
        %p165 = scmp.lt.s32.totalorder %s21, 1
        %s166 = scalar_select %p165, %s21, 1
        %p167 = scmp.lt.s32.totalorder %s22, 0
        %s168 = scalar_select %p167, %s22, 0
        %s169 = smul.addr %s166, 256
        %s170 = sadd.s32 %s168, %s169
        %s171 = smul.addr %s170, 8
        %s172 = scalar_lea.vmem %s0, %s171
        %p173 = pneg %p52
        %p174 = pneg %p49
        %p175 = pneg %p73
        %p176 = pneg %p70
        %p177 = pneg %p94
        %p178 = pneg %p91
        %p179 = pneg %p122
        %p180 = pneg %p119
        %s181 = sand.u32 %s109, 1
        %s182 = scalar_lea.sflag [#allocation3], %s181
        %s183 = sand.u32 %s109, 1
        %s184 = smul.addr %s183, 128
        %s185 = scalar_lea.vmem [#allocation2], %s184
        %p186 = scmp.lt.s32.totalorder %s21, 1
        %s187 = scalar_select %p186, %s21, 1
        %p188 = scmp.lt.s32.totalorder %s22, 0
        %s189 = scalar_select %p188, %s22, 0
        %s190 = smul.addr %s187, 256
        %s191 = sadd.s32 %s189, %s190
        %s192 = smul.addr %s191, 8
        %s193 = scalar_lea.vmem %s0, %s192
        %s194 = smul.u32 8, %s22
        %v195 = vld [vmem:[%s193] sm:$0xff]
        %v196 = vld [vmem:[%s193 + $0x8] sm:$0xff]
        %v197 = vld [vmem:[%s193 + $0x10] sm:$0xff]
        %v198 = vld [vmem:[%s193 + $0x18] sm:$0xff]
        %v199 = vld [vmem:[%s193 + $0x20] sm:$0xff]
        %v200 = vld [vmem:[%s193 + $0x28] sm:$0xff]
        %v201 = vld [vmem:[%s193 + $0x30] sm:$0xff]
        %v202 = vld [vmem:[%s193 + $0x38] sm:$0xff]
        %v203 = vld [vmem:[%s193 + $0x40] sm:$0xff]
        %v204 = vld [vmem:[%s193 + $0x48] sm:$0xff]
        %v205 = vld [vmem:[%s193 + $0x50] sm:$0xff]
        %v206 = vld [vmem:[%s193 + $0x58] sm:$0xff]
        %v207 = vld [vmem:[%s193 + $0x60] sm:$0xff]
        %v208 = vld [vmem:[%s193 + $0x68] sm:$0xff]
        %v209 = vld [vmem:[%s193 + $0x70] sm:$0xff]
        %v210 = vld [vmem:[%s193 + $0x78] sm:$0xff]
        %v211 = vld [vmem:[%s193 + $0x80] sm:$0xff]
        %v212 = vld [vmem:[%s193 + $0x88] sm:$0xff]
        %v213 = vld [vmem:[%s193 + $0x90] sm:$0xff]
        %v214 = vld [vmem:[%s193 + $0x98] sm:$0xff]
        %v215 = vld [vmem:[%s193 + $0xa0] sm:$0xff]
        %v216 = vld [vmem:[%s193 + $0xa8] sm:$0xff]
        %v217 = vld [vmem:[%s193 + $0xb0] sm:$0xff]
        %v218 = vld [vmem:[%s193 + $0xb8] sm:$0xff]
        %v219 = vld [vmem:[%s193 + $0xc0] sm:$0xff]
        %v220 = vld [vmem:[%s193 + $0xc8] sm:$0xff]
        %v221 = vld [vmem:[%s193 + $0xd0] sm:$0xff]
        %v222 = vld [vmem:[%s193 + $0xd8] sm:$0xff]
        %v223 = vld [vmem:[%s193 + $0xe0] sm:$0xff]
        %v224 = vld [vmem:[%s193 + $0xe8] sm:$0xff]
        %v225 = vld [vmem:[%s193 + $0xf0] sm:$0xff]
        %v226 = vld [vmem:[%s193 + $0xf8] sm:$0xff]
        %v227 = vld [vmem:[%s193 + $0x100] sm:$0xff]
        %v228 = vld [vmem:[%s193 + $0x108] sm:$0xff]
        %v229 = vld [vmem:[%s193 + $0x110] sm:$0xff]
        %v230 = vld [vmem:[%s193 + $0x118] sm:$0xff]
        %v231 = vld [vmem:[%s193 + $0x120] sm:$0xff]
        %v232 = vld [vmem:[%s193 + $0x128] sm:$0xff]
        %v233 = vld [vmem:[%s193 + $0x130] sm:$0xff]
        %v234 = vld [vmem:[%s193 + $0x138] sm:$0xff]
        %v235 = vld [vmem:[%s193 + $0x140] sm:$0xff]
        %v236 = vld [vmem:[%s193 + $0x148] sm:$0xff]
        %v237 = vld [vmem:[%s193 + $0x150] sm:$0xff]
        %v238 = vld [vmem:[%s193 + $0x158] sm:$0xff]
        %v239 = vld [vmem:[%s193 + $0x160] sm:$0xff]
        %v240 = vld [vmem:[%s193 + $0x168] sm:$0xff]
        %v241 = vld [vmem:[%s193 + $0x170] sm:$0xff]
        %v242 = vld [vmem:[%s193 + $0x178] sm:$0xff]
        %v243 = vld [vmem:[%s193 + $0x180] sm:$0xff]
        %v244 = vld [vmem:[%s193 + $0x188] sm:$0xff]
        %v245 = vld [vmem:[%s193 + $0x190] sm:$0xff]
        %v246 = vld [vmem:[%s193 + $0x198] sm:$0xff]
        %v247 = vld [vmem:[%s193 + $0x1a0] sm:$0xff]
        %v248 = vld [vmem:[%s193 + $0x1a8] sm:$0xff]
        %v249 = vld [vmem:[%s193 + $0x1b0] sm:$0xff]
        %v250 = vld [vmem:[%s193 + $0x1b8] sm:$0xff]
        %v251 = vld [vmem:[%s193 + $0x1c0] sm:$0xff]
        %v252 = vld [vmem:[%s193 + $0x1c8] sm:$0xff]
        %v253 = vld [vmem:[%s193 + $0x1d0] sm:$0xff]
        %v254 = vld [vmem:[%s193 + $0x1d8] sm:$0xff]
        %v255 = vld [vmem:[%s193 + $0x1e0] sm:$0xff]
        %v256 = vld [vmem:[%s193 + $0x1e8] sm:$0xff]
        %v257 = vld [vmem:[%s193 + $0x1f0] sm:$0xff]
        %v258 = vld [vmem:[%s193 + $0x1f8] sm:$0xff]
        %v259 = vld [vmem:[%s193 + $0x200] sm:$0xff]
        %v260 = vld [vmem:[%s193 + $0x208] sm:$0xff]
        %v261 = vld [vmem:[%s193 + $0x210] sm:$0xff]
        %v262 = vld [vmem:[%s193 + $0x218] sm:$0xff]
        %v263 = vld [vmem:[%s193 + $0x220] sm:$0xff]
        %v264 = vld [vmem:[%s193 + $0x228] sm:$0xff]
        %v265 = vld [vmem:[%s193 + $0x230] sm:$0xff]
        %v266 = vld [vmem:[%s193 + $0x238] sm:$0xff]
        %v267 = vld [vmem:[%s193 + $0x240] sm:$0xff]
        %v268 = vld [vmem:[%s193 + $0x248] sm:$0xff]
        %v269 = vld [vmem:[%s193 + $0x250] sm:$0xff]
        %v270 = vld [vmem:[%s193 + $0x258] sm:$0xff]
        %v271 = vld [vmem:[%s193 + $0x260] sm:$0xff]
        %v272 = vld [vmem:[%s193 + $0x268] sm:$0xff]
        %v273 = vld [vmem:[%s193 + $0x270] sm:$0xff]
        %v274 = vld [vmem:[%s193 + $0x278] sm:$0xff]
        %v275 = vld [vmem:[%s193 + $0x280] sm:$0xff]
        %v276 = vld [vmem:[%s193 + $0x288] sm:$0xff]
        %v277 = vld [vmem:[%s193 + $0x290] sm:$0xff]
        %v278 = vld [vmem:[%s193 + $0x298] sm:$0xff]
        %v279 = vld [vmem:[%s193 + $0x2a0] sm:$0xff]
        %v280 = vld [vmem:[%s193 + $0x2a8] sm:$0xff]
        %v281 = vld [vmem:[%s193 + $0x2b0] sm:$0xff]
        %v282 = vld [vmem:[%s193 + $0x2b8] sm:$0xff]
        %v283 = vld [vmem:[%s193 + $0x2c0] sm:$0xff]
        %v284 = vld [vmem:[%s193 + $0x2c8] sm:$0xff]
        %v285 = vld [vmem:[%s193 + $0x2d0] sm:$0xff]
        %v286 = vld [vmem:[%s193 + $0x2d8] sm:$0xff]
        %v287 = vld [vmem:[%s193 + $0x2e0] sm:$0xff]
        %v288 = vld [vmem:[%s193 + $0x2e8] sm:$0xff]
        %v289 = vld [vmem:[%s193 + $0x2f0] sm:$0xff]
        %v290 = vld [vmem:[%s193 + $0x2f8] sm:$0xff]
        %v291 = vld [vmem:[%s193 + $0x300] sm:$0xff]
        %v292 = vld [vmem:[%s193 + $0x308] sm:$0xff]
        %v293 = vld [vmem:[%s193 + $0x310] sm:$0xff]
        %v294 = vld [vmem:[%s193 + $0x318] sm:$0xff]
        %v295 = vld [vmem:[%s193 + $0x320] sm:$0xff]
        %v296 = vld [vmem:[%s193 + $0x328] sm:$0xff]
        %v297 = vld [vmem:[%s193 + $0x330] sm:$0xff]
        %v298 = vld [vmem:[%s193 + $0x338] sm:$0xff]
        %v299 = vld [vmem:[%s193 + $0x340] sm:$0xff]
        %v300 = vld [vmem:[%s193 + $0x348] sm:$0xff]
        %v301 = vld [vmem:[%s193 + $0x350] sm:$0xff]
        %v302 = vld [vmem:[%s193 + $0x358] sm:$0xff]
        %v303 = vld [vmem:[%s193 + $0x360] sm:$0xff]
        %v304 = vld [vmem:[%s193 + $0x368] sm:$0xff]
        %v305 = vld [vmem:[%s193 + $0x370] sm:$0xff]
        %v306 = vld [vmem:[%s193 + $0x378] sm:$0xff]
        %v307 = vld [vmem:[%s193 + $0x380] sm:$0xff]
        %v308 = vld [vmem:[%s193 + $0x388] sm:$0xff]
        %v309 = vld [vmem:[%s193 + $0x390] sm:$0xff]
        %v310 = vld [vmem:[%s193 + $0x398] sm:$0xff]
        %v311 = vld [vmem:[%s193 + $0x3a0] sm:$0xff]
        %v312 = vld [vmem:[%s193 + $0x3a8] sm:$0xff]
        %v313 = vld [vmem:[%s193 + $0x3b0] sm:$0xff]
        %v314 = vld [vmem:[%s193 + $0x3b8] sm:$0xff]
        %v315 = vld [vmem:[%s193 + $0x3c0] sm:$0xff]
        %v316 = vld [vmem:[%s193 + $0x3c8] sm:$0xff]
        %v317 = vld [vmem:[%s193 + $0x3d0] sm:$0xff]
        %v318 = vld [vmem:[%s193 + $0x3d8] sm:$0xff]
        %v319 = vld [vmem:[%s193 + $0x3e0] sm:$0xff]
        %v320 = vld [vmem:[%s193 + $0x3e8] sm:$0xff]
        %v321 = vld [vmem:[%s193 + $0x3f0] sm:$0xff]
        %v322 = vld [vmem:[%s193 + $0x3f8] sm:$0xff]
        %v323 = vld [vmem:[%s193 + $0x400] sm:$0xff]
        %v324 = vld [vmem:[%s193 + $0x408] sm:$0xff]
        %v325 = vld [vmem:[%s193 + $0x410] sm:$0xff]
        %v326 = vld [vmem:[%s193 + $0x418] sm:$0xff]
        %v327 = vld [vmem:[%s193 + $0x420] sm:$0xff]
        %v328 = vld [vmem:[%s193 + $0x428] sm:$0xff]
        %v329 = vld [vmem:[%s193 + $0x430] sm:$0xff]
        %v330 = vld [vmem:[%s193 + $0x438] sm:$0xff]
        %v331 = vld [vmem:[%s193 + $0x440] sm:$0xff]
        %v332 = vld [vmem:[%s193 + $0x448] sm:$0xff]
        %v333 = vld [vmem:[%s193 + $0x450] sm:$0xff]
        %v334 = vld [vmem:[%s193 + $0x458] sm:$0xff]
        %v335 = vld [vmem:[%s193 + $0x460] sm:$0xff]
        %v336 = vld [vmem:[%s193 + $0x468] sm:$0xff]
        %v337 = vld [vmem:[%s193 + $0x470] sm:$0xff]
        %v338 = vld [vmem:[%s193 + $0x478] sm:$0xff]
        %v339 = vld [vmem:[%s193 + $0x480] sm:$0xff]
        %v340 = vld [vmem:[%s193 + $0x488] sm:$0xff]
        %v341 = vld [vmem:[%s193 + $0x490] sm:$0xff]
        %v342 = vld [vmem:[%s193 + $0x498] sm:$0xff]
        %v343 = vld [vmem:[%s193 + $0x4a0] sm:$0xff]
        %v344 = vld [vmem:[%s193 + $0x4a8] sm:$0xff]
        %v345 = vld [vmem:[%s193 + $0x4b0] sm:$0xff]
        %v346 = vld [vmem:[%s193 + $0x4b8] sm:$0xff]
        %v347 = vld [vmem:[%s193 + $0x4c0] sm:$0xff]
        %v348 = vld [vmem:[%s193 + $0x4c8] sm:$0xff]
        %v349 = vld [vmem:[%s193 + $0x4d0] sm:$0xff]
        %v350 = vld [vmem:[%s193 + $0x4d8] sm:$0xff]
        %v351 = vld [vmem:[%s193 + $0x4e0] sm:$0xff]
        %v352 = vld [vmem:[%s193 + $0x4e8] sm:$0xff]
        %v353 = vld [vmem:[%s193 + $0x4f0] sm:$0xff]
        %v354 = vld [vmem:[%s193 + $0x4f8] sm:$0xff]
        %v355 = vld [vmem:[%s193 + $0x500] sm:$0xff]
        %v356 = vld [vmem:[%s193 + $0x508] sm:$0xff]
        %v357 = vld [vmem:[%s193 + $0x510] sm:$0xff]
        %v358 = vld [vmem:[%s193 + $0x518] sm:$0xff]
        %v359 = vld [vmem:[%s193 + $0x520] sm:$0xff]
        %v360 = vld [vmem:[%s193 + $0x528] sm:$0xff]
        %v361 = vld [vmem:[%s193 + $0x530] sm:$0xff]
        %v362 = vld [vmem:[%s193 + $0x538] sm:$0xff]
        %v363 = vld [vmem:[%s193 + $0x540] sm:$0xff]
        %v364 = vld [vmem:[%s193 + $0x548] sm:$0xff]
        %v365 = vld [vmem:[%s193 + $0x550] sm:$0xff]
        %v366 = vld [vmem:[%s193 + $0x558] sm:$0xff]
        %v367 = vld [vmem:[%s193 + $0x560] sm:$0xff]
        %v368 = vld [vmem:[%s193 + $0x568] sm:$0xff]
        %v369 = vld [vmem:[%s193 + $0x570] sm:$0xff]
        %v370 = vld [vmem:[%s193 + $0x578] sm:$0xff]
        %v371 = vld [vmem:[%s193 + $0x580] sm:$0xff]
        %v372 = vld [vmem:[%s193 + $0x588] sm:$0xff]
        %v373 = vld [vmem:[%s193 + $0x590] sm:$0xff]
        %v374 = vld [vmem:[%s193 + $0x598] sm:$0xff]
        %v375 = vld [vmem:[%s193 + $0x5a0] sm:$0xff]
        %v376 = vld [vmem:[%s193 + $0x5a8] sm:$0xff]
        %v377 = vld [vmem:[%s193 + $0x5b0] sm:$0xff]
        %v378 = vld [vmem:[%s193 + $0x5b8] sm:$0xff]
        %v379 = vld [vmem:[%s193 + $0x5c0] sm:$0xff]
        %v380 = vld [vmem:[%s193 + $0x5c8] sm:$0xff]
        %v381 = vld [vmem:[%s193 + $0x5d0] sm:$0xff]
        %v382 = vld [vmem:[%s193 + $0x5d8] sm:$0xff]
        %v383 = vld [vmem:[%s193 + $0x5e0] sm:$0xff]
        %v384 = vld [vmem:[%s193 + $0x5e8] sm:$0xff]
        %v385 = vld [vmem:[%s193 + $0x5f0] sm:$0xff]
        %v386 = vld [vmem:[%s193 + $0x5f8] sm:$0xff]
        %v387 = vld [vmem:[%s193 + $0x600] sm:$0xff]
        %v388 = vld [vmem:[%s193 + $0x608] sm:$0xff]
        %v389 = vld [vmem:[%s193 + $0x610] sm:$0xff]
        %v390 = vld [vmem:[%s193 + $0x618] sm:$0xff]
        %v391 = vld [vmem:[%s193 + $0x620] sm:$0xff]
        %v392 = vld [vmem:[%s193 + $0x628] sm:$0xff]
        %v393 = vld [vmem:[%s193 + $0x630] sm:$0xff]
        %v394 = vld [vmem:[%s193 + $0x638] sm:$0xff]
        %v395 = vld [vmem:[%s193 + $0x640] sm:$0xff]
        %v396 = vld [vmem:[%s193 + $0x648] sm:$0xff]
        %v397 = vld [vmem:[%s193 + $0x650] sm:$0xff]
        %v398 = vld [vmem:[%s193 + $0x658] sm:$0xff]
        %v399 = vld [vmem:[%s193 + $0x660] sm:$0xff]
        %v400 = vld [vmem:[%s193 + $0x668] sm:$0xff]
        %v401 = vld [vmem:[%s193 + $0x670] sm:$0xff]
        %v402 = vld [vmem:[%s193 + $0x678] sm:$0xff]
        %v403 = vld [vmem:[%s193 + $0x680] sm:$0xff]
        %v404 = vld [vmem:[%s193 + $0x688] sm:$0xff]
        %v405 = vld [vmem:[%s193 + $0x690] sm:$0xff]
        %v406 = vld [vmem:[%s193 + $0x698] sm:$0xff]
        %v407 = vld [vmem:[%s193 + $0x6a0] sm:$0xff]
        %v408 = vld [vmem:[%s193 + $0x6a8] sm:$0xff]
        %v409 = vld [vmem:[%s193 + $0x6b0] sm:$0xff]
        %v410 = vld [vmem:[%s193 + $0x6b8] sm:$0xff]
        %v411 = vld [vmem:[%s193 + $0x6c0] sm:$0xff]
        %v412 = vld [vmem:[%s193 + $0x6c8] sm:$0xff]
        %v413 = vld [vmem:[%s193 + $0x6d0] sm:$0xff]
        %v414 = vld [vmem:[%s193 + $0x6d8] sm:$0xff]
        %v415 = vld [vmem:[%s193 + $0x6e0] sm:$0xff]
        %v416 = vld [vmem:[%s193 + $0x6e8] sm:$0xff]
        %v417 = vld [vmem:[%s193 + $0x6f0] sm:$0xff]
        %v418 = vld [vmem:[%s193 + $0x6f8] sm:$0xff]
        %v419 = vld [vmem:[%s193 + $0x700] sm:$0xff]
        %v420 = vld [vmem:[%s193 + $0x708] sm:$0xff]
        %v421 = vld [vmem:[%s193 + $0x710] sm:$0xff]
        %v422 = vld [vmem:[%s193 + $0x718] sm:$0xff]
        %v423 = vld [vmem:[%s193 + $0x720] sm:$0xff]
        %v424 = vld [vmem:[%s193 + $0x728] sm:$0xff]
        %v425 = vld [vmem:[%s193 + $0x730] sm:$0xff]
        %v426 = vld [vmem:[%s193 + $0x738] sm:$0xff]
        %v427 = vld [vmem:[%s193 + $0x740] sm:$0xff]
        %v428 = vld [vmem:[%s193 + $0x748] sm:$0xff]
        %v429 = vld [vmem:[%s193 + $0x750] sm:$0xff]
        %v430 = vld [vmem:[%s193 + $0x758] sm:$0xff]
        %v431 = vld [vmem:[%s193 + $0x760] sm:$0xff]
        %v432 = vld [vmem:[%s193 + $0x768] sm:$0xff]
        %v433 = vld [vmem:[%s193 + $0x770] sm:$0xff]
        %v434 = vld [vmem:[%s193 + $0x778] sm:$0xff]
        %v435 = vld [vmem:[%s193 + $0x780] sm:$0xff]
        %v436 = vld [vmem:[%s193 + $0x788] sm:$0xff]
        %v437 = vld [vmem:[%s193 + $0x790] sm:$0xff]
        %v438 = vld [vmem:[%s193 + $0x798] sm:$0xff]
        %v439 = vld [vmem:[%s193 + $0x7a0] sm:$0xff]
        %v440 = vld [vmem:[%s193 + $0x7a8] sm:$0xff]
        %v441 = vld [vmem:[%s193 + $0x7b0] sm:$0xff]
        %v442 = vld [vmem:[%s193 + $0x7b8] sm:$0xff]
        %v443 = vld [vmem:[%s193 + $0x7c0] sm:$0xff]
        %v444 = vld [vmem:[%s193 + $0x7c8] sm:$0xff]
        %v445 = vld [vmem:[%s193 + $0x7d0] sm:$0xff]
        %v446 = vld [vmem:[%s193 + $0x7d8] sm:$0xff]
        %v447 = vld [vmem:[%s193 + $0x7e0] sm:$0xff]
        %v448 = vld [vmem:[%s193 + $0x7e8] sm:$0xff]
        %v449 = vld [vmem:[%s193 + $0x7f0] sm:$0xff]
        %v450 = vld [vmem:[%s193 + $0x7f8] sm:$0xff]
        %v451 = vpack.c.bf16 %v196, %v195
        %v452 = vpack.c.bf16 %v198, %v197
        %v453 = vpack.c.bf16 %v200, %v199
        %v454 = vpack.c.bf16 %v202, %v201
        %v455 = vpack.c.bf16 %v204, %v203
        %v456 = vpack.c.bf16 %v206, %v205
        %v457 = vpack.c.bf16 %v208, %v207
        %v458 = vpack.c.bf16 %v210, %v209
        %v459 = vpack.c.bf16 %v212, %v211
        %v460 = vpack.c.bf16 %v214, %v213
        %v461 = vpack.c.bf16 %v216, %v215
        %v462 = vpack.c.bf16 %v218, %v217
        %v463 = vpack.c.bf16 %v220, %v219
        %v464 = vpack.c.bf16 %v222, %v221
        %v465 = vpack.c.bf16 %v224, %v223
        %v466 = vpack.c.bf16 %v226, %v225
        %v467 = vpack.c.bf16 %v228, %v227
        %v468 = vpack.c.bf16 %v230, %v229
        %v469 = vpack.c.bf16 %v232, %v231
        %v470 = vpack.c.bf16 %v234, %v233
        %v471 = vpack.c.bf16 %v236, %v235
        %v472 = vpack.c.bf16 %v238, %v237
        %v473 = vpack.c.bf16 %v240, %v239
        %v474 = vpack.c.bf16 %v242, %v241
        %v475 = vpack.c.bf16 %v244, %v243
        %v476 = vpack.c.bf16 %v246, %v245
        %v477 = vpack.c.bf16 %v248, %v247
        %v478 = vpack.c.bf16 %v250, %v249
        %v479 = vpack.c.bf16 %v252, %v251
        %v480 = vpack.c.bf16 %v254, %v253
        %v481 = vpack.c.bf16 %v256, %v255
        %v482 = vpack.c.bf16 %v258, %v257
        %v483 = vpack.c.bf16 %v260, %v259
        %v484 = vpack.c.bf16 %v262, %v261
        %v485 = vpack.c.bf16 %v264, %v263
        %v486 = vpack.c.bf16 %v266, %v265
        %v487 = vpack.c.bf16 %v268, %v267
        %v488 = vpack.c.bf16 %v270, %v269
        %v489 = vpack.c.bf16 %v272, %v271
        %v490 = vpack.c.bf16 %v274, %v273
        %v491 = vpack.c.bf16 %v276, %v275
        %v492 = vpack.c.bf16 %v278, %v277
        %v493 = vpack.c.bf16 %v280, %v279
        %v494 = vpack.c.bf16 %v282, %v281
        %v495 = vpack.c.bf16 %v284, %v283
        %v496 = vpack.c.bf16 %v286, %v285
        %v497 = vpack.c.bf16 %v288, %v287
        %v498 = vpack.c.bf16 %v290, %v289
        %v499 = vpack.c.bf16 %v292, %v291
        %v500 = vpack.c.bf16 %v294, %v293
        %v501 = vpack.c.bf16 %v296, %v295
        %v502 = vpack.c.bf16 %v298, %v297
        %v503 = vpack.c.bf16 %v300, %v299
        %v504 = vpack.c.bf16 %v302, %v301
        %v505 = vpack.c.bf16 %v304, %v303
        %v506 = vpack.c.bf16 %v306, %v305
        %v507 = vpack.c.bf16 %v308, %v307
        %v508 = vpack.c.bf16 %v310, %v309
        %v509 = vpack.c.bf16 %v312, %v311
        %v510 = vpack.c.bf16 %v314, %v313
        %v511 = vpack.c.bf16 %v316, %v315
        %v512 = vpack.c.bf16 %v318, %v317
        %v513 = vpack.c.bf16 %v320, %v319
        %v514 = vpack.c.bf16 %v322, %v321
        %v515 = vpack.c.bf16 %v324, %v323
        %v516 = vpack.c.bf16 %v326, %v325
        %v517 = vpack.c.bf16 %v328, %v327
        %v518 = vpack.c.bf16 %v330, %v329
        %v519 = vpack.c.bf16 %v332, %v331
        %v520 = vpack.c.bf16 %v334, %v333
        %v521 = vpack.c.bf16 %v336, %v335
        %v522 = vpack.c.bf16 %v338, %v337
        %v523 = vpack.c.bf16 %v340, %v339
        %v524 = vpack.c.bf16 %v342, %v341
        %v525 = vpack.c.bf16 %v344, %v343
        %v526 = vpack.c.bf16 %v346, %v345
        %v527 = vpack.c.bf16 %v348, %v347
        %v528 = vpack.c.bf16 %v350, %v349
        %v529 = vpack.c.bf16 %v352, %v351
        %v530 = vpack.c.bf16 %v354, %v353
        %v531 = vpack.c.bf16 %v356, %v355
        %v532 = vpack.c.bf16 %v358, %v357
        %v533 = vpack.c.bf16 %v360, %v359
        %v534 = vpack.c.bf16 %v362, %v361
        %v535 = vpack.c.bf16 %v364, %v363
        %v536 = vpack.c.bf16 %v366, %v365
        %v537 = vpack.c.bf16 %v368, %v367
        %v538 = vpack.c.bf16 %v370, %v369
        %v539 = vpack.c.bf16 %v372, %v371
        %v540 = vpack.c.bf16 %v374, %v373
        %v541 = vpack.c.bf16 %v376, %v375
        %v542 = vpack.c.bf16 %v378, %v377
        %v543 = vpack.c.bf16 %v380, %v379
        %v544 = vpack.c.bf16 %v382, %v381
        %v545 = vpack.c.bf16 %v384, %v383
        %v546 = vpack.c.bf16 %v386, %v385
        %v547 = vpack.c.bf16 %v388, %v387
        %v548 = vpack.c.bf16 %v390, %v389
        %v549 = vpack.c.bf16 %v392, %v391
        %v550 = vpack.c.bf16 %v394, %v393
        %v551 = vpack.c.bf16 %v396, %v395
        %v552 = vpack.c.bf16 %v398, %v397
        %v553 = vpack.c.bf16 %v400, %v399
        %v554 = vpack.c.bf16 %v402, %v401
        %v555 = vpack.c.bf16 %v404, %v403
        %v556 = vpack.c.bf16 %v406, %v405
        %v557 = vpack.c.bf16 %v408, %v407
        %v558 = vpack.c.bf16 %v410, %v409
        %v559 = vpack.c.bf16 %v412, %v411
        %v560 = vpack.c.bf16 %v414, %v413
        %v561 = vpack.c.bf16 %v416, %v415
        %v562 = vpack.c.bf16 %v418, %v417
        %v563 = vpack.c.bf16 %v420, %v419
        %v564 = vpack.c.bf16 %v422, %v421
        %v565 = vpack.c.bf16 %v424, %v423
        %v566 = vpack.c.bf16 %v426, %v425
        %v567 = vpack.c.bf16 %v428, %v427
        %v568 = vpack.c.bf16 %v430, %v429
        %v569 = vpack.c.bf16 %v432, %v431
        %v570 = vpack.c.bf16 %v434, %v433
        %v571 = vpack.c.bf16 %v436, %v435
        %v572 = vpack.c.bf16 %v438, %v437
        %v573 = vpack.c.bf16 %v440, %v439
        %v574 = vpack.c.bf16 %v442, %v441
        %v575 = vpack.c.bf16 %v444, %v443
        %v576 = vpack.c.bf16 %v446, %v445
        %v577 = vpack.c.bf16 %v448, %v447
        %v578 = vpack.c.bf16 %v450, %v449
        %v579 = vld [vmem:[%s1] sm:$0xff]
        %v580 = vld [vmem:[%s1 + $0x8] sm:$0xff]
        %v581 = vld [vmem:[%s1 + $0x10] sm:$0xff]
        %v582 = vld [vmem:[%s1 + $0x18] sm:$0xff]
        %v583 = vld [vmem:[%s1 + $0x20] sm:$0xff]
        %v584 = vld [vmem:[%s1 + $0x28] sm:$0xff]
        %v585 = vld [vmem:[%s1 + $0x30] sm:$0xff]
        %v586 = vld [vmem:[%s1 + $0x38] sm:$0xff]
        %v587 = vld [vmem:[%s1 + $0x40] sm:$0xff]
        %v588 = vld [vmem:[%s1 + $0x48] sm:$0xff]
        %v589 = vld [vmem:[%s1 + $0x50] sm:$0xff]
        %v590 = vld [vmem:[%s1 + $0x58] sm:$0xff]
        %v591 = vld [vmem:[%s1 + $0x60] sm:$0xff]
        %v592 = vld [vmem:[%s1 + $0x68] sm:$0xff]
        %v593 = vld [vmem:[%s1 + $0x70] sm:$0xff]
        %v594 = vld [vmem:[%s1 + $0x78] sm:$0xff]
        %v595 = vld [vmem:[%s1 + $0x80] sm:$0xff]
        %v596 = vld [vmem:[%s1 + $0x88] sm:$0xff]
        %v597 = vld [vmem:[%s1 + $0x90] sm:$0xff]
        %v598 = vld [vmem:[%s1 + $0x98] sm:$0xff]
        %v599 = vld [vmem:[%s1 + $0xa0] sm:$0xff]
        %v600 = vld [vmem:[%s1 + $0xa8] sm:$0xff]
        %v601 = vld [vmem:[%s1 + $0xb0] sm:$0xff]
        %v602 = vld [vmem:[%s1 + $0xb8] sm:$0xff]
        %v603 = vld [vmem:[%s1 + $0xc0] sm:$0xff]
        %v604 = vld [vmem:[%s1 + $0xc8] sm:$0xff]
        %v605 = vld [vmem:[%s1 + $0xd0] sm:$0xff]
        %v606 = vld [vmem:[%s1 + $0xd8] sm:$0xff]
        %v607 = vld [vmem:[%s1 + $0xe0] sm:$0xff]
        %v608 = vld [vmem:[%s1 + $0xe8] sm:$0xff]
        %v609 = vld [vmem:[%s1 + $0xf0] sm:$0xff]
        %v610 = vld [vmem:[%s1 + $0xf8] sm:$0xff]
        %v611 = vld [vmem:[%s1 + $0x100] sm:$0xff]
        %v612 = vld [vmem:[%s1 + $0x108] sm:$0xff]
        %v613 = vld [vmem:[%s1 + $0x110] sm:$0xff]
        %v614 = vld [vmem:[%s1 + $0x118] sm:$0xff]
        %v615 = vld [vmem:[%s1 + $0x120] sm:$0xff]
        %v616 = vld [vmem:[%s1 + $0x128] sm:$0xff]
        %v617 = vld [vmem:[%s1 + $0x130] sm:$0xff]
        %v618 = vld [vmem:[%s1 + $0x138] sm:$0xff]
        %v619 = vld [vmem:[%s1 + $0x140] sm:$0xff]
        %v620 = vld [vmem:[%s1 + $0x148] sm:$0xff]
        %v621 = vld [vmem:[%s1 + $0x150] sm:$0xff]
        %v622 = vld [vmem:[%s1 + $0x158] sm:$0xff]
        %v623 = vld [vmem:[%s1 + $0x160] sm:$0xff]
        %v624 = vld [vmem:[%s1 + $0x168] sm:$0xff]
        %v625 = vld [vmem:[%s1 + $0x170] sm:$0xff]
        %v626 = vld [vmem:[%s1 + $0x178] sm:$0xff]
        %v627 = vld [vmem:[%s1 + $0x180] sm:$0xff]
        %v628 = vld [vmem:[%s1 + $0x188] sm:$0xff]
        %v629 = vld [vmem:[%s1 + $0x190] sm:$0xff]
        %v630 = vld [vmem:[%s1 + $0x198] sm:$0xff]
        %v631 = vld [vmem:[%s1 + $0x1a0] sm:$0xff]
        %v632 = vld [vmem:[%s1 + $0x1a8] sm:$0xff]
        %v633 = vld [vmem:[%s1 + $0x1b0] sm:$0xff]
        %v634 = vld [vmem:[%s1 + $0x1b8] sm:$0xff]
        %v635 = vld [vmem:[%s1 + $0x1c0] sm:$0xff]
        %v636 = vld [vmem:[%s1 + $0x1c8] sm:$0xff]
        %v637 = vld [vmem:[%s1 + $0x1d0] sm:$0xff]
        %v638 = vld [vmem:[%s1 + $0x1d8] sm:$0xff]
        %v639 = vld [vmem:[%s1 + $0x1e0] sm:$0xff]
        %v640 = vld [vmem:[%s1 + $0x1e8] sm:$0xff]
        %v641 = vld [vmem:[%s1 + $0x1f0] sm:$0xff]
        %v642 = vld [vmem:[%s1 + $0x1f8] sm:$0xff]
        %v643 = vld [vmem:[%s1 + $0x200] sm:$0xff]
        %v644 = vld [vmem:[%s1 + $0x208] sm:$0xff]
        %v645 = vld [vmem:[%s1 + $0x210] sm:$0xff]
        %v646 = vld [vmem:[%s1 + $0x218] sm:$0xff]
        %v647 = vld [vmem:[%s1 + $0x220] sm:$0xff]
        %v648 = vld [vmem:[%s1 + $0x228] sm:$0xff]
        %v649 = vld [vmem:[%s1 + $0x230] sm:$0xff]
        %v650 = vld [vmem:[%s1 + $0x238] sm:$0xff]
        %v651 = vld [vmem:[%s1 + $0x240] sm:$0xff]
        %v652 = vld [vmem:[%s1 + $0x248] sm:$0xff]
        %v653 = vld [vmem:[%s1 + $0x250] sm:$0xff]
        %v654 = vld [vmem:[%s1 + $0x258] sm:$0xff]
        %v655 = vld [vmem:[%s1 + $0x260] sm:$0xff]
        %v656 = vld [vmem:[%s1 + $0x268] sm:$0xff]
        %v657 = vld [vmem:[%s1 + $0x270] sm:$0xff]
        %v658 = vld [vmem:[%s1 + $0x278] sm:$0xff]
        %v659 = vld [vmem:[%s1 + $0x280] sm:$0xff]
        %v660 = vld [vmem:[%s1 + $0x288] sm:$0xff]
        %v661 = vld [vmem:[%s1 + $0x290] sm:$0xff]
        %v662 = vld [vmem:[%s1 + $0x298] sm:$0xff]
        %v663 = vld [vmem:[%s1 + $0x2a0] sm:$0xff]
        %v664 = vld [vmem:[%s1 + $0x2a8] sm:$0xff]
        %v665 = vld [vmem:[%s1 + $0x2b0] sm:$0xff]
        %v666 = vld [vmem:[%s1 + $0x2b8] sm:$0xff]
        %v667 = vld [vmem:[%s1 + $0x2c0] sm:$0xff]
        %v668 = vld [vmem:[%s1 + $0x2c8] sm:$0xff]
        %v669 = vld [vmem:[%s1 + $0x2d0] sm:$0xff]
        %v670 = vld [vmem:[%s1 + $0x2d8] sm:$0xff]
        %v671 = vld [vmem:[%s1 + $0x2e0] sm:$0xff]
        %v672 = vld [vmem:[%s1 + $0x2e8] sm:$0xff]
        %v673 = vld [vmem:[%s1 + $0x2f0] sm:$0xff]
        %v674 = vld [vmem:[%s1 + $0x2f8] sm:$0xff]
        %v675 = vld [vmem:[%s1 + $0x300] sm:$0xff]
        %v676 = vld [vmem:[%s1 + $0x308] sm:$0xff]
        %v677 = vld [vmem:[%s1 + $0x310] sm:$0xff]
        %v678 = vld [vmem:[%s1 + $0x318] sm:$0xff]
        %v679 = vld [vmem:[%s1 + $0x320] sm:$0xff]
        %v680 = vld [vmem:[%s1 + $0x328] sm:$0xff]
        %v681 = vld [vmem:[%s1 + $0x330] sm:$0xff]
        %v682 = vld [vmem:[%s1 + $0x338] sm:$0xff]
        %v683 = vld [vmem:[%s1 + $0x340] sm:$0xff]
        %v684 = vld [vmem:[%s1 + $0x348] sm:$0xff]
        %v685 = vld [vmem:[%s1 + $0x350] sm:$0xff]
        %v686 = vld [vmem:[%s1 + $0x358] sm:$0xff]
        %v687 = vld [vmem:[%s1 + $0x360] sm:$0xff]
        %v688 = vld [vmem:[%s1 + $0x368] sm:$0xff]
        %v689 = vld [vmem:[%s1 + $0x370] sm:$0xff]
        %v690 = vld [vmem:[%s1 + $0x378] sm:$0xff]
        %v691 = vld [vmem:[%s1 + $0x380] sm:$0xff]
        %v692 = vld [vmem:[%s1 + $0x388] sm:$0xff]
        %v693 = vld [vmem:[%s1 + $0x390] sm:$0xff]
        %v694 = vld [vmem:[%s1 + $0x398] sm:$0xff]
        %v695 = vld [vmem:[%s1 + $0x3a0] sm:$0xff]
        %v696 = vld [vmem:[%s1 + $0x3a8] sm:$0xff]
        %v697 = vld [vmem:[%s1 + $0x3b0] sm:$0xff]
        %v698 = vld [vmem:[%s1 + $0x3b8] sm:$0xff]
        %v699 = vld [vmem:[%s1 + $0x3c0] sm:$0xff]
        %v700 = vld [vmem:[%s1 + $0x3c8] sm:$0xff]
        %v701 = vld [vmem:[%s1 + $0x3d0] sm:$0xff]
        %v702 = vld [vmem:[%s1 + $0x3d8] sm:$0xff]
        %v703 = vld [vmem:[%s1 + $0x3e0] sm:$0xff]
        %v704 = vld [vmem:[%s1 + $0x3e8] sm:$0xff]
        %v705 = vld [vmem:[%s1 + $0x3f0] sm:$0xff]
        %v706 = vld [vmem:[%s1 + $0x3f8] sm:$0xff]
        %v707 = vld [vmem:[%s1 + $0x400] sm:$0xff]
        %v708 = vld [vmem:[%s1 + $0x408] sm:$0xff]
        %v709 = vld [vmem:[%s1 + $0x410] sm:$0xff]
        %v710 = vld [vmem:[%s1 + $0x418] sm:$0xff]
        %v711 = vld [vmem:[%s1 + $0x420] sm:$0xff]
        %v712 = vld [vmem:[%s1 + $0x428] sm:$0xff]
        %v713 = vld [vmem:[%s1 + $0x430] sm:$0xff]
        %v714 = vld [vmem:[%s1 + $0x438] sm:$0xff]
        %v715 = vld [vmem:[%s1 + $0x440] sm:$0xff]
        %v716 = vld [vmem:[%s1 + $0x448] sm:$0xff]
        %v717 = vld [vmem:[%s1 + $0x450] sm:$0xff]
        %v718 = vld [vmem:[%s1 + $0x458] sm:$0xff]
        %v719 = vld [vmem:[%s1 + $0x460] sm:$0xff]
        %v720 = vld [vmem:[%s1 + $0x468] sm:$0xff]
        %v721 = vld [vmem:[%s1 + $0x470] sm:$0xff]
        %v722 = vld [vmem:[%s1 + $0x478] sm:$0xff]
        %v723 = vld [vmem:[%s1 + $0x480] sm:$0xff]
        %v724 = vld [vmem:[%s1 + $0x488] sm:$0xff]
        %v725 = vld [vmem:[%s1 + $0x490] sm:$0xff]
        %v726 = vld [vmem:[%s1 + $0x498] sm:$0xff]
        %v727 = vld [vmem:[%s1 + $0x4a0] sm:$0xff]
        %v728 = vld [vmem:[%s1 + $0x4a8] sm:$0xff]
        %v729 = vld [vmem:[%s1 + $0x4b0] sm:$0xff]
        %v730 = vld [vmem:[%s1 + $0x4b8] sm:$0xff]
        %v731 = vld [vmem:[%s1 + $0x4c0] sm:$0xff]
        %v732 = vld [vmem:[%s1 + $0x4c8] sm:$0xff]
        %v733 = vld [vmem:[%s1 + $0x4d0] sm:$0xff]
        %v734 = vld [vmem:[%s1 + $0x4d8] sm:$0xff]
        %v735 = vld [vmem:[%s1 + $0x4e0] sm:$0xff]
        %v736 = vld [vmem:[%s1 + $0x4e8] sm:$0xff]
        %v737 = vld [vmem:[%s1 + $0x4f0] sm:$0xff]
        %v738 = vld [vmem:[%s1 + $0x4f8] sm:$0xff]
        %v739 = vld [vmem:[%s1 + $0x500] sm:$0xff]
        %v740 = vld [vmem:[%s1 + $0x508] sm:$0xff]
        %v741 = vld [vmem:[%s1 + $0x510] sm:$0xff]
        %v742 = vld [vmem:[%s1 + $0x518] sm:$0xff]
        %v743 = vld [vmem:[%s1 + $0x520] sm:$0xff]
        %v744 = vld [vmem:[%s1 + $0x528] sm:$0xff]
        %v745 = vld [vmem:[%s1 + $0x530] sm:$0xff]
        %v746 = vld [vmem:[%s1 + $0x538] sm:$0xff]
        %v747 = vld [vmem:[%s1 + $0x540] sm:$0xff]
        %v748 = vld [vmem:[%s1 + $0x548] sm:$0xff]
        %v749 = vld [vmem:[%s1 + $0x550] sm:$0xff]
        %v750 = vld [vmem:[%s1 + $0x558] sm:$0xff]
        %v751 = vld [vmem:[%s1 + $0x560] sm:$0xff]
        %v752 = vld [vmem:[%s1 + $0x568] sm:$0xff]
        %v753 = vld [vmem:[%s1 + $0x570] sm:$0xff]
        %v754 = vld [vmem:[%s1 + $0x578] sm:$0xff]
        %v755 = vld [vmem:[%s1 + $0x580] sm:$0xff]
        %v756 = vld [vmem:[%s1 + $0x588] sm:$0xff]
        %v757 = vld [vmem:[%s1 + $0x590] sm:$0xff]
        %v758 = vld [vmem:[%s1 + $0x598] sm:$0xff]
        %v759 = vld [vmem:[%s1 + $0x5a0] sm:$0xff]
        %v760 = vld [vmem:[%s1 + $0x5a8] sm:$0xff]
        %v761 = vld [vmem:[%s1 + $0x5b0] sm:$0xff]
        %v762 = vld [vmem:[%s1 + $0x5b8] sm:$0xff]
        %v763 = vld [vmem:[%s1 + $0x5c0] sm:$0xff]
        %v764 = vld [vmem:[%s1 + $0x5c8] sm:$0xff]
        %v765 = vld [vmem:[%s1 + $0x5d0] sm:$0xff]
        %v766 = vld [vmem:[%s1 + $0x5d8] sm:$0xff]
        %v767 = vld [vmem:[%s1 + $0x5e0] sm:$0xff]
        %v768 = vld [vmem:[%s1 + $0x5e8] sm:$0xff]
        %v769 = vld [vmem:[%s1 + $0x5f0] sm:$0xff]
        %v770 = vld [vmem:[%s1 + $0x5f8] sm:$0xff]
        %v771 = vld [vmem:[%s1 + $0x600] sm:$0xff]
        %v772 = vld [vmem:[%s1 + $0x608] sm:$0xff]
        %v773 = vld [vmem:[%s1 + $0x610] sm:$0xff]
        %v774 = vld [vmem:[%s1 + $0x618] sm:$0xff]
        %v775 = vld [vmem:[%s1 + $0x620] sm:$0xff]
        %v776 = vld [vmem:[%s1 + $0x628] sm:$0xff]
        %v777 = vld [vmem:[%s1 + $0x630] sm:$0xff]
        %v778 = vld [vmem:[%s1 + $0x638] sm:$0xff]
        %v779 = vld [vmem:[%s1 + $0x640] sm:$0xff]
        %v780 = vld [vmem:[%s1 + $0x648] sm:$0xff]
        %v781 = vld [vmem:[%s1 + $0x650] sm:$0xff]
        %v782 = vld [vmem:[%s1 + $0x658] sm:$0xff]
        %v783 = vld [vmem:[%s1 + $0x660] sm:$0xff]
        %v784 = vld [vmem:[%s1 + $0x668] sm:$0xff]
        %v785 = vld [vmem:[%s1 + $0x670] sm:$0xff]
        %v786 = vld [vmem:[%s1 + $0x678] sm:$0xff]
        %v787 = vld [vmem:[%s1 + $0x680] sm:$0xff]
        %v788 = vld [vmem:[%s1 + $0x688] sm:$0xff]
        %v789 = vld [vmem:[%s1 + $0x690] sm:$0xff]
        %v790 = vld [vmem:[%s1 + $0x698] sm:$0xff]
        %v791 = vld [vmem:[%s1 + $0x6a0] sm:$0xff]
        %v792 = vld [vmem:[%s1 + $0x6a8] sm:$0xff]
        %v793 = vld [vmem:[%s1 + $0x6b0] sm:$0xff]
        %v794 = vld [vmem:[%s1 + $0x6b8] sm:$0xff]
        %v795 = vld [vmem:[%s1 + $0x6c0] sm:$0xff]
        %v796 = vld [vmem:[%s1 + $0x6c8] sm:$0xff]
        %v797 = vld [vmem:[%s1 + $0x6d0] sm:$0xff]
        %v798 = vld [vmem:[%s1 + $0x6d8] sm:$0xff]
        %v799 = vld [vmem:[%s1 + $0x6e0] sm:$0xff]
        %v800 = vld [vmem:[%s1 + $0x6e8] sm:$0xff]
        %v801 = vld [vmem:[%s1 + $0x6f0] sm:$0xff]
        %v802 = vld [vmem:[%s1 + $0x6f8] sm:$0xff]
        %v803 = vld [vmem:[%s1 + $0x700] sm:$0xff]
        %v804 = vld [vmem:[%s1 + $0x708] sm:$0xff]
        %v805 = vld [vmem:[%s1 + $0x710] sm:$0xff]
        %v806 = vld [vmem:[%s1 + $0x718] sm:$0xff]
        %v807 = vld [vmem:[%s1 + $0x720] sm:$0xff]
        %v808 = vld [vmem:[%s1 + $0x728] sm:$0xff]
        %v809 = vld [vmem:[%s1 + $0x730] sm:$0xff]
        %v810 = vld [vmem:[%s1 + $0x738] sm:$0xff]
        %v811 = vld [vmem:[%s1 + $0x740] sm:$0xff]
        %v812 = vld [vmem:[%s1 + $0x748] sm:$0xff]
        %v813 = vld [vmem:[%s1 + $0x750] sm:$0xff]
        %v814 = vld [vmem:[%s1 + $0x758] sm:$0xff]
        %v815 = vld [vmem:[%s1 + $0x760] sm:$0xff]
        %v816 = vld [vmem:[%s1 + $0x768] sm:$0xff]
        %v817 = vld [vmem:[%s1 + $0x770] sm:$0xff]
        %v818 = vld [vmem:[%s1 + $0x778] sm:$0xff]
        %v819 = vld [vmem:[%s1 + $0x780] sm:$0xff]
        %v820 = vld [vmem:[%s1 + $0x788] sm:$0xff]
        %v821 = vld [vmem:[%s1 + $0x790] sm:$0xff]
        %v822 = vld [vmem:[%s1 + $0x798] sm:$0xff]
        %v823 = vld [vmem:[%s1 + $0x7a0] sm:$0xff]
        %v824 = vld [vmem:[%s1 + $0x7a8] sm:$0xff]
        %v825 = vld [vmem:[%s1 + $0x7b0] sm:$0xff]
        %v826 = vld [vmem:[%s1 + $0x7b8] sm:$0xff]
        %v827 = vld [vmem:[%s1 + $0x7c0] sm:$0xff]
        %v828 = vld [vmem:[%s1 + $0x7c8] sm:$0xff]
        %v829 = vld [vmem:[%s1 + $0x7d0] sm:$0xff]
        %v830 = vld [vmem:[%s1 + $0x7d8] sm:$0xff]
        %v831 = vld [vmem:[%s1 + $0x7e0] sm:$0xff]
        %v832 = vld [vmem:[%s1 + $0x7e8] sm:$0xff]
        %v833 = vld [vmem:[%s1 + $0x7f0] sm:$0xff]
        %v834 = vld [vmem:[%s1 + $0x7f8] sm:$0xff]
        %v835 = vld [vmem:[%s2] sm:$0x3]
        %v837 = vperm.slane %v835, 0
        %v838 = vperm.slane %v835, 1
        %841 = vxpose.xlu0.c.b16.start [1/8] %v451, 128
        %842 = vxpose.xlu0.c.b16.cont [2/8] %v452, 128
        %843 = vxpose.xlu0.c.b16.cont [3/8] %v453, 128
        %844 = vxpose.xlu0.c.b16.cont [4/8] %v454, 128
        %845 = vxpose.xlu0.c.b16.cont [5/8] %v455, 128
        %846 = vxpose.xlu0.c.b16.cont [6/8] %v456, 128
        %847 = vxpose.xlu0.c.b16.cont [7/8] %v457, 128
        %848 = vxpose.xlu0.c.b16.end [8/8] %v458, 128
        %v849 = vpop.trf.xlu0
        %v850 = vpop.trf.xlu0
        %v851 = vpop.trf.xlu0
        %v852 = vpop.trf.xlu0
        %v853 = vpop.trf.xlu0
        %v854 = vpop.trf.xlu0
        %v855 = vpop.trf.xlu0
        %v856 = vpop.trf.xlu0
        %857 = vxpose.xlu0.c.b16.start [1/8] %v459, 128
        %858 = vxpose.xlu0.c.b16.cont [2/8] %v460, 128
        %859 = vxpose.xlu0.c.b16.cont [3/8] %v461, 128
        %860 = vxpose.xlu0.c.b16.cont [4/8] %v462, 128
        %861 = vxpose.xlu0.c.b16.cont [5/8] %v463, 128
        %862 = vxpose.xlu0.c.b16.cont [6/8] %v464, 128
        %863 = vxpose.xlu0.c.b16.cont [7/8] %v465, 128
        %864 = vxpose.xlu0.c.b16.end [8/8] %v466, 128
        %v865 = vpop.trf.xlu0
        %v866 = vpop.trf.xlu0
        %v867 = vpop.trf.xlu0
        %v868 = vpop.trf.xlu0
        %v869 = vpop.trf.xlu0
        %v870 = vpop.trf.xlu0
        %v871 = vpop.trf.xlu0
        %v872 = vpop.trf.xlu0
        %873 = vxpose.xlu0.c.b16.start [1/8] %v467, 128
        %874 = vxpose.xlu0.c.b16.cont [2/8] %v468, 128
        %875 = vxpose.xlu0.c.b16.cont [3/8] %v469, 128
        %876 = vxpose.xlu0.c.b16.cont [4/8] %v470, 128
        %877 = vxpose.xlu0.c.b16.cont [5/8] %v471, 128
        %878 = vxpose.xlu0.c.b16.cont [6/8] %v472, 128
        %879 = vxpose.xlu0.c.b16.cont [7/8] %v473, 128
        %880 = vxpose.xlu0.c.b16.end [8/8] %v474, 128
        %v881 = vpop.trf.xlu0
        %v882 = vpop.trf.xlu0
        %v883 = vpop.trf.xlu0
        %v884 = vpop.trf.xlu0
        %v885 = vpop.trf.xlu0
        %v886 = vpop.trf.xlu0
        %v887 = vpop.trf.xlu0
        %v888 = vpop.trf.xlu0
        %889 = vxpose.xlu0.c.b16.start [1/8] %v475, 128
        %890 = vxpose.xlu0.c.b16.cont [2/8] %v476, 128
        %891 = vxpose.xlu0.c.b16.cont [3/8] %v477, 128
        %892 = vxpose.xlu0.c.b16.cont [4/8] %v478, 128
        %893 = vxpose.xlu0.c.b16.cont [5/8] %v479, 128
        %894 = vxpose.xlu0.c.b16.cont [6/8] %v480, 128
        %895 = vxpose.xlu0.c.b16.cont [7/8] %v481, 128
        %896 = vxpose.xlu0.c.b16.end [8/8] %v482, 128
        %v897 = vpop.trf.xlu0
        %v898 = vpop.trf.xlu0
        %v899 = vpop.trf.xlu0
        %v900 = vpop.trf.xlu0
        %v901 = vpop.trf.xlu0
        %v902 = vpop.trf.xlu0
        %v903 = vpop.trf.xlu0
        %v904 = vpop.trf.xlu0
        %905 = vxpose.xlu0.c.b16.start [1/8] %v483, 128
        %906 = vxpose.xlu0.c.b16.cont [2/8] %v484, 128
        %907 = vxpose.xlu0.c.b16.cont [3/8] %v485, 128
        %908 = vxpose.xlu0.c.b16.cont [4/8] %v486, 128
        %909 = vxpose.xlu0.c.b16.cont [5/8] %v487, 128
        %910 = vxpose.xlu0.c.b16.cont [6/8] %v488, 128
        %911 = vxpose.xlu0.c.b16.cont [7/8] %v489, 128
        %912 = vxpose.xlu0.c.b16.end [8/8] %v490, 128
        %v913 = vpop.trf.xlu0
        %v914 = vpop.trf.xlu0
        %v915 = vpop.trf.xlu0
        %v916 = vpop.trf.xlu0
        %v917 = vpop.trf.xlu0
        %v918 = vpop.trf.xlu0
        %v919 = vpop.trf.xlu0
        %v920 = vpop.trf.xlu0
        %921 = vxpose.xlu0.c.b16.start [1/8] %v491, 128
        %922 = vxpose.xlu0.c.b16.cont [2/8] %v492, 128
        %923 = vxpose.xlu0.c.b16.cont [3/8] %v493, 128
        %924 = vxpose.xlu0.c.b16.cont [4/8] %v494, 128
        %925 = vxpose.xlu0.c.b16.cont [5/8] %v495, 128
        %926 = vxpose.xlu0.c.b16.cont [6/8] %v496, 128
        %927 = vxpose.xlu0.c.b16.cont [7/8] %v497, 128
        %928 = vxpose.xlu0.c.b16.end [8/8] %v498, 128
        %v929 = vpop.trf.xlu0
        %v930 = vpop.trf.xlu0
        %v931 = vpop.trf.xlu0
        %v932 = vpop.trf.xlu0
        %v933 = vpop.trf.xlu0
        %v934 = vpop.trf.xlu0
        %v935 = vpop.trf.xlu0
        %v936 = vpop.trf.xlu0
        %937 = vxpose.xlu0.c.b16.start [1/8] %v499, 128
        %938 = vxpose.xlu0.c.b16.cont [2/8] %v500, 128
        %939 = vxpose.xlu0.c.b16.cont [3/8] %v501, 128
        %940 = vxpose.xlu0.c.b16.cont [4/8] %v502, 128
        %941 = vxpose.xlu0.c.b16.cont [5/8] %v503, 128
        %942 = vxpose.xlu0.c.b16.cont [6/8] %v504, 128
        %943 = vxpose.xlu0.c.b16.cont [7/8] %v505, 128
        %944 = vxpose.xlu0.c.b16.end [8/8] %v506, 128
        %v945 = vpop.trf.xlu0
        %v946 = vpop.trf.xlu0
        %v947 = vpop.trf.xlu0
        %v948 = vpop.trf.xlu0
        %v949 = vpop.trf.xlu0
        %v950 = vpop.trf.xlu0
        %v951 = vpop.trf.xlu0
        %v952 = vpop.trf.xlu0
        %953 = vxpose.xlu0.c.b16.start [1/8] %v507, 128
        %954 = vxpose.xlu0.c.b16.cont [2/8] %v508, 128
        %955 = vxpose.xlu0.c.b16.cont [3/8] %v509, 128
        %956 = vxpose.xlu0.c.b16.cont [4/8] %v510, 128
        %957 = vxpose.xlu0.c.b16.cont [5/8] %v511, 128
        %958 = vxpose.xlu0.c.b16.cont [6/8] %v512, 128
        %959 = vxpose.xlu0.c.b16.cont [7/8] %v513, 128
        %960 = vxpose.xlu0.c.b16.end [8/8] %v514, 128
        %v961 = vpop.trf.xlu0
        %v962 = vpop.trf.xlu0
        %v963 = vpop.trf.xlu0
        %v964 = vpop.trf.xlu0
        %v965 = vpop.trf.xlu0
        %v966 = vpop.trf.xlu0
        %v967 = vpop.trf.xlu0
        %v968 = vpop.trf.xlu0
        %969 = vxpose.xlu0.c.b16.start [1/8] %v515, 128
        %970 = vxpose.xlu0.c.b16.cont [2/8] %v516, 128
        %971 = vxpose.xlu0.c.b16.cont [3/8] %v517, 128
        %972 = vxpose.xlu0.c.b16.cont [4/8] %v518, 128
        %973 = vxpose.xlu0.c.b16.cont [5/8] %v519, 128
        %974 = vxpose.xlu0.c.b16.cont [6/8] %v520, 128
        %975 = vxpose.xlu0.c.b16.cont [7/8] %v521, 128
        %976 = vxpose.xlu0.c.b16.end [8/8] %v522, 128
        %v977 = vpop.trf.xlu0
        %v978 = vpop.trf.xlu0
        %v979 = vpop.trf.xlu0
        %v980 = vpop.trf.xlu0
        %v981 = vpop.trf.xlu0
        %v982 = vpop.trf.xlu0
        %v983 = vpop.trf.xlu0
        %v984 = vpop.trf.xlu0
        %985 = vxpose.xlu0.c.b16.start [1/8] %v523, 128
        %986 = vxpose.xlu0.c.b16.cont [2/8] %v524, 128
        %987 = vxpose.xlu0.c.b16.cont [3/8] %v525, 128
        %988 = vxpose.xlu0.c.b16.cont [4/8] %v526, 128
        %989 = vxpose.xlu0.c.b16.cont [5/8] %v527, 128
        %990 = vxpose.xlu0.c.b16.cont [6/8] %v528, 128
        %991 = vxpose.xlu0.c.b16.cont [7/8] %v529, 128
        %992 = vxpose.xlu0.c.b16.end [8/8] %v530, 128
        %v993 = vpop.trf.xlu0
        %v994 = vpop.trf.xlu0
        %v995 = vpop.trf.xlu0
        %v996 = vpop.trf.xlu0
        %v997 = vpop.trf.xlu0
        %v998 = vpop.trf.xlu0
        %v999 = vpop.trf.xlu0
        %v1000 = vpop.trf.xlu0
        %1001 = vxpose.xlu0.c.b16.start [1/8] %v531, 128
        %1002 = vxpose.xlu0.c.b16.cont [2/8] %v532, 128
        %1003 = vxpose.xlu0.c.b16.cont [3/8] %v533, 128
        %1004 = vxpose.xlu0.c.b16.cont [4/8] %v534, 128
        %1005 = vxpose.xlu0.c.b16.cont [5/8] %v535, 128
        %1006 = vxpose.xlu0.c.b16.cont [6/8] %v536, 128
        %1007 = vxpose.xlu0.c.b16.cont [7/8] %v537, 128
        %1008 = vxpose.xlu0.c.b16.end [8/8] %v538, 128
        %v1009 = vpop.trf.xlu0
        %v1010 = vpop.trf.xlu0
        %v1011 = vpop.trf.xlu0
        %v1012 = vpop.trf.xlu0
        %v1013 = vpop.trf.xlu0
        %v1014 = vpop.trf.xlu0
        %v1015 = vpop.trf.xlu0
        %v1016 = vpop.trf.xlu0
        %1017 = vxpose.xlu0.c.b16.start [1/8] %v539, 128
        %1018 = vxpose.xlu0.c.b16.cont [2/8] %v540, 128
        %1019 = vxpose.xlu0.c.b16.cont [3/8] %v541, 128
        %1020 = vxpose.xlu0.c.b16.cont [4/8] %v542, 128
        %1021 = vxpose.xlu0.c.b16.cont [5/8] %v543, 128
        %1022 = vxpose.xlu0.c.b16.cont [6/8] %v544, 128
        %1023 = vxpose.xlu0.c.b16.cont [7/8] %v545, 128
        %1024 = vxpose.xlu0.c.b16.end [8/8] %v546, 128
        %v1025 = vpop.trf.xlu0
        %v1026 = vpop.trf.xlu0
        %v1027 = vpop.trf.xlu0
        %v1028 = vpop.trf.xlu0
        %v1029 = vpop.trf.xlu0
        %v1030 = vpop.trf.xlu0
        %v1031 = vpop.trf.xlu0
        %v1032 = vpop.trf.xlu0
        %1033 = vxpose.xlu0.c.b16.start [1/8] %v547, 128
        %1034 = vxpose.xlu0.c.b16.cont [2/8] %v548, 128
        %1035 = vxpose.xlu0.c.b16.cont [3/8] %v549, 128
        %1036 = vxpose.xlu0.c.b16.cont [4/8] %v550, 128
        %1037 = vxpose.xlu0.c.b16.cont [5/8] %v551, 128
        %1038 = vxpose.xlu0.c.b16.cont [6/8] %v552, 128
        %1039 = vxpose.xlu0.c.b16.cont [7/8] %v553, 128
        %1040 = vxpose.xlu0.c.b16.end [8/8] %v554, 128
        %v1041 = vpop.trf.xlu0
        %v1042 = vpop.trf.xlu0
        %v1043 = vpop.trf.xlu0
        %v1044 = vpop.trf.xlu0
        %v1045 = vpop.trf.xlu0
        %v1046 = vpop.trf.xlu0
        %v1047 = vpop.trf.xlu0
        %v1048 = vpop.trf.xlu0
        %1049 = vxpose.xlu0.c.b16.start [1/8] %v555, 128
        %1050 = vxpose.xlu0.c.b16.cont [2/8] %v556, 128
        %1051 = vxpose.xlu0.c.b16.cont [3/8] %v557, 128
        %1052 = vxpose.xlu0.c.b16.cont [4/8] %v558, 128
        %1053 = vxpose.xlu0.c.b16.cont [5/8] %v559, 128
        %1054 = vxpose.xlu0.c.b16.cont [6/8] %v560, 128
        %1055 = vxpose.xlu0.c.b16.cont [7/8] %v561, 128
        %1056 = vxpose.xlu0.c.b16.end [8/8] %v562, 128
        %v1057 = vpop.trf.xlu0
        %v1058 = vpop.trf.xlu0
        %v1059 = vpop.trf.xlu0
        %v1060 = vpop.trf.xlu0
        %v1061 = vpop.trf.xlu0
        %v1062 = vpop.trf.xlu0
        %v1063 = vpop.trf.xlu0
        %v1064 = vpop.trf.xlu0
        %1065 = vxpose.xlu0.c.b16.start [1/8] %v563, 128
        %1066 = vxpose.xlu0.c.b16.cont [2/8] %v564, 128
        %1067 = vxpose.xlu0.c.b16.cont [3/8] %v565, 128
        %1068 = vxpose.xlu0.c.b16.cont [4/8] %v566, 128
        %1069 = vxpose.xlu0.c.b16.cont [5/8] %v567, 128
        %1070 = vxpose.xlu0.c.b16.cont [6/8] %v568, 128
        %1071 = vxpose.xlu0.c.b16.cont [7/8] %v569, 128
        %1072 = vxpose.xlu0.c.b16.end [8/8] %v570, 128
        %v1073 = vpop.trf.xlu0
        %v1074 = vpop.trf.xlu0
        %v1075 = vpop.trf.xlu0
        %v1076 = vpop.trf.xlu0
        %v1077 = vpop.trf.xlu0
        %v1078 = vpop.trf.xlu0
        %v1079 = vpop.trf.xlu0
        %v1080 = vpop.trf.xlu0
        %1081 = vxpose.xlu0.c.b16.start [1/8] %v571, 128
        %1082 = vxpose.xlu0.c.b16.cont [2/8] %v572, 128
        %1083 = vxpose.xlu0.c.b16.cont [3/8] %v573, 128
        %1084 = vxpose.xlu0.c.b16.cont [4/8] %v574, 128
        %1085 = vxpose.xlu0.c.b16.cont [5/8] %v575, 128
        %1086 = vxpose.xlu0.c.b16.cont [6/8] %v576, 128
        %1087 = vxpose.xlu0.c.b16.cont [7/8] %v577, 128
        %1088 = vxpose.xlu0.c.b16.end [8/8] %v578, 128
        %v1089 = vpop.trf.xlu0
        %v1090 = vpop.trf.xlu0
        %v1091 = vpop.trf.xlu0
        %v1092 = vpop.trf.xlu0
        %v1093 = vpop.trf.xlu0
        %v1094 = vpop.trf.xlu0
        %v1095 = vpop.trf.xlu0
        %v1096 = vpop.trf.xlu0
        %v1353 = vunpack.c.l.b16 %v579
        %v1354 = vunpack.c.h.b16 %v579
        %v1355 = vunpack.c.l.b16 %v580
        %v1356 = vunpack.c.h.b16 %v580
        %v1357 = vunpack.c.l.b16 %v581
        %v1358 = vunpack.c.h.b16 %v581
        %v1359 = vunpack.c.l.b16 %v582
        %v1360 = vunpack.c.h.b16 %v582
        %v1361 = vunpack.c.l.b16 %v583
        %v1362 = vunpack.c.h.b16 %v583
        %v1363 = vunpack.c.l.b16 %v584
        %v1364 = vunpack.c.h.b16 %v584
        %v1365 = vunpack.c.l.b16 %v585
        %v1366 = vunpack.c.h.b16 %v585
        %v1367 = vunpack.c.l.b16 %v586
        %v1368 = vunpack.c.h.b16 %v586
        %v1369 = vunpack.c.l.b16 %v587
        %v1370 = vunpack.c.h.b16 %v587
        %v1371 = vunpack.c.l.b16 %v588
        %v1372 = vunpack.c.h.b16 %v588
        %v1373 = vunpack.c.l.b16 %v589
        %v1374 = vunpack.c.h.b16 %v589
        %v1375 = vunpack.c.l.b16 %v590
        %v1376 = vunpack.c.h.b16 %v590
        %v1377 = vunpack.c.l.b16 %v591
        %v1378 = vunpack.c.h.b16 %v591
        %v1379 = vunpack.c.l.b16 %v592
        %v1380 = vunpack.c.h.b16 %v592
        %v1381 = vunpack.c.l.b16 %v593
        %v1382 = vunpack.c.h.b16 %v593
        %v1383 = vunpack.c.l.b16 %v594
        %v1384 = vunpack.c.h.b16 %v594
        %v1385 = vunpack.c.l.b16 %v595
        %v1386 = vunpack.c.h.b16 %v595
        %v1387 = vunpack.c.l.b16 %v596
        %v1388 = vunpack.c.h.b16 %v596
        %v1389 = vunpack.c.l.b16 %v597
        %v1390 = vunpack.c.h.b16 %v597
        %v1391 = vunpack.c.l.b16 %v598
        %v1392 = vunpack.c.h.b16 %v598
        %v1393 = vunpack.c.l.b16 %v599
        %v1394 = vunpack.c.h.b16 %v599
        %v1395 = vunpack.c.l.b16 %v600
        %v1396 = vunpack.c.h.b16 %v600
        %v1397 = vunpack.c.l.b16 %v601
        %v1398 = vunpack.c.h.b16 %v601
        %v1399 = vunpack.c.l.b16 %v602
        %v1400 = vunpack.c.h.b16 %v602
        %v1401 = vunpack.c.l.b16 %v603
        %v1402 = vunpack.c.h.b16 %v603
        %v1403 = vunpack.c.l.b16 %v604
        %v1404 = vunpack.c.h.b16 %v604
        %v1405 = vunpack.c.l.b16 %v605
        %v1406 = vunpack.c.h.b16 %v605
        %v1407 = vunpack.c.l.b16 %v606
        %v1408 = vunpack.c.h.b16 %v606
        %v1409 = vunpack.c.l.b16 %v607
        %v1410 = vunpack.c.h.b16 %v607
        %v1411 = vunpack.c.l.b16 %v608
        %v1412 = vunpack.c.h.b16 %v608
        %v1413 = vunpack.c.l.b16 %v609
        %v1414 = vunpack.c.h.b16 %v609
        %v1415 = vunpack.c.l.b16 %v610
        %v1416 = vunpack.c.h.b16 %v610
        %v1417 = vunpack.c.l.b16 %v611
        %v1418 = vunpack.c.h.b16 %v611
        %v1419 = vunpack.c.l.b16 %v612
        %v1420 = vunpack.c.h.b16 %v612
        %v1421 = vunpack.c.l.b16 %v613
        %v1422 = vunpack.c.h.b16 %v613
        %v1423 = vunpack.c.l.b16 %v614
        %v1424 = vunpack.c.h.b16 %v614
        %v1425 = vunpack.c.l.b16 %v615
        %v1426 = vunpack.c.h.b16 %v615
        %v1427 = vunpack.c.l.b16 %v616
        %v1428 = vunpack.c.h.b16 %v616
        %v1429 = vunpack.c.l.b16 %v617
        %v1430 = vunpack.c.h.b16 %v617
        %v1431 = vunpack.c.l.b16 %v618
        %v1432 = vunpack.c.h.b16 %v618
        %v1433 = vunpack.c.l.b16 %v619
        %v1434 = vunpack.c.h.b16 %v619
        %v1435 = vunpack.c.l.b16 %v620
        %v1436 = vunpack.c.h.b16 %v620
        %v1437 = vunpack.c.l.b16 %v621
        %v1438 = vunpack.c.h.b16 %v621
        %v1439 = vunpack.c.l.b16 %v622
        %v1440 = vunpack.c.h.b16 %v622
        %v1441 = vunpack.c.l.b16 %v623
        %v1442 = vunpack.c.h.b16 %v623
        %v1443 = vunpack.c.l.b16 %v624
        %v1444 = vunpack.c.h.b16 %v624
        %v1445 = vunpack.c.l.b16 %v625
        %v1446 = vunpack.c.h.b16 %v625
        %v1447 = vunpack.c.l.b16 %v626
        %v1448 = vunpack.c.h.b16 %v626
        %v1449 = vunpack.c.l.b16 %v627
        %v1450 = vunpack.c.h.b16 %v627
        %v1451 = vunpack.c.l.b16 %v628
        %v1452 = vunpack.c.h.b16 %v628
        %v1453 = vunpack.c.l.b16 %v629
        %v1454 = vunpack.c.h.b16 %v629
        %v1455 = vunpack.c.l.b16 %v630
        %v1456 = vunpack.c.h.b16 %v630
        %v1457 = vunpack.c.l.b16 %v631
        %v1458 = vunpack.c.h.b16 %v631
        %v1459 = vunpack.c.l.b16 %v632
        %v1460 = vunpack.c.h.b16 %v632
        %v1461 = vunpack.c.l.b16 %v633
        %v1462 = vunpack.c.h.b16 %v633
        %v1463 = vunpack.c.l.b16 %v634
        %v1464 = vunpack.c.h.b16 %v634
        %v1465 = vunpack.c.l.b16 %v635
        %v1466 = vunpack.c.h.b16 %v635
        %v1467 = vunpack.c.l.b16 %v636
        %v1468 = vunpack.c.h.b16 %v636
        %v1469 = vunpack.c.l.b16 %v637
        %v1470 = vunpack.c.h.b16 %v637
        %v1471 = vunpack.c.l.b16 %v638
        %v1472 = vunpack.c.h.b16 %v638
        %v1473 = vunpack.c.l.b16 %v639
        %v1474 = vunpack.c.h.b16 %v639
        %v1475 = vunpack.c.l.b16 %v640
        %v1476 = vunpack.c.h.b16 %v640
        %v1477 = vunpack.c.l.b16 %v641
        %v1478 = vunpack.c.h.b16 %v641
        %v1479 = vunpack.c.l.b16 %v642
        %v1480 = vunpack.c.h.b16 %v642
        %v1481 = vunpack.c.l.b16 %v643
        %v1482 = vunpack.c.h.b16 %v643
        %v1483 = vunpack.c.l.b16 %v644
        %v1484 = vunpack.c.h.b16 %v644
        %v1485 = vunpack.c.l.b16 %v645
        %v1486 = vunpack.c.h.b16 %v645
        %v1487 = vunpack.c.l.b16 %v646
        %v1488 = vunpack.c.h.b16 %v646
        %v1489 = vunpack.c.l.b16 %v647
        %v1490 = vunpack.c.h.b16 %v647
        %v1491 = vunpack.c.l.b16 %v648
        %v1492 = vunpack.c.h.b16 %v648
        %v1493 = vunpack.c.l.b16 %v649
        %v1494 = vunpack.c.h.b16 %v649
        %v1495 = vunpack.c.l.b16 %v650
        %v1496 = vunpack.c.h.b16 %v650
        %v1497 = vunpack.c.l.b16 %v651
        %v1498 = vunpack.c.h.b16 %v651
        %v1499 = vunpack.c.l.b16 %v652
        %v1500 = vunpack.c.h.b16 %v652
        %v1501 = vunpack.c.l.b16 %v653
        %v1502 = vunpack.c.h.b16 %v653
        %v1503 = vunpack.c.l.b16 %v654
        %v1504 = vunpack.c.h.b16 %v654
        %v1505 = vunpack.c.l.b16 %v655
        %v1506 = vunpack.c.h.b16 %v655
        %v1507 = vunpack.c.l.b16 %v656
        %v1508 = vunpack.c.h.b16 %v656
        %v1509 = vunpack.c.l.b16 %v657
        %v1510 = vunpack.c.h.b16 %v657
        %v1511 = vunpack.c.l.b16 %v658
        %v1512 = vunpack.c.h.b16 %v658
        %v1513 = vunpack.c.l.b16 %v659
        %v1514 = vunpack.c.h.b16 %v659
        %v1515 = vunpack.c.l.b16 %v660
        %v1516 = vunpack.c.h.b16 %v660
        %v1517 = vunpack.c.l.b16 %v661
        %v1518 = vunpack.c.h.b16 %v661
        %v1519 = vunpack.c.l.b16 %v662
        %v1520 = vunpack.c.h.b16 %v662
        %v1521 = vunpack.c.l.b16 %v663
        %v1522 = vunpack.c.h.b16 %v663
        %v1523 = vunpack.c.l.b16 %v664
        %v1524 = vunpack.c.h.b16 %v664
        %v1525 = vunpack.c.l.b16 %v665
        %v1526 = vunpack.c.h.b16 %v665
        %v1527 = vunpack.c.l.b16 %v666
        %v1528 = vunpack.c.h.b16 %v666
        %v1529 = vunpack.c.l.b16 %v667
        %v1530 = vunpack.c.h.b16 %v667
        %v1531 = vunpack.c.l.b16 %v668
        %v1532 = vunpack.c.h.b16 %v668
        %v1533 = vunpack.c.l.b16 %v669
        %v1534 = vunpack.c.h.b16 %v669
        %v1535 = vunpack.c.l.b16 %v670
        %v1536 = vunpack.c.h.b16 %v670
        %v1537 = vunpack.c.l.b16 %v671
        %v1538 = vunpack.c.h.b16 %v671
        %v1539 = vunpack.c.l.b16 %v672
        %v1540 = vunpack.c.h.b16 %v672
        %v1541 = vunpack.c.l.b16 %v673
        %v1542 = vunpack.c.h.b16 %v673
        %v1543 = vunpack.c.l.b16 %v674
        %v1544 = vunpack.c.h.b16 %v674
        %v1545 = vunpack.c.l.b16 %v675
        %v1546 = vunpack.c.h.b16 %v675
        %v1547 = vunpack.c.l.b16 %v676
        %v1548 = vunpack.c.h.b16 %v676
        %v1549 = vunpack.c.l.b16 %v677
        %v1550 = vunpack.c.h.b16 %v677
        %v1551 = vunpack.c.l.b16 %v678
        %v1552 = vunpack.c.h.b16 %v678
        %v1553 = vunpack.c.l.b16 %v679
        %v1554 = vunpack.c.h.b16 %v679
        %v1555 = vunpack.c.l.b16 %v680
        %v1556 = vunpack.c.h.b16 %v680
        %v1557 = vunpack.c.l.b16 %v681
        %v1558 = vunpack.c.h.b16 %v681
        %v1559 = vunpack.c.l.b16 %v682
        %v1560 = vunpack.c.h.b16 %v682
        %v1561 = vunpack.c.l.b16 %v683
        %v1562 = vunpack.c.h.b16 %v683
        %v1563 = vunpack.c.l.b16 %v684
        %v1564 = vunpack.c.h.b16 %v684
        %v1565 = vunpack.c.l.b16 %v685
        %v1566 = vunpack.c.h.b16 %v685
        %v1567 = vunpack.c.l.b16 %v686
        %v1568 = vunpack.c.h.b16 %v686
        %v1569 = vunpack.c.l.b16 %v687
        %v1570 = vunpack.c.h.b16 %v687
        %v1571 = vunpack.c.l.b16 %v688
        %v1572 = vunpack.c.h.b16 %v688
        %v1573 = vunpack.c.l.b16 %v689
        %v1574 = vunpack.c.h.b16 %v689
        %v1575 = vunpack.c.l.b16 %v690
        %v1576 = vunpack.c.h.b16 %v690
        %v1577 = vunpack.c.l.b16 %v691
        %v1578 = vunpack.c.h.b16 %v691
        %v1579 = vunpack.c.l.b16 %v692
        %v1580 = vunpack.c.h.b16 %v692
        %v1581 = vunpack.c.l.b16 %v693
        %v1582 = vunpack.c.h.b16 %v693
        %v1583 = vunpack.c.l.b16 %v694
        %v1584 = vunpack.c.h.b16 %v694
        %v1585 = vunpack.c.l.b16 %v695
        %v1586 = vunpack.c.h.b16 %v695
        %v1587 = vunpack.c.l.b16 %v696
        %v1588 = vunpack.c.h.b16 %v696
        %v1589 = vunpack.c.l.b16 %v697
        %v1590 = vunpack.c.h.b16 %v697
        %v1591 = vunpack.c.l.b16 %v698
        %v1592 = vunpack.c.h.b16 %v698
        %v1593 = vunpack.c.l.b16 %v699
        %v1594 = vunpack.c.h.b16 %v699
        %v1595 = vunpack.c.l.b16 %v700
        %v1596 = vunpack.c.h.b16 %v700
        %v1597 = vunpack.c.l.b16 %v701
        %v1598 = vunpack.c.h.b16 %v701
        %v1599 = vunpack.c.l.b16 %v702
        %v1600 = vunpack.c.h.b16 %v702
        %v1601 = vunpack.c.l.b16 %v703
        %v1602 = vunpack.c.h.b16 %v703
        %v1603 = vunpack.c.l.b16 %v704
        %v1604 = vunpack.c.h.b16 %v704
        %v1605 = vunpack.c.l.b16 %v705
        %v1606 = vunpack.c.h.b16 %v705
        %v1607 = vunpack.c.l.b16 %v706
        %v1608 = vunpack.c.h.b16 %v706
        %v1609 = vunpack.c.l.b16 %v707
        %v1610 = vunpack.c.h.b16 %v707
        %v1611 = vunpack.c.l.b16 %v708
        %v1612 = vunpack.c.h.b16 %v708
        %v1613 = vunpack.c.l.b16 %v709
        %v1614 = vunpack.c.h.b16 %v709
        %v1615 = vunpack.c.l.b16 %v710
        %v1616 = vunpack.c.h.b16 %v710
        %v1617 = vunpack.c.l.b16 %v711
        %v1618 = vunpack.c.h.b16 %v711
        %v1619 = vunpack.c.l.b16 %v712
        %v1620 = vunpack.c.h.b16 %v712
        %v1621 = vunpack.c.l.b16 %v713
        %v1622 = vunpack.c.h.b16 %v713
        %v1623 = vunpack.c.l.b16 %v714
        %v1624 = vunpack.c.h.b16 %v714
        %v1625 = vunpack.c.l.b16 %v715
        %v1626 = vunpack.c.h.b16 %v715
        %v1627 = vunpack.c.l.b16 %v716
        %v1628 = vunpack.c.h.b16 %v716
        %v1629 = vunpack.c.l.b16 %v717
        %v1630 = vunpack.c.h.b16 %v717
        %v1631 = vunpack.c.l.b16 %v718
        %v1632 = vunpack.c.h.b16 %v718
        %v1633 = vunpack.c.l.b16 %v719
        %v1634 = vunpack.c.h.b16 %v719
        %v1635 = vunpack.c.l.b16 %v720
        %v1636 = vunpack.c.h.b16 %v720
        %v1637 = vunpack.c.l.b16 %v721
        %v1638 = vunpack.c.h.b16 %v721
        %v1639 = vunpack.c.l.b16 %v722
        %v1640 = vunpack.c.h.b16 %v722
        %v1641 = vunpack.c.l.b16 %v723
        %v1642 = vunpack.c.h.b16 %v723
        %v1643 = vunpack.c.l.b16 %v724
        %v1644 = vunpack.c.h.b16 %v724
        %v1645 = vunpack.c.l.b16 %v725
        %v1646 = vunpack.c.h.b16 %v725
        %v1647 = vunpack.c.l.b16 %v726
        %v1648 = vunpack.c.h.b16 %v726
        %v1649 = vunpack.c.l.b16 %v727
        %v1650 = vunpack.c.h.b16 %v727
        %v1651 = vunpack.c.l.b16 %v728
        %v1652 = vunpack.c.h.b16 %v728
        %v1653 = vunpack.c.l.b16 %v729
        %v1654 = vunpack.c.h.b16 %v729
        %v1655 = vunpack.c.l.b16 %v730
        %v1656 = vunpack.c.h.b16 %v730
        %v1657 = vunpack.c.l.b16 %v731
        %v1658 = vunpack.c.h.b16 %v731
        %v1659 = vunpack.c.l.b16 %v732
        %v1660 = vunpack.c.h.b16 %v732
        %v1661 = vunpack.c.l.b16 %v733
        %v1662 = vunpack.c.h.b16 %v733
        %v1663 = vunpack.c.l.b16 %v734
        %v1664 = vunpack.c.h.b16 %v734
        %v1665 = vunpack.c.l.b16 %v735
        %v1666 = vunpack.c.h.b16 %v735
        %v1667 = vunpack.c.l.b16 %v736
        %v1668 = vunpack.c.h.b16 %v736
        %v1669 = vunpack.c.l.b16 %v737
        %v1670 = vunpack.c.h.b16 %v737
        %v1671 = vunpack.c.l.b16 %v738
        %v1672 = vunpack.c.h.b16 %v738
        %v1673 = vunpack.c.l.b16 %v739
        %v1674 = vunpack.c.h.b16 %v739
        %v1675 = vunpack.c.l.b16 %v740
        %v1676 = vunpack.c.h.b16 %v740
        %v1677 = vunpack.c.l.b16 %v741
        %v1678 = vunpack.c.h.b16 %v741
        %v1679 = vunpack.c.l.b16 %v742
        %v1680 = vunpack.c.h.b16 %v742
        %v1681 = vunpack.c.l.b16 %v743
        %v1682 = vunpack.c.h.b16 %v743
        %v1683 = vunpack.c.l.b16 %v744
        %v1684 = vunpack.c.h.b16 %v744
        %v1685 = vunpack.c.l.b16 %v745
        %v1686 = vunpack.c.h.b16 %v745
        %v1687 = vunpack.c.l.b16 %v746
        %v1688 = vunpack.c.h.b16 %v746
        %v1689 = vunpack.c.l.b16 %v747
        %v1690 = vunpack.c.h.b16 %v747
        %v1691 = vunpack.c.l.b16 %v748
        %v1692 = vunpack.c.h.b16 %v748
        %v1693 = vunpack.c.l.b16 %v749
        %v1694 = vunpack.c.h.b16 %v749
        %v1695 = vunpack.c.l.b16 %v750
        %v1696 = vunpack.c.h.b16 %v750
        %v1697 = vunpack.c.l.b16 %v751
        %v1698 = vunpack.c.h.b16 %v751
        %v1699 = vunpack.c.l.b16 %v752
        %v1700 = vunpack.c.h.b16 %v752
        %v1701 = vunpack.c.l.b16 %v753
        %v1702 = vunpack.c.h.b16 %v753
        %v1703 = vunpack.c.l.b16 %v754
        %v1704 = vunpack.c.h.b16 %v754
        %v1705 = vunpack.c.l.b16 %v755
        %v1706 = vunpack.c.h.b16 %v755
        %v1707 = vunpack.c.l.b16 %v756
        %v1708 = vunpack.c.h.b16 %v756
        %v1709 = vunpack.c.l.b16 %v757
        %v1710 = vunpack.c.h.b16 %v757
        %v1711 = vunpack.c.l.b16 %v758
        %v1712 = vunpack.c.h.b16 %v758
        %v1713 = vunpack.c.l.b16 %v759
        %v1714 = vunpack.c.h.b16 %v759
        %v1715 = vunpack.c.l.b16 %v760
        %v1716 = vunpack.c.h.b16 %v760
        %v1717 = vunpack.c.l.b16 %v761
        %v1718 = vunpack.c.h.b16 %v761
        %v1719 = vunpack.c.l.b16 %v762
        %v1720 = vunpack.c.h.b16 %v762
        %v1721 = vunpack.c.l.b16 %v763
        %v1722 = vunpack.c.h.b16 %v763
        %v1723 = vunpack.c.l.b16 %v764
        %v1724 = vunpack.c.h.b16 %v764
        %v1725 = vunpack.c.l.b16 %v765
        %v1726 = vunpack.c.h.b16 %v765
        %v1727 = vunpack.c.l.b16 %v766
        %v1728 = vunpack.c.h.b16 %v766
        %v1729 = vunpack.c.l.b16 %v767
        %v1730 = vunpack.c.h.b16 %v767
        %v1731 = vunpack.c.l.b16 %v768
        %v1732 = vunpack.c.h.b16 %v768
        %v1733 = vunpack.c.l.b16 %v769
        %v1734 = vunpack.c.h.b16 %v769
        %v1735 = vunpack.c.l.b16 %v770
        %v1736 = vunpack.c.h.b16 %v770
        %v1737 = vunpack.c.l.b16 %v771
        %v1738 = vunpack.c.h.b16 %v771
        %v1739 = vunpack.c.l.b16 %v772
        %v1740 = vunpack.c.h.b16 %v772
        %v1741 = vunpack.c.l.b16 %v773
        %v1742 = vunpack.c.h.b16 %v773
        %v1743 = vunpack.c.l.b16 %v774
        %v1744 = vunpack.c.h.b16 %v774
        %v1745 = vunpack.c.l.b16 %v775
        %v1746 = vunpack.c.h.b16 %v775
        %v1747 = vunpack.c.l.b16 %v776
        %v1748 = vunpack.c.h.b16 %v776
        %v1749 = vunpack.c.l.b16 %v777
        %v1750 = vunpack.c.h.b16 %v777
        %v1751 = vunpack.c.l.b16 %v778
        %v1752 = vunpack.c.h.b16 %v778
        %v1753 = vunpack.c.l.b16 %v779
        %v1754 = vunpack.c.h.b16 %v779
        %v1755 = vunpack.c.l.b16 %v780
        %v1756 = vunpack.c.h.b16 %v780
        %v1757 = vunpack.c.l.b16 %v781
        %v1758 = vunpack.c.h.b16 %v781
        %v1759 = vunpack.c.l.b16 %v782
        %v1760 = vunpack.c.h.b16 %v782
        %v1761 = vunpack.c.l.b16 %v783
        %v1762 = vunpack.c.h.b16 %v783
        %v1763 = vunpack.c.l.b16 %v784
        %v1764 = vunpack.c.h.b16 %v784
        %v1765 = vunpack.c.l.b16 %v785
        %v1766 = vunpack.c.h.b16 %v785
        %v1767 = vunpack.c.l.b16 %v786
        %v1768 = vunpack.c.h.b16 %v786
        %v1769 = vunpack.c.l.b16 %v787
        %v1770 = vunpack.c.h.b16 %v787
        %v1771 = vunpack.c.l.b16 %v788
        %v1772 = vunpack.c.h.b16 %v788
        %v1773 = vunpack.c.l.b16 %v789
        %v1774 = vunpack.c.h.b16 %v789
        %v1775 = vunpack.c.l.b16 %v790
        %v1776 = vunpack.c.h.b16 %v790
        %v1777 = vunpack.c.l.b16 %v791
        %v1778 = vunpack.c.h.b16 %v791
        %v1779 = vunpack.c.l.b16 %v792
        %v1780 = vunpack.c.h.b16 %v792
        %v1781 = vunpack.c.l.b16 %v793
        %v1782 = vunpack.c.h.b16 %v793
        %v1783 = vunpack.c.l.b16 %v794
        %v1784 = vunpack.c.h.b16 %v794
        %v1785 = vunpack.c.l.b16 %v795
        %v1786 = vunpack.c.h.b16 %v795
        %v1787 = vunpack.c.l.b16 %v796
        %v1788 = vunpack.c.h.b16 %v796
        %v1789 = vunpack.c.l.b16 %v797
        %v1790 = vunpack.c.h.b16 %v797
        %v1791 = vunpack.c.l.b16 %v798
        %v1792 = vunpack.c.h.b16 %v798
        %v1793 = vunpack.c.l.b16 %v799
        %v1794 = vunpack.c.h.b16 %v799
        %v1795 = vunpack.c.l.b16 %v800
        %v1796 = vunpack.c.h.b16 %v800
        %v1797 = vunpack.c.l.b16 %v801
        %v1798 = vunpack.c.h.b16 %v801
        %v1799 = vunpack.c.l.b16 %v802
        %v1800 = vunpack.c.h.b16 %v802
        %v1801 = vunpack.c.l.b16 %v803
        %v1802 = vunpack.c.h.b16 %v803
        %v1803 = vunpack.c.l.b16 %v804
        %v1804 = vunpack.c.h.b16 %v804
        %v1805 = vunpack.c.l.b16 %v805
        %v1806 = vunpack.c.h.b16 %v805
        %v1807 = vunpack.c.l.b16 %v806
        %v1808 = vunpack.c.h.b16 %v806
        %v1809 = vunpack.c.l.b16 %v807
        %v1810 = vunpack.c.h.b16 %v807
        %v1811 = vunpack.c.l.b16 %v808
        %v1812 = vunpack.c.h.b16 %v808
        %v1813 = vunpack.c.l.b16 %v809
        %v1814 = vunpack.c.h.b16 %v809
        %v1815 = vunpack.c.l.b16 %v810
        %v1816 = vunpack.c.h.b16 %v810
        %v1817 = vunpack.c.l.b16 %v811
        %v1818 = vunpack.c.h.b16 %v811
        %v1819 = vunpack.c.l.b16 %v812
        %v1820 = vunpack.c.h.b16 %v812
        %v1821 = vunpack.c.l.b16 %v813
        %v1822 = vunpack.c.h.b16 %v813
        %v1823 = vunpack.c.l.b16 %v814
        %v1824 = vunpack.c.h.b16 %v814
        %v1825 = vunpack.c.l.b16 %v815
        %v1826 = vunpack.c.h.b16 %v815
        %v1827 = vunpack.c.l.b16 %v816
        %v1828 = vunpack.c.h.b16 %v816
        %v1829 = vunpack.c.l.b16 %v817
        %v1830 = vunpack.c.h.b16 %v817
        %v1831 = vunpack.c.l.b16 %v818
        %v1832 = vunpack.c.h.b16 %v818
        %v1833 = vunpack.c.l.b16 %v819
        %v1834 = vunpack.c.h.b16 %v819
        %v1835 = vunpack.c.l.b16 %v820
        %v1836 = vunpack.c.h.b16 %v820
        %v1837 = vunpack.c.l.b16 %v821
        %v1838 = vunpack.c.h.b16 %v821
        %v1839 = vunpack.c.l.b16 %v822
        %v1840 = vunpack.c.h.b16 %v822
        %v1841 = vunpack.c.l.b16 %v823
        %v1842 = vunpack.c.h.b16 %v823
        %v1843 = vunpack.c.l.b16 %v824
        %v1844 = vunpack.c.h.b16 %v824
        %v1845 = vunpack.c.l.b16 %v825
        %v1846 = vunpack.c.h.b16 %v825
        %v1847 = vunpack.c.l.b16 %v826
        %v1848 = vunpack.c.h.b16 %v826
        %v1849 = vunpack.c.l.b16 %v827
        %v1850 = vunpack.c.h.b16 %v827
        %v1851 = vunpack.c.l.b16 %v828
        %v1852 = vunpack.c.h.b16 %v828
        %v1853 = vunpack.c.l.b16 %v829
        %v1854 = vunpack.c.h.b16 %v829
        %v1855 = vunpack.c.l.b16 %v830
        %v1856 = vunpack.c.h.b16 %v830
        %v1857 = vunpack.c.l.b16 %v831
        %v1858 = vunpack.c.h.b16 %v831
        %v1859 = vunpack.c.l.b16 %v832
        %v1860 = vunpack.c.h.b16 %v832
        %v1861 = vunpack.c.l.b16 %v833
        %v1862 = vunpack.c.h.b16 %v833
        %v1863 = vunpack.c.l.b16 %v834
        %v1864 = vunpack.c.h.b16 %v834
        %v1865 = vpack.c.b16 %v1355, %v1353
        %v1866 = vpack.c.b16 %v1356, %v1354
        %v1867 = vpack.c.b16 %v1359, %v1357
        %v1868 = vpack.c.b16 %v1360, %v1358
        %v1869 = vpack.c.b16 %v1363, %v1361
        %v1870 = vpack.c.b16 %v1364, %v1362
        %v1871 = vpack.c.b16 %v1367, %v1365
        %v1872 = vpack.c.b16 %v1368, %v1366
        %v1873 = vpack.c.b16 %v1371, %v1369
        %v1874 = vpack.c.b16 %v1372, %v1370
        %v1875 = vpack.c.b16 %v1375, %v1373
        %v1876 = vpack.c.b16 %v1376, %v1374
        %v1877 = vpack.c.b16 %v1379, %v1377
        %v1878 = vpack.c.b16 %v1380, %v1378
        %v1879 = vpack.c.b16 %v1383, %v1381
        %v1880 = vpack.c.b16 %v1384, %v1382
        %v1881 = vpack.c.b16 %v1387, %v1385
        %v1882 = vpack.c.b16 %v1388, %v1386
        %v1883 = vpack.c.b16 %v1391, %v1389
        %v1884 = vpack.c.b16 %v1392, %v1390
        %v1885 = vpack.c.b16 %v1395, %v1393
        %v1886 = vpack.c.b16 %v1396, %v1394
        %v1887 = vpack.c.b16 %v1399, %v1397
        %v1888 = vpack.c.b16 %v1400, %v1398
        %v1889 = vpack.c.b16 %v1403, %v1401
        %v1890 = vpack.c.b16 %v1404, %v1402
        %v1891 = vpack.c.b16 %v1407, %v1405
        %v1892 = vpack.c.b16 %v1408, %v1406
        %v1893 = vpack.c.b16 %v1411, %v1409
        %v1894 = vpack.c.b16 %v1412, %v1410
        %v1895 = vpack.c.b16 %v1415, %v1413
        %v1896 = vpack.c.b16 %v1416, %v1414
        %v1897 = vpack.c.b16 %v1419, %v1417
        %v1898 = vpack.c.b16 %v1420, %v1418
        %v1899 = vpack.c.b16 %v1423, %v1421
        %v1900 = vpack.c.b16 %v1424, %v1422
        %v1901 = vpack.c.b16 %v1427, %v1425
        %v1902 = vpack.c.b16 %v1428, %v1426
        %v1903 = vpack.c.b16 %v1431, %v1429
        %v1904 = vpack.c.b16 %v1432, %v1430
        %v1905 = vpack.c.b16 %v1435, %v1433
        %v1906 = vpack.c.b16 %v1436, %v1434
        %v1907 = vpack.c.b16 %v1439, %v1437
        %v1908 = vpack.c.b16 %v1440, %v1438
        %v1909 = vpack.c.b16 %v1443, %v1441
        %v1910 = vpack.c.b16 %v1444, %v1442
        %v1911 = vpack.c.b16 %v1447, %v1445
        %v1912 = vpack.c.b16 %v1448, %v1446
        %v1913 = vpack.c.b16 %v1451, %v1449
        %v1914 = vpack.c.b16 %v1452, %v1450
        %v1915 = vpack.c.b16 %v1455, %v1453
        %v1916 = vpack.c.b16 %v1456, %v1454
        %v1917 = vpack.c.b16 %v1459, %v1457
        %v1918 = vpack.c.b16 %v1460, %v1458
        %v1919 = vpack.c.b16 %v1463, %v1461
        %v1920 = vpack.c.b16 %v1464, %v1462
        %v1921 = vpack.c.b16 %v1467, %v1465
        %v1922 = vpack.c.b16 %v1468, %v1466
        %v1923 = vpack.c.b16 %v1471, %v1469
        %v1924 = vpack.c.b16 %v1472, %v1470
        %v1925 = vpack.c.b16 %v1475, %v1473
        %v1926 = vpack.c.b16 %v1476, %v1474
        %v1927 = vpack.c.b16 %v1479, %v1477
        %v1928 = vpack.c.b16 %v1480, %v1478
        %v1929 = vpack.c.b16 %v1483, %v1481
        %v1930 = vpack.c.b16 %v1484, %v1482
        %v1931 = vpack.c.b16 %v1487, %v1485
        %v1932 = vpack.c.b16 %v1488, %v1486
        %v1933 = vpack.c.b16 %v1491, %v1489
        %v1934 = vpack.c.b16 %v1492, %v1490
        %v1935 = vpack.c.b16 %v1495, %v1493
        %v1936 = vpack.c.b16 %v1496, %v1494
        %v1937 = vpack.c.b16 %v1499, %v1497
        %v1938 = vpack.c.b16 %v1500, %v1498
        %v1939 = vpack.c.b16 %v1503, %v1501
        %v1940 = vpack.c.b16 %v1504, %v1502
        %v1941 = vpack.c.b16 %v1507, %v1505
        %v1942 = vpack.c.b16 %v1508, %v1506
        %v1943 = vpack.c.b16 %v1511, %v1509
        %v1944 = vpack.c.b16 %v1512, %v1510
        %v1945 = vpack.c.b16 %v1515, %v1513
        %v1946 = vpack.c.b16 %v1516, %v1514
        %v1947 = vpack.c.b16 %v1519, %v1517
        %v1948 = vpack.c.b16 %v1520, %v1518
        %v1949 = vpack.c.b16 %v1523, %v1521
        %v1950 = vpack.c.b16 %v1524, %v1522
        %v1951 = vpack.c.b16 %v1527, %v1525
        %v1952 = vpack.c.b16 %v1528, %v1526
        %v1953 = vpack.c.b16 %v1531, %v1529
        %v1954 = vpack.c.b16 %v1532, %v1530
        %v1955 = vpack.c.b16 %v1535, %v1533
        %v1956 = vpack.c.b16 %v1536, %v1534
        %v1957 = vpack.c.b16 %v1539, %v1537
        %v1958 = vpack.c.b16 %v1540, %v1538
        %v1959 = vpack.c.b16 %v1543, %v1541
        %v1960 = vpack.c.b16 %v1544, %v1542
        %v1961 = vpack.c.b16 %v1547, %v1545
        %v1962 = vpack.c.b16 %v1548, %v1546
        %v1963 = vpack.c.b16 %v1551, %v1549
        %v1964 = vpack.c.b16 %v1552, %v1550
        %v1965 = vpack.c.b16 %v1555, %v1553
        %v1966 = vpack.c.b16 %v1556, %v1554
        %v1967 = vpack.c.b16 %v1559, %v1557
        %v1968 = vpack.c.b16 %v1560, %v1558
        %v1969 = vpack.c.b16 %v1563, %v1561
        %v1970 = vpack.c.b16 %v1564, %v1562
        %v1971 = vpack.c.b16 %v1567, %v1565
        %v1972 = vpack.c.b16 %v1568, %v1566
        %v1973 = vpack.c.b16 %v1571, %v1569
        %v1974 = vpack.c.b16 %v1572, %v1570
        %v1975 = vpack.c.b16 %v1575, %v1573
        %v1976 = vpack.c.b16 %v1576, %v1574
        %v1977 = vpack.c.b16 %v1579, %v1577
        %v1978 = vpack.c.b16 %v1580, %v1578
        %v1979 = vpack.c.b16 %v1583, %v1581
        %v1980 = vpack.c.b16 %v1584, %v1582
        %v1981 = vpack.c.b16 %v1587, %v1585
        %v1982 = vpack.c.b16 %v1588, %v1586
        %v1983 = vpack.c.b16 %v1591, %v1589
        %v1984 = vpack.c.b16 %v1592, %v1590
        %v1985 = vpack.c.b16 %v1595, %v1593
        %v1986 = vpack.c.b16 %v1596, %v1594
        %v1987 = vpack.c.b16 %v1599, %v1597
        %v1988 = vpack.c.b16 %v1600, %v1598
        %v1989 = vpack.c.b16 %v1603, %v1601
        %v1990 = vpack.c.b16 %v1604, %v1602
        %v1991 = vpack.c.b16 %v1607, %v1605
        %v1992 = vpack.c.b16 %v1608, %v1606
        %v1993 = vpack.c.b16 %v1611, %v1609
        %v1994 = vpack.c.b16 %v1612, %v1610
        %v1995 = vpack.c.b16 %v1615, %v1613
        %v1996 = vpack.c.b16 %v1616, %v1614
        %v1997 = vpack.c.b16 %v1619, %v1617
        %v1998 = vpack.c.b16 %v1620, %v1618
        %v1999 = vpack.c.b16 %v1623, %v1621
        %v2000 = vpack.c.b16 %v1624, %v1622
        %v2001 = vpack.c.b16 %v1627, %v1625
        %v2002 = vpack.c.b16 %v1628, %v1626
        %v2003 = vpack.c.b16 %v1631, %v1629
        %v2004 = vpack.c.b16 %v1632, %v1630
        %v2005 = vpack.c.b16 %v1635, %v1633
        %v2006 = vpack.c.b16 %v1636, %v1634
        %v2007 = vpack.c.b16 %v1639, %v1637
        %v2008 = vpack.c.b16 %v1640, %v1638
        %v2009 = vpack.c.b16 %v1643, %v1641
        %v2010 = vpack.c.b16 %v1644, %v1642
        %v2011 = vpack.c.b16 %v1647, %v1645
        %v2012 = vpack.c.b16 %v1648, %v1646
        %v2013 = vpack.c.b16 %v1651, %v1649
        %v2014 = vpack.c.b16 %v1652, %v1650
        %v2015 = vpack.c.b16 %v1655, %v1653
        %v2016 = vpack.c.b16 %v1656, %v1654
        %v2017 = vpack.c.b16 %v1659, %v1657
        %v2018 = vpack.c.b16 %v1660, %v1658
        %v2019 = vpack.c.b16 %v1663, %v1661
        %v2020 = vpack.c.b16 %v1664, %v1662
        %v2021 = vpack.c.b16 %v1667, %v1665
        %v2022 = vpack.c.b16 %v1668, %v1666
        %v2023 = vpack.c.b16 %v1671, %v1669
        %v2024 = vpack.c.b16 %v1672, %v1670
        %v2025 = vpack.c.b16 %v1675, %v1673
        %v2026 = vpack.c.b16 %v1676, %v1674
        %v2027 = vpack.c.b16 %v1679, %v1677
        %v2028 = vpack.c.b16 %v1680, %v1678
        %v2029 = vpack.c.b16 %v1683, %v1681
        %v2030 = vpack.c.b16 %v1684, %v1682
        %v2031 = vpack.c.b16 %v1687, %v1685
        %v2032 = vpack.c.b16 %v1688, %v1686
        %v2033 = vpack.c.b16 %v1691, %v1689
        %v2034 = vpack.c.b16 %v1692, %v1690
        %v2035 = vpack.c.b16 %v1695, %v1693
        %v2036 = vpack.c.b16 %v1696, %v1694
        %v2037 = vpack.c.b16 %v1699, %v1697
        %v2038 = vpack.c.b16 %v1700, %v1698
        %v2039 = vpack.c.b16 %v1703, %v1701
        %v2040 = vpack.c.b16 %v1704, %v1702
        %v2041 = vpack.c.b16 %v1707, %v1705
        %v2042 = vpack.c.b16 %v1708, %v1706
        %v2043 = vpack.c.b16 %v1711, %v1709
        %v2044 = vpack.c.b16 %v1712, %v1710
        %v2045 = vpack.c.b16 %v1715, %v1713
        %v2046 = vpack.c.b16 %v1716, %v1714
        %v2047 = vpack.c.b16 %v1719, %v1717
        %v2048 = vpack.c.b16 %v1720, %v1718
        %v2049 = vpack.c.b16 %v1723, %v1721
        %v2050 = vpack.c.b16 %v1724, %v1722
        %v2051 = vpack.c.b16 %v1727, %v1725
        %v2052 = vpack.c.b16 %v1728, %v1726
        %v2053 = vpack.c.b16 %v1731, %v1729
        %v2054 = vpack.c.b16 %v1732, %v1730
        %v2055 = vpack.c.b16 %v1735, %v1733
        %v2056 = vpack.c.b16 %v1736, %v1734
        %v2057 = vpack.c.b16 %v1739, %v1737
        %v2058 = vpack.c.b16 %v1740, %v1738
        %v2059 = vpack.c.b16 %v1743, %v1741
        %v2060 = vpack.c.b16 %v1744, %v1742
        %v2061 = vpack.c.b16 %v1747, %v1745
        %v2062 = vpack.c.b16 %v1748, %v1746
        %v2063 = vpack.c.b16 %v1751, %v1749
        %v2064 = vpack.c.b16 %v1752, %v1750
        %v2065 = vpack.c.b16 %v1755, %v1753
        %v2066 = vpack.c.b16 %v1756, %v1754
        %v2067 = vpack.c.b16 %v1759, %v1757
        %v2068 = vpack.c.b16 %v1760, %v1758
        %v2069 = vpack.c.b16 %v1763, %v1761
        %v2070 = vpack.c.b16 %v1764, %v1762
        %v2071 = vpack.c.b16 %v1767, %v1765
        %v2072 = vpack.c.b16 %v1768, %v1766
        %v2073 = vpack.c.b16 %v1771, %v1769
        %v2074 = vpack.c.b16 %v1772, %v1770
        %v2075 = vpack.c.b16 %v1775, %v1773
        %v2076 = vpack.c.b16 %v1776, %v1774
        %v2077 = vpack.c.b16 %v1779, %v1777
        %v2078 = vpack.c.b16 %v1780, %v1778
        %v2079 = vpack.c.b16 %v1783, %v1781
        %v2080 = vpack.c.b16 %v1784, %v1782
        %v2081 = vpack.c.b16 %v1787, %v1785
        %v2082 = vpack.c.b16 %v1788, %v1786
        %v2083 = vpack.c.b16 %v1791, %v1789
        %v2084 = vpack.c.b16 %v1792, %v1790
        %v2085 = vpack.c.b16 %v1795, %v1793
        %v2086 = vpack.c.b16 %v1796, %v1794
        %v2087 = vpack.c.b16 %v1799, %v1797
        %v2088 = vpack.c.b16 %v1800, %v1798
        %v2089 = vpack.c.b16 %v1803, %v1801
        %v2090 = vpack.c.b16 %v1804, %v1802
        %v2091 = vpack.c.b16 %v1807, %v1805
        %v2092 = vpack.c.b16 %v1808, %v1806
        %v2093 = vpack.c.b16 %v1811, %v1809
        %v2094 = vpack.c.b16 %v1812, %v1810
        %v2095 = vpack.c.b16 %v1815, %v1813
        %v2096 = vpack.c.b16 %v1816, %v1814
        %v2097 = vpack.c.b16 %v1819, %v1817
        %v2098 = vpack.c.b16 %v1820, %v1818
        %v2099 = vpack.c.b16 %v1823, %v1821
        %v2100 = vpack.c.b16 %v1824, %v1822
        %v2101 = vpack.c.b16 %v1827, %v1825
        %v2102 = vpack.c.b16 %v1828, %v1826
        %v2103 = vpack.c.b16 %v1831, %v1829
        %v2104 = vpack.c.b16 %v1832, %v1830
        %v2105 = vpack.c.b16 %v1835, %v1833
        %v2106 = vpack.c.b16 %v1836, %v1834
        %v2107 = vpack.c.b16 %v1839, %v1837
        %v2108 = vpack.c.b16 %v1840, %v1838
        %v2109 = vpack.c.b16 %v1843, %v1841
        %v2110 = vpack.c.b16 %v1844, %v1842
        %v2111 = vpack.c.b16 %v1847, %v1845
        %v2112 = vpack.c.b16 %v1848, %v1846
        %v2113 = vpack.c.b16 %v1851, %v1849
        %v2114 = vpack.c.b16 %v1852, %v1850
        %v2115 = vpack.c.b16 %v1855, %v1853
        %v2116 = vpack.c.b16 %v1856, %v1854
        %v2117 = vpack.c.b16 %v1859, %v1857
        %v2118 = vpack.c.b16 %v1860, %v1858
        %v2119 = vpack.c.b16 %v1863, %v1861
        %v2120 = vpack.c.b16 %v1864, %v1862
        %2377 = vmatpush.bf16.msra.mxu0 %v1879
        %2378 = vmatpush.bf16.msra.mxu0 %v1877
        %2379 = vmatpush.bf16.msra.mxu0 %v1875
        %2380 = vmatpush.bf16.msra.mxu0 %v1873
        %2381 = vmatpush.bf16.msra.mxu0 %v1871
        %2382 = vmatpush.bf16.msra.mxu0 %v1869
        %2383 = vmatpush.bf16.msra.mxu0 %v1867
        %2384 = vmatpush.bf16.msra.mxu0 %v1865
        %2385 = vmatmul.bf16.gmra.mxu0 %v849
        %v2386 = vpop.f32.mrf.mxu0
        %v2387 = vadd.f32 %v837, %v2386
        %v2388 = vpop.f32.mrf.mxu0
        %v2389 = vadd.f32 %v837, %v2388
        %2390 = vmatmul.bf16.gmra.mxu0 %v850
        %v2391 = vpop.f32.mrf.mxu0
        %v2392 = vadd.f32 %v837, %v2391
        %v2393 = vpop.f32.mrf.mxu0
        %v2394 = vadd.f32 %v837, %v2393
        %2395 = vmatmul.bf16.gmra.mxu0 %v851
        %v2396 = vpop.f32.mrf.mxu0
        %v2397 = vadd.f32 %v837, %v2396
        %v2398 = vpop.f32.mrf.mxu0
        %v2399 = vadd.f32 %v837, %v2398
        %2400 = vmatmul.bf16.gmra.mxu0 %v852
        %v2401 = vpop.f32.mrf.mxu0
        %v2402 = vadd.f32 %v837, %v2401
        %v2403 = vpop.f32.mrf.mxu0
        %v2404 = vadd.f32 %v837, %v2403
        %2405 = vdwg.mxu0
        %2406 = vmatpush.bf16.msra.mxu0 %v1895
        %2407 = vmatpush.bf16.msra.mxu0 %v1893
        %2408 = vmatpush.bf16.msra.mxu0 %v1891
        %2409 = vmatpush.bf16.msra.mxu0 %v1889
        %2410 = vmatpush.bf16.msra.mxu0 %v1887
        %2411 = vmatpush.bf16.msra.mxu0 %v1885
        %2412 = vmatpush.bf16.msra.mxu0 %v1883
        %2413 = vmatpush.bf16.msra.mxu0 %v1881
        %2414 = vmatmul.bf16.gmra.mxu0 %v865
        %v2415 = vpop.f32.mrf.mxu0
        %v2416 = vadd.f32 %v2387, %v2415
        %v2417 = vpop.f32.mrf.mxu0
        %v2418 = vadd.f32 %v2389, %v2417
        %2419 = vmatmul.bf16.gmra.mxu0 %v866
        %v2420 = vpop.f32.mrf.mxu0
        %v2421 = vadd.f32 %v2392, %v2420
        %v2422 = vpop.f32.mrf.mxu0
        %v2423 = vadd.f32 %v2394, %v2422
        %2424 = vmatmul.bf16.gmra.mxu0 %v867
        %v2425 = vpop.f32.mrf.mxu0
        %v2426 = vadd.f32 %v2397, %v2425
        %v2427 = vpop.f32.mrf.mxu0
        %v2428 = vadd.f32 %v2399, %v2427
        %2429 = vmatmul.bf16.gmra.mxu0 %v868
        %v2430 = vpop.f32.mrf.mxu0
        %v2431 = vadd.f32 %v2402, %v2430
        %v2432 = vpop.f32.mrf.mxu0
        %v2433 = vadd.f32 %v2404, %v2432
        %2434 = vdwg.mxu0
        %2435 = vmatpush.bf16.msra.mxu0 %v1911
        %2436 = vmatpush.bf16.msra.mxu0 %v1909
        %2437 = vmatpush.bf16.msra.mxu0 %v1907
        %2438 = vmatpush.bf16.msra.mxu0 %v1905
        %2439 = vmatpush.bf16.msra.mxu0 %v1903
        %2440 = vmatpush.bf16.msra.mxu0 %v1901
        %2441 = vmatpush.bf16.msra.mxu0 %v1899
        %2442 = vmatpush.bf16.msra.mxu0 %v1897
        %2443 = vmatmul.bf16.gmra.mxu0 %v881
        %v2444 = vpop.f32.mrf.mxu0
        %v2445 = vadd.f32 %v2416, %v2444
        %v2446 = vpop.f32.mrf.mxu0
        %v2447 = vadd.f32 %v2418, %v2446
        %2448 = vmatmul.bf16.gmra.mxu0 %v882
        %v2449 = vpop.f32.mrf.mxu0
        %v2450 = vadd.f32 %v2421, %v2449
        %v2451 = vpop.f32.mrf.mxu0
        %v2452 = vadd.f32 %v2423, %v2451
        %2453 = vmatmul.bf16.gmra.mxu0 %v883
        %v2454 = vpop.f32.mrf.mxu0
        %v2455 = vadd.f32 %v2426, %v2454
        %v2456 = vpop.f32.mrf.mxu0
        %v2457 = vadd.f32 %v2428, %v2456
        %2458 = vmatmul.bf16.gmra.mxu0 %v884
        %v2459 = vpop.f32.mrf.mxu0
        %v2460 = vadd.f32 %v2431, %v2459
        %v2461 = vpop.f32.mrf.mxu0
        %v2462 = vadd.f32 %v2433, %v2461
        %2463 = vdwg.mxu0
        %2464 = vmatpush.bf16.msra.mxu0 %v1927
        %2465 = vmatpush.bf16.msra.mxu0 %v1925
        %2466 = vmatpush.bf16.msra.mxu0 %v1923
        %2467 = vmatpush.bf16.msra.mxu0 %v1921
        %2468 = vmatpush.bf16.msra.mxu0 %v1919
        %2469 = vmatpush.bf16.msra.mxu0 %v1917
        %2470 = vmatpush.bf16.msra.mxu0 %v1915
        %2471 = vmatpush.bf16.msra.mxu0 %v1913
        %2472 = vmatmul.bf16.gmra.mxu0 %v897
        %v2473 = vpop.f32.mrf.mxu0
        %v2474 = vadd.f32 %v2445, %v2473
        %v2475 = vpop.f32.mrf.mxu0
        %v2476 = vadd.f32 %v2447, %v2475
        %2477 = vmatmul.bf16.gmra.mxu0 %v898
        %v2478 = vpop.f32.mrf.mxu0
        %v2479 = vadd.f32 %v2450, %v2478
        %v2480 = vpop.f32.mrf.mxu0
        %v2481 = vadd.f32 %v2452, %v2480
        %2482 = vmatmul.bf16.gmra.mxu0 %v899
        %v2483 = vpop.f32.mrf.mxu0
        %v2484 = vadd.f32 %v2455, %v2483
        %v2485 = vpop.f32.mrf.mxu0
        %v2486 = vadd.f32 %v2457, %v2485
        %2487 = vmatmul.bf16.gmra.mxu0 %v900
        %v2488 = vpop.f32.mrf.mxu0
        %v2489 = vadd.f32 %v2460, %v2488
        %v2490 = vpop.f32.mrf.mxu0
        %v2491 = vadd.f32 %v2462, %v2490
        %2492 = vdwg.mxu0
        %2493 = vmatpush.bf16.msra.mxu0 %v1943
        %2494 = vmatpush.bf16.msra.mxu0 %v1941
        %2495 = vmatpush.bf16.msra.mxu0 %v1939
        %2496 = vmatpush.bf16.msra.mxu0 %v1937
        %2497 = vmatpush.bf16.msra.mxu0 %v1935
        %2498 = vmatpush.bf16.msra.mxu0 %v1933
        %2499 = vmatpush.bf16.msra.mxu0 %v1931
        %2500 = vmatpush.bf16.msra.mxu0 %v1929
        %2501 = vmatmul.bf16.gmra.mxu0 %v913
        %v2502 = vpop.f32.mrf.mxu0
        %v2503 = vadd.f32 %v2474, %v2502
        %v2504 = vpop.f32.mrf.mxu0
        %v2505 = vadd.f32 %v2476, %v2504
        %2506 = vmatmul.bf16.gmra.mxu0 %v914
        %v2507 = vpop.f32.mrf.mxu0
        %v2508 = vadd.f32 %v2479, %v2507
        %v2509 = vpop.f32.mrf.mxu0
        %v2510 = vadd.f32 %v2481, %v2509
        %2511 = vmatmul.bf16.gmra.mxu0 %v915
        %v2512 = vpop.f32.mrf.mxu0
        %v2513 = vadd.f32 %v2484, %v2512
        %v2514 = vpop.f32.mrf.mxu0
        %v2515 = vadd.f32 %v2486, %v2514
        %2516 = vmatmul.bf16.gmra.mxu0 %v916
        %v2517 = vpop.f32.mrf.mxu0
        %v2518 = vadd.f32 %v2489, %v2517
        %v2519 = vpop.f32.mrf.mxu0
        %v2520 = vadd.f32 %v2491, %v2519
        %2521 = vdwg.mxu0
        %2522 = vmatpush.bf16.msra.mxu0 %v1959
        %2523 = vmatpush.bf16.msra.mxu0 %v1957
        %2524 = vmatpush.bf16.msra.mxu0 %v1955
        %2525 = vmatpush.bf16.msra.mxu0 %v1953
        %2526 = vmatpush.bf16.msra.mxu0 %v1951
        %2527 = vmatpush.bf16.msra.mxu0 %v1949
        %2528 = vmatpush.bf16.msra.mxu0 %v1947
        %2529 = vmatpush.bf16.msra.mxu0 %v1945
        %2530 = vmatmul.bf16.gmra.mxu0 %v929
        %v2531 = vpop.f32.mrf.mxu0
        %v2532 = vadd.f32 %v2503, %v2531
        %v2533 = vpop.f32.mrf.mxu0
        %v2534 = vadd.f32 %v2505, %v2533
        %2535 = vmatmul.bf16.gmra.mxu0 %v930
        %v2536 = vpop.f32.mrf.mxu0
        %v2537 = vadd.f32 %v2508, %v2536
        %v2538 = vpop.f32.mrf.mxu0
        %v2539 = vadd.f32 %v2510, %v2538
        %2540 = vmatmul.bf16.gmra.mxu0 %v931
        %v2541 = vpop.f32.mrf.mxu0
        %v2542 = vadd.f32 %v2513, %v2541
        %v2543 = vpop.f32.mrf.mxu0
        %v2544 = vadd.f32 %v2515, %v2543
        %2545 = vmatmul.bf16.gmra.mxu0 %v932
        %v2546 = vpop.f32.mrf.mxu0
        %v2547 = vadd.f32 %v2518, %v2546
        %v2548 = vpop.f32.mrf.mxu0
        %v2549 = vadd.f32 %v2520, %v2548
        %2550 = vdwg.mxu0
        %2551 = vmatpush.bf16.msra.mxu0 %v1975
        %2552 = vmatpush.bf16.msra.mxu0 %v1973
        %2553 = vmatpush.bf16.msra.mxu0 %v1971
        %2554 = vmatpush.bf16.msra.mxu0 %v1969
        %2555 = vmatpush.bf16.msra.mxu0 %v1967
        %2556 = vmatpush.bf16.msra.mxu0 %v1965
        %2557 = vmatpush.bf16.msra.mxu0 %v1963
        %2558 = vmatpush.bf16.msra.mxu0 %v1961
        %2559 = vmatmul.bf16.gmra.mxu0 %v945
        %v2560 = vpop.f32.mrf.mxu0
        %v2561 = vadd.f32 %v2532, %v2560
        %v2562 = vpop.f32.mrf.mxu0
        %v2563 = vadd.f32 %v2534, %v2562
        %2564 = vmatmul.bf16.gmra.mxu0 %v946
        %v2565 = vpop.f32.mrf.mxu0
        %v2566 = vadd.f32 %v2537, %v2565
        %v2567 = vpop.f32.mrf.mxu0
        %v2568 = vadd.f32 %v2539, %v2567
        %2569 = vmatmul.bf16.gmra.mxu0 %v947
        %v2570 = vpop.f32.mrf.mxu0
        %v2571 = vadd.f32 %v2542, %v2570
        %v2572 = vpop.f32.mrf.mxu0
        %v2573 = vadd.f32 %v2544, %v2572
        %2574 = vmatmul.bf16.gmra.mxu0 %v948
        %v2575 = vpop.f32.mrf.mxu0
        %v2576 = vadd.f32 %v2547, %v2575
        %v2577 = vpop.f32.mrf.mxu0
        %v2578 = vadd.f32 %v2549, %v2577
        %2579 = vdwg.mxu0
        %2580 = vmatpush.bf16.msra.mxu0 %v1991
        %2581 = vmatpush.bf16.msra.mxu0 %v1989
        %2582 = vmatpush.bf16.msra.mxu0 %v1987
        %2583 = vmatpush.bf16.msra.mxu0 %v1985
        %2584 = vmatpush.bf16.msra.mxu0 %v1983
        %2585 = vmatpush.bf16.msra.mxu0 %v1981
        %2586 = vmatpush.bf16.msra.mxu0 %v1979
        %2587 = vmatpush.bf16.msra.mxu0 %v1977
        %2588 = vmatmul.bf16.gmra.mxu0 %v961
        %v2589 = vpop.f32.mrf.mxu0
        %v2590 = vadd.f32 %v2561, %v2589
        %v2591 = vpop.f32.mrf.mxu0
        %v2592 = vadd.f32 %v2563, %v2591
        %2593 = vmatmul.bf16.gmra.mxu0 %v962
        %v2594 = vpop.f32.mrf.mxu0
        %v2595 = vadd.f32 %v2566, %v2594
        %v2596 = vpop.f32.mrf.mxu0
        %v2597 = vadd.f32 %v2568, %v2596
        %2598 = vmatmul.bf16.gmra.mxu0 %v963
        %v2599 = vpop.f32.mrf.mxu0
        %v2600 = vadd.f32 %v2571, %v2599
        %v2601 = vpop.f32.mrf.mxu0
        %v2602 = vadd.f32 %v2573, %v2601
        %2603 = vmatmul.bf16.gmra.mxu0 %v964
        %v2604 = vpop.f32.mrf.mxu0
        %v2605 = vadd.f32 %v2576, %v2604
        %v2606 = vpop.f32.mrf.mxu0
        %v2607 = vadd.f32 %v2578, %v2606
        %2608 = vdwg.mxu0
        %2609 = vmatpush.bf16.msra.mxu0 %v2007
        %2610 = vmatpush.bf16.msra.mxu0 %v2005
        %2611 = vmatpush.bf16.msra.mxu0 %v2003
        %2612 = vmatpush.bf16.msra.mxu0 %v2001
        %2613 = vmatpush.bf16.msra.mxu0 %v1999
        %2614 = vmatpush.bf16.msra.mxu0 %v1997
        %2615 = vmatpush.bf16.msra.mxu0 %v1995
        %2616 = vmatpush.bf16.msra.mxu0 %v1993
        %2617 = vmatmul.bf16.gmra.mxu0 %v977
        %v2618 = vpop.f32.mrf.mxu0
        %v2619 = vadd.f32 %v2590, %v2618
        %v2620 = vpop.f32.mrf.mxu0
        %v2621 = vadd.f32 %v2592, %v2620
        %2622 = vmatmul.bf16.gmra.mxu0 %v978
        %v2623 = vpop.f32.mrf.mxu0
        %v2624 = vadd.f32 %v2595, %v2623
        %v2625 = vpop.f32.mrf.mxu0
        %v2626 = vadd.f32 %v2597, %v2625
        %2627 = vmatmul.bf16.gmra.mxu0 %v979
        %v2628 = vpop.f32.mrf.mxu0
        %v2629 = vadd.f32 %v2600, %v2628
        %v2630 = vpop.f32.mrf.mxu0
        %v2631 = vadd.f32 %v2602, %v2630
        %2632 = vmatmul.bf16.gmra.mxu0 %v980
        %v2633 = vpop.f32.mrf.mxu0
        %v2634 = vadd.f32 %v2605, %v2633
        %v2635 = vpop.f32.mrf.mxu0
        %v2636 = vadd.f32 %v2607, %v2635
        %2637 = vdwg.mxu0
        %2638 = vmatpush.bf16.msra.mxu0 %v2023
        %2639 = vmatpush.bf16.msra.mxu0 %v2021
        %2640 = vmatpush.bf16.msra.mxu0 %v2019
        %2641 = vmatpush.bf16.msra.mxu0 %v2017
        %2642 = vmatpush.bf16.msra.mxu0 %v2015
        %2643 = vmatpush.bf16.msra.mxu0 %v2013
        %2644 = vmatpush.bf16.msra.mxu0 %v2011
        %2645 = vmatpush.bf16.msra.mxu0 %v2009
        %2646 = vmatmul.bf16.gmra.mxu0 %v993
        %v2647 = vpop.f32.mrf.mxu0
        %v2648 = vadd.f32 %v2619, %v2647
        %v2649 = vpop.f32.mrf.mxu0
        %v2650 = vadd.f32 %v2621, %v2649
        %2651 = vmatmul.bf16.gmra.mxu0 %v994
        %v2652 = vpop.f32.mrf.mxu0
        %v2653 = vadd.f32 %v2624, %v2652
        %v2654 = vpop.f32.mrf.mxu0
        %v2655 = vadd.f32 %v2626, %v2654
        %2656 = vmatmul.bf16.gmra.mxu0 %v995
        %v2657 = vpop.f32.mrf.mxu0
        %v2658 = vadd.f32 %v2629, %v2657
        %v2659 = vpop.f32.mrf.mxu0
        %v2660 = vadd.f32 %v2631, %v2659
        %2661 = vmatmul.bf16.gmra.mxu0 %v996
        %v2662 = vpop.f32.mrf.mxu0
        %v2663 = vadd.f32 %v2634, %v2662
        %v2664 = vpop.f32.mrf.mxu0
        %v2665 = vadd.f32 %v2636, %v2664
        %2666 = vdwg.mxu0
        %2667 = vmatpush.bf16.msra.mxu0 %v2039
        %2668 = vmatpush.bf16.msra.mxu0 %v2037
        %2669 = vmatpush.bf16.msra.mxu0 %v2035
        %2670 = vmatpush.bf16.msra.mxu0 %v2033
        %2671 = vmatpush.bf16.msra.mxu0 %v2031
        %2672 = vmatpush.bf16.msra.mxu0 %v2029
        %2673 = vmatpush.bf16.msra.mxu0 %v2027
        %2674 = vmatpush.bf16.msra.mxu0 %v2025
        %2675 = vmatmul.bf16.gmra.mxu0 %v1009
        %v2676 = vpop.f32.mrf.mxu0
        %v2677 = vadd.f32 %v2648, %v2676
        %v2678 = vpop.f32.mrf.mxu0
        %v2679 = vadd.f32 %v2650, %v2678
        %2680 = vmatmul.bf16.gmra.mxu0 %v1010
        %v2681 = vpop.f32.mrf.mxu0
        %v2682 = vadd.f32 %v2653, %v2681
        %v2683 = vpop.f32.mrf.mxu0
        %v2684 = vadd.f32 %v2655, %v2683
        %2685 = vmatmul.bf16.gmra.mxu0 %v1011
        %v2686 = vpop.f32.mrf.mxu0
        %v2687 = vadd.f32 %v2658, %v2686
        %v2688 = vpop.f32.mrf.mxu0
        %v2689 = vadd.f32 %v2660, %v2688
        %2690 = vmatmul.bf16.gmra.mxu0 %v1012
        %v2691 = vpop.f32.mrf.mxu0
        %v2692 = vadd.f32 %v2663, %v2691
        %v2693 = vpop.f32.mrf.mxu0
        %v2694 = vadd.f32 %v2665, %v2693
        %2695 = vdwg.mxu0
        %2696 = vmatpush.bf16.msra.mxu0 %v2055
        %2697 = vmatpush.bf16.msra.mxu0 %v2053
        %2698 = vmatpush.bf16.msra.mxu0 %v2051
        %2699 = vmatpush.bf16.msra.mxu0 %v2049
        %2700 = vmatpush.bf16.msra.mxu0 %v2047
        %2701 = vmatpush.bf16.msra.mxu0 %v2045
        %2702 = vmatpush.bf16.msra.mxu0 %v2043
        %2703 = vmatpush.bf16.msra.mxu0 %v2041
        %2704 = vmatmul.bf16.gmra.mxu0 %v1025
        %v2705 = vpop.f32.mrf.mxu0
        %v2706 = vadd.f32 %v2677, %v2705
        %v2707 = vpop.f32.mrf.mxu0
        %v2708 = vadd.f32 %v2679, %v2707
        %2709 = vmatmul.bf16.gmra.mxu0 %v1026
        %v2710 = vpop.f32.mrf.mxu0
        %v2711 = vadd.f32 %v2682, %v2710
        %v2712 = vpop.f32.mrf.mxu0
        %v2713 = vadd.f32 %v2684, %v2712
        %2714 = vmatmul.bf16.gmra.mxu0 %v1027
        %v2715 = vpop.f32.mrf.mxu0
        %v2716 = vadd.f32 %v2687, %v2715
        %v2717 = vpop.f32.mrf.mxu0
        %v2718 = vadd.f32 %v2689, %v2717
        %2719 = vmatmul.bf16.gmra.mxu0 %v1028
        %v2720 = vpop.f32.mrf.mxu0
        %v2721 = vadd.f32 %v2692, %v2720
        %v2722 = vpop.f32.mrf.mxu0
        %v2723 = vadd.f32 %v2694, %v2722
        %2724 = vdwg.mxu0
        %2725 = vmatpush.bf16.msra.mxu0 %v2071
        %2726 = vmatpush.bf16.msra.mxu0 %v2069
        %2727 = vmatpush.bf16.msra.mxu0 %v2067
        %2728 = vmatpush.bf16.msra.mxu0 %v2065
        %2729 = vmatpush.bf16.msra.mxu0 %v2063
        %2730 = vmatpush.bf16.msra.mxu0 %v2061
        %2731 = vmatpush.bf16.msra.mxu0 %v2059
        %2732 = vmatpush.bf16.msra.mxu0 %v2057
        %2733 = vmatmul.bf16.gmra.mxu0 %v1041
        %v2734 = vpop.f32.mrf.mxu0
        %v2735 = vadd.f32 %v2706, %v2734
        %v2736 = vpop.f32.mrf.mxu0
        %v2737 = vadd.f32 %v2708, %v2736
        %2738 = vmatmul.bf16.gmra.mxu0 %v1042
        %v2739 = vpop.f32.mrf.mxu0
        %v2740 = vadd.f32 %v2711, %v2739
        %v2741 = vpop.f32.mrf.mxu0
        %v2742 = vadd.f32 %v2713, %v2741
        %2743 = vmatmul.bf16.gmra.mxu0 %v1043
        %v2744 = vpop.f32.mrf.mxu0
        %v2745 = vadd.f32 %v2716, %v2744
        %v2746 = vpop.f32.mrf.mxu0
        %v2747 = vadd.f32 %v2718, %v2746
        %2748 = vmatmul.bf16.gmra.mxu0 %v1044
        %v2749 = vpop.f32.mrf.mxu0
        %v2750 = vadd.f32 %v2721, %v2749
        %v2751 = vpop.f32.mrf.mxu0
        %v2752 = vadd.f32 %v2723, %v2751
        %2753 = vdwg.mxu0
        %2754 = vmatpush.bf16.msra.mxu0 %v2087
        %2755 = vmatpush.bf16.msra.mxu0 %v2085
        %2756 = vmatpush.bf16.msra.mxu0 %v2083
        %2757 = vmatpush.bf16.msra.mxu0 %v2081
        %2758 = vmatpush.bf16.msra.mxu0 %v2079
        %2759 = vmatpush.bf16.msra.mxu0 %v2077
        %2760 = vmatpush.bf16.msra.mxu0 %v2075
        %2761 = vmatpush.bf16.msra.mxu0 %v2073
        %2762 = vmatmul.bf16.gmra.mxu0 %v1057
        %v2763 = vpop.f32.mrf.mxu0
        %v2764 = vadd.f32 %v2735, %v2763
        %v2765 = vpop.f32.mrf.mxu0
        %v2766 = vadd.f32 %v2737, %v2765
        %2767 = vmatmul.bf16.gmra.mxu0 %v1058
        %v2768 = vpop.f32.mrf.mxu0
        %v2769 = vadd.f32 %v2740, %v2768
        %v2770 = vpop.f32.mrf.mxu0
        %v2771 = vadd.f32 %v2742, %v2770
        %2772 = vmatmul.bf16.gmra.mxu0 %v1059
        %v2773 = vpop.f32.mrf.mxu0
        %v2774 = vadd.f32 %v2745, %v2773
        %v2775 = vpop.f32.mrf.mxu0
        %v2776 = vadd.f32 %v2747, %v2775
        %2777 = vmatmul.bf16.gmra.mxu0 %v1060
        %v2778 = vpop.f32.mrf.mxu0
        %v2779 = vadd.f32 %v2750, %v2778
        %v2780 = vpop.f32.mrf.mxu0
        %v2781 = vadd.f32 %v2752, %v2780
        %2782 = vdwg.mxu0
        %2783 = vmatpush.bf16.msra.mxu0 %v2103
        %2784 = vmatpush.bf16.msra.mxu0 %v2101
        %2785 = vmatpush.bf16.msra.mxu0 %v2099
        %2786 = vmatpush.bf16.msra.mxu0 %v2097
        %2787 = vmatpush.bf16.msra.mxu0 %v2095
        %2788 = vmatpush.bf16.msra.mxu0 %v2093
        %2789 = vmatpush.bf16.msra.mxu0 %v2091
        %2790 = vmatpush.bf16.msra.mxu0 %v2089
        %2791 = vmatmul.bf16.gmra.mxu0 %v1073
        %v2792 = vpop.f32.mrf.mxu0
        %v2793 = vadd.f32 %v2764, %v2792
        %v2794 = vpop.f32.mrf.mxu0
        %v2795 = vadd.f32 %v2766, %v2794
        %2796 = vmatmul.bf16.gmra.mxu0 %v1074
        %v2797 = vpop.f32.mrf.mxu0
        %v2798 = vadd.f32 %v2769, %v2797
        %v2799 = vpop.f32.mrf.mxu0
        %v2800 = vadd.f32 %v2771, %v2799
        %2801 = vmatmul.bf16.gmra.mxu0 %v1075
        %v2802 = vpop.f32.mrf.mxu0
        %v2803 = vadd.f32 %v2774, %v2802
        %v2804 = vpop.f32.mrf.mxu0
        %v2805 = vadd.f32 %v2776, %v2804
        %2806 = vmatmul.bf16.gmra.mxu0 %v1076
        %v2807 = vpop.f32.mrf.mxu0
        %v2808 = vadd.f32 %v2779, %v2807
        %v2809 = vpop.f32.mrf.mxu0
        %v2810 = vadd.f32 %v2781, %v2809
        %2811 = vdwg.mxu0
        %2812 = vmatpush.bf16.msra.mxu0 %v2119
        %2813 = vmatpush.bf16.msra.mxu0 %v2117
        %2814 = vmatpush.bf16.msra.mxu0 %v2115
        %2815 = vmatpush.bf16.msra.mxu0 %v2113
        %2816 = vmatpush.bf16.msra.mxu0 %v2111
        %2817 = vmatpush.bf16.msra.mxu0 %v2109
        %2818 = vmatpush.bf16.msra.mxu0 %v2107
        %2819 = vmatpush.bf16.msra.mxu0 %v2105
        %2820 = vmatmul.bf16.gmra.mxu0 %v1089
        %v2821 = vpop.f32.mrf.mxu0
        %v2822 = vadd.f32 %v2793, %v2821
        %v2823 = vpop.f32.mrf.mxu0
        %v2824 = vadd.f32 %v2795, %v2823
        %2825 = vmatmul.bf16.gmra.mxu0 %v1090
        %v2826 = vpop.f32.mrf.mxu0
        %v2827 = vadd.f32 %v2798, %v2826
        %v2828 = vpop.f32.mrf.mxu0
        %v2829 = vadd.f32 %v2800, %v2828
        %2830 = vmatmul.bf16.gmra.mxu0 %v1091
        %v2831 = vpop.f32.mrf.mxu0
        %v2832 = vadd.f32 %v2803, %v2831
        %v2833 = vpop.f32.mrf.mxu0
        %v2834 = vadd.f32 %v2805, %v2833
        %2835 = vmatmul.bf16.gmra.mxu0 %v1092
        %v2836 = vpop.f32.mrf.mxu0
        %v2837 = vadd.f32 %v2808, %v2836
        %v2838 = vpop.f32.mrf.mxu0
        %v2839 = vadd.f32 %v2810, %v2838
        %2840 = vdwg.mxu0
        %2841 = vmatpush.bf16.msra.mxu0 %v1880
        %2842 = vmatpush.bf16.msra.mxu0 %v1878
        %2843 = vmatpush.bf16.msra.mxu0 %v1876
        %2844 = vmatpush.bf16.msra.mxu0 %v1874
        %2845 = vmatpush.bf16.msra.mxu0 %v1872
        %2846 = vmatpush.bf16.msra.mxu0 %v1870
        %2847 = vmatpush.bf16.msra.mxu0 %v1868
        %2848 = vmatpush.bf16.msra.mxu0 %v1866
        %2849 = vmatmul.bf16.gmra.mxu0 %v849
        %v2850 = vpop.f32.mrf.mxu0
        %v2851 = vadd.f32 %v838, %v2850
        %v2852 = vpop.f32.mrf.mxu0
        %v2853 = vadd.f32 %v838, %v2852
        %2854 = vmatmul.bf16.gmra.mxu0 %v850
        %v2855 = vpop.f32.mrf.mxu0
        %v2856 = vadd.f32 %v838, %v2855
        %v2857 = vpop.f32.mrf.mxu0
        %v2858 = vadd.f32 %v838, %v2857
        %2859 = vmatmul.bf16.gmra.mxu0 %v851
        %v2860 = vpop.f32.mrf.mxu0
        %v2861 = vadd.f32 %v838, %v2860
        %v2862 = vpop.f32.mrf.mxu0
        %v2863 = vadd.f32 %v838, %v2862
        %2864 = vmatmul.bf16.gmra.mxu0 %v852
        %v2865 = vpop.f32.mrf.mxu0
        %v2866 = vadd.f32 %v838, %v2865
        %v2867 = vpop.f32.mrf.mxu0
        %v2868 = vadd.f32 %v838, %v2867
        %2869 = vdwg.mxu0
        %2870 = vmatpush.bf16.msra.mxu0 %v1896
        %2871 = vmatpush.bf16.msra.mxu0 %v1894
        %2872 = vmatpush.bf16.msra.mxu0 %v1892
        %2873 = vmatpush.bf16.msra.mxu0 %v1890
        %2874 = vmatpush.bf16.msra.mxu0 %v1888
        %2875 = vmatpush.bf16.msra.mxu0 %v1886
        %2876 = vmatpush.bf16.msra.mxu0 %v1884
        %2877 = vmatpush.bf16.msra.mxu0 %v1882
        %2878 = vmatmul.bf16.gmra.mxu0 %v865
        %v2879 = vpop.f32.mrf.mxu0
        %v2880 = vadd.f32 %v2851, %v2879
        %v2881 = vpop.f32.mrf.mxu0
        %v2882 = vadd.f32 %v2853, %v2881
        %2883 = vmatmul.bf16.gmra.mxu0 %v866
        %v2884 = vpop.f32.mrf.mxu0
        %v2885 = vadd.f32 %v2856, %v2884
        %v2886 = vpop.f32.mrf.mxu0
        %v2887 = vadd.f32 %v2858, %v2886
        %2888 = vmatmul.bf16.gmra.mxu0 %v867
        %v2889 = vpop.f32.mrf.mxu0
        %v2890 = vadd.f32 %v2861, %v2889
        %v2891 = vpop.f32.mrf.mxu0
        %v2892 = vadd.f32 %v2863, %v2891
        %2893 = vmatmul.bf16.gmra.mxu0 %v868
        %v2894 = vpop.f32.mrf.mxu0
        %v2895 = vadd.f32 %v2866, %v2894
        %v2896 = vpop.f32.mrf.mxu0
        %v2897 = vadd.f32 %v2868, %v2896
        %2898 = vdwg.mxu0
        %2899 = vmatpush.bf16.msra.mxu0 %v1912
        %2900 = vmatpush.bf16.msra.mxu0 %v1910
        %2901 = vmatpush.bf16.msra.mxu0 %v1908
        %2902 = vmatpush.bf16.msra.mxu0 %v1906
        %2903 = vmatpush.bf16.msra.mxu0 %v1904
        %2904 = vmatpush.bf16.msra.mxu0 %v1902
        %2905 = vmatpush.bf16.msra.mxu0 %v1900
        %2906 = vmatpush.bf16.msra.mxu0 %v1898
        %2907 = vmatmul.bf16.gmra.mxu0 %v881
        %v2908 = vpop.f32.mrf.mxu0
        %v2909 = vadd.f32 %v2880, %v2908
        %v2910 = vpop.f32.mrf.mxu0
        %v2911 = vadd.f32 %v2882, %v2910
        %2912 = vmatmul.bf16.gmra.mxu0 %v882
        %v2913 = vpop.f32.mrf.mxu0
        %v2914 = vadd.f32 %v2885, %v2913
        %v2915 = vpop.f32.mrf.mxu0
        %v2916 = vadd.f32 %v2887, %v2915
        %2917 = vmatmul.bf16.gmra.mxu0 %v883
        %v2918 = vpop.f32.mrf.mxu0
        %v2919 = vadd.f32 %v2890, %v2918
        %v2920 = vpop.f32.mrf.mxu0
        %v2921 = vadd.f32 %v2892, %v2920
        %2922 = vmatmul.bf16.gmra.mxu0 %v884
        %v2923 = vpop.f32.mrf.mxu0
        %v2924 = vadd.f32 %v2895, %v2923
        %v2925 = vpop.f32.mrf.mxu0
        %v2926 = vadd.f32 %v2897, %v2925
        %2927 = vdwg.mxu0
        %2928 = vmatpush.bf16.msra.mxu0 %v1928
        %2929 = vmatpush.bf16.msra.mxu0 %v1926
        %2930 = vmatpush.bf16.msra.mxu0 %v1924
        %2931 = vmatpush.bf16.msra.mxu0 %v1922
        %2932 = vmatpush.bf16.msra.mxu0 %v1920
        %2933 = vmatpush.bf16.msra.mxu0 %v1918
        %2934 = vmatpush.bf16.msra.mxu0 %v1916
        %2935 = vmatpush.bf16.msra.mxu0 %v1914
        %2936 = vmatmul.bf16.gmra.mxu0 %v897
        %v2937 = vpop.f32.mrf.mxu0
        %v2938 = vadd.f32 %v2909, %v2937
        %v2939 = vpop.f32.mrf.mxu0
        %v2940 = vadd.f32 %v2911, %v2939
        %2941 = vmatmul.bf16.gmra.mxu0 %v898
        %v2942 = vpop.f32.mrf.mxu0
        %v2943 = vadd.f32 %v2914, %v2942
        %v2944 = vpop.f32.mrf.mxu0
        %v2945 = vadd.f32 %v2916, %v2944
        %2946 = vmatmul.bf16.gmra.mxu0 %v899
        %v2947 = vpop.f32.mrf.mxu0
        %v2948 = vadd.f32 %v2919, %v2947
        %v2949 = vpop.f32.mrf.mxu0
        %v2950 = vadd.f32 %v2921, %v2949
        %2951 = vmatmul.bf16.gmra.mxu0 %v900
        %v2952 = vpop.f32.mrf.mxu0
        %v2953 = vadd.f32 %v2924, %v2952
        %v2954 = vpop.f32.mrf.mxu0
        %v2955 = vadd.f32 %v2926, %v2954
        %2956 = vdwg.mxu0
        %2957 = vmatpush.bf16.msra.mxu0 %v1944
        %2958 = vmatpush.bf16.msra.mxu0 %v1942
        %2959 = vmatpush.bf16.msra.mxu0 %v1940
        %2960 = vmatpush.bf16.msra.mxu0 %v1938
        %2961 = vmatpush.bf16.msra.mxu0 %v1936
        %2962 = vmatpush.bf16.msra.mxu0 %v1934
        %2963 = vmatpush.bf16.msra.mxu0 %v1932
        %2964 = vmatpush.bf16.msra.mxu0 %v1930
        %2965 = vmatmul.bf16.gmra.mxu0 %v913
        %v2966 = vpop.f32.mrf.mxu0
        %v2967 = vadd.f32 %v2938, %v2966
        %v2968 = vpop.f32.mrf.mxu0
        %v2969 = vadd.f32 %v2940, %v2968
        %2970 = vmatmul.bf16.gmra.mxu0 %v914
        %v2971 = vpop.f32.mrf.mxu0
        %v2972 = vadd.f32 %v2943, %v2971
        %v2973 = vpop.f32.mrf.mxu0
        %v2974 = vadd.f32 %v2945, %v2973
        %2975 = vmatmul.bf16.gmra.mxu0 %v915
        %v2976 = vpop.f32.mrf.mxu0
        %v2977 = vadd.f32 %v2948, %v2976
        %v2978 = vpop.f32.mrf.mxu0
        %v2979 = vadd.f32 %v2950, %v2978
        %2980 = vmatmul.bf16.gmra.mxu0 %v916
        %v2981 = vpop.f32.mrf.mxu0
        %v2982 = vadd.f32 %v2953, %v2981
        %v2983 = vpop.f32.mrf.mxu0
        %v2984 = vadd.f32 %v2955, %v2983
        %2985 = vdwg.mxu0
        %2986 = vmatpush.bf16.msra.mxu0 %v1960
        %2987 = vmatpush.bf16.msra.mxu0 %v1958
        %2988 = vmatpush.bf16.msra.mxu0 %v1956
        %2989 = vmatpush.bf16.msra.mxu0 %v1954
        %2990 = vmatpush.bf16.msra.mxu0 %v1952
        %2991 = vmatpush.bf16.msra.mxu0 %v1950
        %2992 = vmatpush.bf16.msra.mxu0 %v1948
        %2993 = vmatpush.bf16.msra.mxu0 %v1946
        %2994 = vmatmul.bf16.gmra.mxu0 %v929
        %v2995 = vpop.f32.mrf.mxu0
        %v2996 = vadd.f32 %v2967, %v2995
        %v2997 = vpop.f32.mrf.mxu0
        %v2998 = vadd.f32 %v2969, %v2997
        %2999 = vmatmul.bf16.gmra.mxu0 %v930
        %v3000 = vpop.f32.mrf.mxu0
        %v3001 = vadd.f32 %v2972, %v3000
        %v3002 = vpop.f32.mrf.mxu0
        %v3003 = vadd.f32 %v2974, %v3002
        %3004 = vmatmul.bf16.gmra.mxu0 %v931
        %v3005 = vpop.f32.mrf.mxu0
        %v3006 = vadd.f32 %v2977, %v3005
        %v3007 = vpop.f32.mrf.mxu0
        %v3008 = vadd.f32 %v2979, %v3007
        %3009 = vmatmul.bf16.gmra.mxu0 %v932
        %v3010 = vpop.f32.mrf.mxu0
        %v3011 = vadd.f32 %v2982, %v3010
        %v3012 = vpop.f32.mrf.mxu0
        %v3013 = vadd.f32 %v2984, %v3012
        %3014 = vdwg.mxu0
        %3015 = vmatpush.bf16.msra.mxu0 %v1976
        %3016 = vmatpush.bf16.msra.mxu0 %v1974
        %3017 = vmatpush.bf16.msra.mxu0 %v1972
        %3018 = vmatpush.bf16.msra.mxu0 %v1970
        %3019 = vmatpush.bf16.msra.mxu0 %v1968
        %3020 = vmatpush.bf16.msra.mxu0 %v1966
        %3021 = vmatpush.bf16.msra.mxu0 %v1964
        %3022 = vmatpush.bf16.msra.mxu0 %v1962
        %3023 = vmatmul.bf16.gmra.mxu0 %v945
        %v3024 = vpop.f32.mrf.mxu0
        %v3025 = vadd.f32 %v2996, %v3024
        %v3026 = vpop.f32.mrf.mxu0
        %v3027 = vadd.f32 %v2998, %v3026
        %3028 = vmatmul.bf16.gmra.mxu0 %v946
        %v3029 = vpop.f32.mrf.mxu0
        %v3030 = vadd.f32 %v3001, %v3029
        %v3031 = vpop.f32.mrf.mxu0
        %v3032 = vadd.f32 %v3003, %v3031
        %3033 = vmatmul.bf16.gmra.mxu0 %v947
        %v3034 = vpop.f32.mrf.mxu0
        %v3035 = vadd.f32 %v3006, %v3034
        %v3036 = vpop.f32.mrf.mxu0
        %v3037 = vadd.f32 %v3008, %v3036
        %3038 = vmatmul.bf16.gmra.mxu0 %v948
        %v3039 = vpop.f32.mrf.mxu0
        %v3040 = vadd.f32 %v3011, %v3039
        %v3041 = vpop.f32.mrf.mxu0
        %v3042 = vadd.f32 %v3013, %v3041
        %3043 = vdwg.mxu0
        %3044 = vmatpush.bf16.msra.mxu0 %v1992
        %3045 = vmatpush.bf16.msra.mxu0 %v1990
        %3046 = vmatpush.bf16.msra.mxu0 %v1988
        %3047 = vmatpush.bf16.msra.mxu0 %v1986
        %3048 = vmatpush.bf16.msra.mxu0 %v1984
        %3049 = vmatpush.bf16.msra.mxu0 %v1982
        %3050 = vmatpush.bf16.msra.mxu0 %v1980
        %3051 = vmatpush.bf16.msra.mxu0 %v1978
        %3052 = vmatmul.bf16.gmra.mxu0 %v961
        %v3053 = vpop.f32.mrf.mxu0
        %v3054 = vadd.f32 %v3025, %v3053
        %v3055 = vpop.f32.mrf.mxu0
        %v3056 = vadd.f32 %v3027, %v3055
        %3057 = vmatmul.bf16.gmra.mxu0 %v962
        %v3058 = vpop.f32.mrf.mxu0
        %v3059 = vadd.f32 %v3030, %v3058
        %v3060 = vpop.f32.mrf.mxu0
        %v3061 = vadd.f32 %v3032, %v3060
        %3062 = vmatmul.bf16.gmra.mxu0 %v963
        %v3063 = vpop.f32.mrf.mxu0
        %v3064 = vadd.f32 %v3035, %v3063
        %v3065 = vpop.f32.mrf.mxu0
        %v3066 = vadd.f32 %v3037, %v3065
        %3067 = vmatmul.bf16.gmra.mxu0 %v964
        %v3068 = vpop.f32.mrf.mxu0
        %v3069 = vadd.f32 %v3040, %v3068
        %v3070 = vpop.f32.mrf.mxu0
        %v3071 = vadd.f32 %v3042, %v3070
        %3072 = vdwg.mxu0
        %3073 = vmatpush.bf16.msra.mxu0 %v2008
        %3074 = vmatpush.bf16.msra.mxu0 %v2006
        %3075 = vmatpush.bf16.msra.mxu0 %v2004
        %3076 = vmatpush.bf16.msra.mxu0 %v2002
        %3077 = vmatpush.bf16.msra.mxu0 %v2000
        %3078 = vmatpush.bf16.msra.mxu0 %v1998
        %3079 = vmatpush.bf16.msra.mxu0 %v1996
        %3080 = vmatpush.bf16.msra.mxu0 %v1994
        %3081 = vmatmul.bf16.gmra.mxu0 %v977
        %v3082 = vpop.f32.mrf.mxu0
        %v3083 = vadd.f32 %v3054, %v3082
        %v3084 = vpop.f32.mrf.mxu0
        %v3085 = vadd.f32 %v3056, %v3084
        %3086 = vmatmul.bf16.gmra.mxu0 %v978
        %v3087 = vpop.f32.mrf.mxu0
        %v3088 = vadd.f32 %v3059, %v3087
        %v3089 = vpop.f32.mrf.mxu0
        %v3090 = vadd.f32 %v3061, %v3089
        %3091 = vmatmul.bf16.gmra.mxu0 %v979
        %v3092 = vpop.f32.mrf.mxu0
        %v3093 = vadd.f32 %v3064, %v3092
        %v3094 = vpop.f32.mrf.mxu0
        %v3095 = vadd.f32 %v3066, %v3094
        %3096 = vmatmul.bf16.gmra.mxu0 %v980
        %v3097 = vpop.f32.mrf.mxu0
        %v3098 = vadd.f32 %v3069, %v3097
        %v3099 = vpop.f32.mrf.mxu0
        %v3100 = vadd.f32 %v3071, %v3099
        %3101 = vdwg.mxu0
        %3102 = vmatpush.bf16.msra.mxu0 %v2024
        %3103 = vmatpush.bf16.msra.mxu0 %v2022
        %3104 = vmatpush.bf16.msra.mxu0 %v2020
        %3105 = vmatpush.bf16.msra.mxu0 %v2018
        %3106 = vmatpush.bf16.msra.mxu0 %v2016
        %3107 = vmatpush.bf16.msra.mxu0 %v2014
        %3108 = vmatpush.bf16.msra.mxu0 %v2012
        %3109 = vmatpush.bf16.msra.mxu0 %v2010
        %3110 = vmatmul.bf16.gmra.mxu0 %v993
        %v3111 = vpop.f32.mrf.mxu0
        %v3112 = vadd.f32 %v3083, %v3111
        %v3113 = vpop.f32.mrf.mxu0
        %v3114 = vadd.f32 %v3085, %v3113
        %3115 = vmatmul.bf16.gmra.mxu0 %v994
        %v3116 = vpop.f32.mrf.mxu0
        %v3117 = vadd.f32 %v3088, %v3116
        %v3118 = vpop.f32.mrf.mxu0
        %v3119 = vadd.f32 %v3090, %v3118
        %3120 = vmatmul.bf16.gmra.mxu0 %v995
        %v3121 = vpop.f32.mrf.mxu0
        %v3122 = vadd.f32 %v3093, %v3121
        %v3123 = vpop.f32.mrf.mxu0
        %v3124 = vadd.f32 %v3095, %v3123
        %3125 = vmatmul.bf16.gmra.mxu0 %v996
        %v3126 = vpop.f32.mrf.mxu0
        %v3127 = vadd.f32 %v3098, %v3126
        %v3128 = vpop.f32.mrf.mxu0
        %v3129 = vadd.f32 %v3100, %v3128
        %3130 = vdwg.mxu0
        %3131 = vmatpush.bf16.msra.mxu0 %v2040
        %3132 = vmatpush.bf16.msra.mxu0 %v2038
        %3133 = vmatpush.bf16.msra.mxu0 %v2036
        %3134 = vmatpush.bf16.msra.mxu0 %v2034
        %3135 = vmatpush.bf16.msra.mxu0 %v2032
        %3136 = vmatpush.bf16.msra.mxu0 %v2030
        %3137 = vmatpush.bf16.msra.mxu0 %v2028
        %3138 = vmatpush.bf16.msra.mxu0 %v2026
        %3139 = vmatmul.bf16.gmra.mxu0 %v1009
        %v3140 = vpop.f32.mrf.mxu0
        %v3141 = vadd.f32 %v3112, %v3140
        %v3142 = vpop.f32.mrf.mxu0
        %v3143 = vadd.f32 %v3114, %v3142
        %3144 = vmatmul.bf16.gmra.mxu0 %v1010
        %v3145 = vpop.f32.mrf.mxu0
        %v3146 = vadd.f32 %v3117, %v3145
        %v3147 = vpop.f32.mrf.mxu0
        %v3148 = vadd.f32 %v3119, %v3147
        %3149 = vmatmul.bf16.gmra.mxu0 %v1011
        %v3150 = vpop.f32.mrf.mxu0
        %v3151 = vadd.f32 %v3122, %v3150
        %v3152 = vpop.f32.mrf.mxu0
        %v3153 = vadd.f32 %v3124, %v3152
        %3154 = vmatmul.bf16.gmra.mxu0 %v1012
        %v3155 = vpop.f32.mrf.mxu0
        %v3156 = vadd.f32 %v3127, %v3155
        %v3157 = vpop.f32.mrf.mxu0
        %v3158 = vadd.f32 %v3129, %v3157
        %3159 = vdwg.mxu0
        %3160 = vmatpush.bf16.msra.mxu0 %v2056
        %3161 = vmatpush.bf16.msra.mxu0 %v2054
        %3162 = vmatpush.bf16.msra.mxu0 %v2052
        %3163 = vmatpush.bf16.msra.mxu0 %v2050
        %3164 = vmatpush.bf16.msra.mxu0 %v2048
        %3165 = vmatpush.bf16.msra.mxu0 %v2046
        %3166 = vmatpush.bf16.msra.mxu0 %v2044
        %3167 = vmatpush.bf16.msra.mxu0 %v2042
        %3168 = vmatmul.bf16.gmra.mxu0 %v1025
        %v3169 = vpop.f32.mrf.mxu0
        %v3170 = vadd.f32 %v3141, %v3169
        %v3171 = vpop.f32.mrf.mxu0
        %v3172 = vadd.f32 %v3143, %v3171
        %3173 = vmatmul.bf16.gmra.mxu0 %v1026
        %v3174 = vpop.f32.mrf.mxu0
        %v3175 = vadd.f32 %v3146, %v3174
        %v3176 = vpop.f32.mrf.mxu0
        %v3177 = vadd.f32 %v3148, %v3176
        %3178 = vmatmul.bf16.gmra.mxu0 %v1027
        %v3179 = vpop.f32.mrf.mxu0
        %v3180 = vadd.f32 %v3151, %v3179
        %v3181 = vpop.f32.mrf.mxu0
        %v3182 = vadd.f32 %v3153, %v3181
        %3183 = vmatmul.bf16.gmra.mxu0 %v1028
        %v3184 = vpop.f32.mrf.mxu0
        %v3185 = vadd.f32 %v3156, %v3184
        %v3186 = vpop.f32.mrf.mxu0
        %v3187 = vadd.f32 %v3158, %v3186
        %3188 = vdwg.mxu0
        %3189 = vmatpush.bf16.msra.mxu0 %v2072
        %3190 = vmatpush.bf16.msra.mxu0 %v2070
        %3191 = vmatpush.bf16.msra.mxu0 %v2068
        %3192 = vmatpush.bf16.msra.mxu0 %v2066
        %3193 = vmatpush.bf16.msra.mxu0 %v2064
        %3194 = vmatpush.bf16.msra.mxu0 %v2062
        %3195 = vmatpush.bf16.msra.mxu0 %v2060
        %3196 = vmatpush.bf16.msra.mxu0 %v2058
        %3197 = vmatmul.bf16.gmra.mxu0 %v1041
        %v3198 = vpop.f32.mrf.mxu0
        %v3199 = vadd.f32 %v3170, %v3198
        %v3200 = vpop.f32.mrf.mxu0
        %v3201 = vadd.f32 %v3172, %v3200
        %3202 = vmatmul.bf16.gmra.mxu0 %v1042
        %v3203 = vpop.f32.mrf.mxu0
        %v3204 = vadd.f32 %v3175, %v3203
        %v3205 = vpop.f32.mrf.mxu0
        %v3206 = vadd.f32 %v3177, %v3205
        %3207 = vmatmul.bf16.gmra.mxu0 %v1043
        %v3208 = vpop.f32.mrf.mxu0
        %v3209 = vadd.f32 %v3180, %v3208
        %v3210 = vpop.f32.mrf.mxu0
        %v3211 = vadd.f32 %v3182, %v3210
        %3212 = vmatmul.bf16.gmra.mxu0 %v1044
        %v3213 = vpop.f32.mrf.mxu0
        %v3214 = vadd.f32 %v3185, %v3213
        %v3215 = vpop.f32.mrf.mxu0
        %v3216 = vadd.f32 %v3187, %v3215
        %3217 = vdwg.mxu0
        %3218 = vmatpush.bf16.msra.mxu0 %v2088
        %3219 = vmatpush.bf16.msra.mxu0 %v2086
        %3220 = vmatpush.bf16.msra.mxu0 %v2084
        %3221 = vmatpush.bf16.msra.mxu0 %v2082
        %3222 = vmatpush.bf16.msra.mxu0 %v2080
        %3223 = vmatpush.bf16.msra.mxu0 %v2078
        %3224 = vmatpush.bf16.msra.mxu0 %v2076
        %3225 = vmatpush.bf16.msra.mxu0 %v2074
        %3226 = vmatmul.bf16.gmra.mxu0 %v1057
        %v3227 = vpop.f32.mrf.mxu0
        %v3228 = vadd.f32 %v3199, %v3227
        %v3229 = vpop.f32.mrf.mxu0
        %v3230 = vadd.f32 %v3201, %v3229
        %3231 = vmatmul.bf16.gmra.mxu0 %v1058
        %v3232 = vpop.f32.mrf.mxu0
        %v3233 = vadd.f32 %v3204, %v3232
        %v3234 = vpop.f32.mrf.mxu0
        %v3235 = vadd.f32 %v3206, %v3234
        %3236 = vmatmul.bf16.gmra.mxu0 %v1059
        %v3237 = vpop.f32.mrf.mxu0
        %v3238 = vadd.f32 %v3209, %v3237
        %v3239 = vpop.f32.mrf.mxu0
        %v3240 = vadd.f32 %v3211, %v3239
        %3241 = vmatmul.bf16.gmra.mxu0 %v1060
        %v3242 = vpop.f32.mrf.mxu0
        %v3243 = vadd.f32 %v3214, %v3242
        %v3244 = vpop.f32.mrf.mxu0
        %v3245 = vadd.f32 %v3216, %v3244
        %3246 = vdwg.mxu0
        %3247 = vmatpush.bf16.msra.mxu0 %v2104
        %3248 = vmatpush.bf16.msra.mxu0 %v2102
        %3249 = vmatpush.bf16.msra.mxu0 %v2100
        %3250 = vmatpush.bf16.msra.mxu0 %v2098
        %3251 = vmatpush.bf16.msra.mxu0 %v2096
        %3252 = vmatpush.bf16.msra.mxu0 %v2094
        %3253 = vmatpush.bf16.msra.mxu0 %v2092
        %3254 = vmatpush.bf16.msra.mxu0 %v2090
        %3255 = vmatmul.bf16.gmra.mxu0 %v1073
        %v3256 = vpop.f32.mrf.mxu0
        %v3257 = vadd.f32 %v3228, %v3256
        %v3258 = vpop.f32.mrf.mxu0
        %v3259 = vadd.f32 %v3230, %v3258
        %3260 = vmatmul.bf16.gmra.mxu0 %v1074
        %v3261 = vpop.f32.mrf.mxu0
        %v3262 = vadd.f32 %v3233, %v3261
        %v3263 = vpop.f32.mrf.mxu0
        %v3264 = vadd.f32 %v3235, %v3263
        %3265 = vmatmul.bf16.gmra.mxu0 %v1075
        %v3266 = vpop.f32.mrf.mxu0
        %v3267 = vadd.f32 %v3238, %v3266
        %v3268 = vpop.f32.mrf.mxu0
        %v3269 = vadd.f32 %v3240, %v3268
        %3270 = vmatmul.bf16.gmra.mxu0 %v1076
        %v3271 = vpop.f32.mrf.mxu0
        %v3272 = vadd.f32 %v3243, %v3271
        %v3273 = vpop.f32.mrf.mxu0
        %v3274 = vadd.f32 %v3245, %v3273
        %3275 = vdwg.mxu0
        %3276 = vmatpush.bf16.msra.mxu0 %v2120
        %3277 = vmatpush.bf16.msra.mxu0 %v2118
        %3278 = vmatpush.bf16.msra.mxu0 %v2116
        %3279 = vmatpush.bf16.msra.mxu0 %v2114
        %3280 = vmatpush.bf16.msra.mxu0 %v2112
        %3281 = vmatpush.bf16.msra.mxu0 %v2110
        %3282 = vmatpush.bf16.msra.mxu0 %v2108
        %3283 = vmatpush.bf16.msra.mxu0 %v2106
        %3284 = vmatmul.bf16.gmra.mxu0 %v1089
        %v3285 = vpop.f32.mrf.mxu0
        %v3286 = vadd.f32 %v3257, %v3285
        %v3287 = vpop.f32.mrf.mxu0
        %v3288 = vadd.f32 %v3259, %v3287
        %3289 = vmatmul.bf16.gmra.mxu0 %v1090
        %v3290 = vpop.f32.mrf.mxu0
        %v3291 = vadd.f32 %v3262, %v3290
        %v3292 = vpop.f32.mrf.mxu0
        %v3293 = vadd.f32 %v3264, %v3292
        %3294 = vmatmul.bf16.gmra.mxu0 %v1091
        %v3295 = vpop.f32.mrf.mxu0
        %v3296 = vadd.f32 %v3267, %v3295
        %v3297 = vpop.f32.mrf.mxu0
        %v3298 = vadd.f32 %v3269, %v3297
        %3299 = vmatmul.bf16.gmra.mxu0 %v1092
        %v3300 = vpop.f32.mrf.mxu0
        %v3301 = vadd.f32 %v3272, %v3300
        %v3302 = vpop.f32.mrf.mxu0
        %v3303 = vadd.f32 %v3274, %v3302
        %3304 = vdwg.mxu0
        %vm3305 = vcmp.ge.f32.partialorder %v2822, 0.0
        %vm3306 = vcmp.ge.f32.partialorder %v3286, 0.0
        %vm3307 = vcmp.ge.f32.partialorder %v2824, 0.0
        %vm3308 = vcmp.ge.f32.partialorder %v3288, 0.0
        %vm3309 = vcmp.ge.f32.partialorder %v2827, 0.0
        %vm3310 = vcmp.ge.f32.partialorder %v3291, 0.0
        %vm3311 = vcmp.ge.f32.partialorder %v2829, 0.0
        %vm3312 = vcmp.ge.f32.partialorder %v3293, 0.0
        %vm3313 = vcmp.ge.f32.partialorder %v2832, 0.0
        %vm3314 = vcmp.ge.f32.partialorder %v3296, 0.0
        %vm3315 = vcmp.ge.f32.partialorder %v2834, 0.0
        %vm3316 = vcmp.ge.f32.partialorder %v3298, 0.0
        %vm3317 = vcmp.ge.f32.partialorder %v2837, 0.0
        %vm3318 = vcmp.ge.f32.partialorder %v3301, 0.0
        %vm3319 = vcmp.ge.f32.partialorder %v2839, 0.0
        %vm3320 = vcmp.ge.f32.partialorder %v3303, 0.0
        %v3321 = vmul.f32 %v2822, 0.01
        %v3322 = vmul.f32 %v3286, 0.01
        %v3323 = vmul.f32 %v2824, 0.01
        %v3324 = vmul.f32 %v3288, 0.01
        %v3325 = vmul.f32 %v2827, 0.01
        %v3326 = vmul.f32 %v3291, 0.01
        %v3327 = vmul.f32 %v2829, 0.01
        %v3328 = vmul.f32 %v3293, 0.01
        %v3329 = vmul.f32 %v2832, 0.01
        %v3330 = vmul.f32 %v3296, 0.01
        %v3331 = vmul.f32 %v2834, 0.01
        %v3332 = vmul.f32 %v3298, 0.01
        %v3333 = vmul.f32 %v2837, 0.01
        %v3334 = vmul.f32 %v3301, 0.01
        %v3335 = vmul.f32 %v2839, 0.01
        %v3336 = vmul.f32 %v3303, 0.01
        %v3337 = vsel %vm3305, %v2822, %v3321
        %v3338 = vsel %vm3306, %v3286, %v3322
        %v3339 = vsel %vm3307, %v2824, %v3323
        %v3340 = vsel %vm3308, %v3288, %v3324
        %v3341 = vsel %vm3309, %v2827, %v3325
        %v3342 = vsel %vm3310, %v3291, %v3326
        %v3343 = vsel %vm3311, %v2829, %v3327
        %v3344 = vsel %vm3312, %v3293, %v3328
        %v3345 = vsel %vm3313, %v2832, %v3329
        %v3346 = vsel %vm3314, %v3296, %v3330
        %v3347 = vsel %vm3315, %v2834, %v3331
        %v3348 = vsel %vm3316, %v3298, %v3332
        %v3349 = vsel %vm3317, %v2837, %v3333
        %v3350 = vsel %vm3318, %v3301, %v3334
        %v3351 = vsel %vm3319, %v2839, %v3335
        %v3352 = vsel %vm3320, %v3303, %v3336
        %3353 = vst [vmem:[%s185] sm:$0xff] %v3337
        %3354 = vst [vmem:[%s185 + $0x8] sm:$0xff] %v3338
        %3355 = vst [vmem:[%s185 + $0x10] sm:$0xff] %v3339
        %3356 = vst [vmem:[%s185 + $0x18] sm:$0xff] %v3340
        %3357 = vst [vmem:[%s185 + $0x20] sm:$0xff] %v3341
        %3358 = vst [vmem:[%s185 + $0x28] sm:$0xff] %v3342
        %3359 = vst [vmem:[%s185 + $0x30] sm:$0xff] %v3343
        %3360 = vst [vmem:[%s185 + $0x38] sm:$0xff] %v3344
        %3361 = vst [vmem:[%s185 + $0x40] sm:$0xff] %v3345
        %3362 = vst [vmem:[%s185 + $0x48] sm:$0xff] %v3346
        %3363 = vst [vmem:[%s185 + $0x50] sm:$0xff] %v3347
        %3364 = vst [vmem:[%s185 + $0x58] sm:$0xff] %v3348
        %3365 = vst [vmem:[%s185 + $0x60] sm:$0xff] %v3349
        %3366 = vst [vmem:[%s185 + $0x68] sm:$0xff] %v3350
        %3367 = vst [vmem:[%s185 + $0x70] sm:$0xff] %v3351
        %3368 = vst [vmem:[%s185 + $0x78] sm:$0xff] %v3352
        %s3369 = sand.u32 %s109, 1
        %s3370 = scalar_lea.sflag [#allocation3], %s3369
        %s3371 = sand.u32 %s109, 1
        %s3372 = smul.addr %s3371, 128
        %s3373 = scalar_lea.vmem [#allocation2], %s3372
        // Predicated region
        $region33: #{tpu_custom_call.1} parent=31 // pred_check
          %p3374 = pneg %p119
        $region34: #{tpu_custom_call.1} parent=31 // pred_check_branch
          %3376 = sbr.rel (%p3374) target = $region36
        $region35: #{tpu_custom_call.1} parent=31 // pred_region
          %s3377 = smul.u32 8, %s22
          %3379 = vsyncadd %s3370, 0
          %s3380 = smul.addr %s3377, 2
          %s3381 = smul.addr %s21, 16
          %s3382 = sadd.s32 %s3380, %s3381
          %s3383 = smul.addr %s3382, 8
          %s3384 = scalar_lea.hbm %s3, %s3383
          %s3385 = sshll.u32 %s3373, 4
          %s3386 = int_to_ptr.vmem [resolvable:$true] %s3385
          %s3387 = sshll.u32 %s3384, 4
          %s3388 = int_to_ptr.hbm [resolvable:$true] %s3387
          %3393 = dma.vmem_to_hbm [thread:$0]  %s3386, 2048, %s3388, %s3370, 256, 256, 16
        $region36: #{tpu_custom_call.1} parent=31 // pred_fallthru
          _
      $region32: #{tpu_custom_call.1} parent=5 // pred_fallthru
        _
      %p3394 = scmp.le.s32.totalorder 2, %s12
      // Predicated region
      $region37: #{tpu_custom_call.1} parent=5 // pred_check
        %p3395 = pneg %p3394
      $region38: #{tpu_custom_call.1} parent=5 // pred_check_branch
        %3397 = sbr.rel (%p3395) target = $region40
      $region39: #{tpu_custom_call.1} parent=5 // pred_region
        %s3398 = ssub.s32 %s12, 2
        // Predicated region
        $region41: #{tpu_custom_call.1} parent=39 // pred_check
          %p3399 = pneg %p125
        $region42: #{tpu_custom_call.1} parent=39 // pred_check_branch
          %3401 = sbr.rel (%p3399) target = $region44
        $region43: #{tpu_custom_call.1} parent=39 // pred_region
          %s3402 = sand.u32 %s110, 1
          %s3403 = scalar_lea.sflag [#allocation3], %s3402
          %s3404 = sand.u32 %s110, 1
          %s3405 = smul.addr %s3404, 128
          %s3406 = scalar_lea.vmem [#allocation2], %s3405
          %3408 = dma.done %s3403, 2048
        $region44: #{tpu_custom_call.1} parent=39 // pred_fallthru
          _
      $region40: #{tpu_custom_call.1} parent=5 // pred_fallthru
        _
    $region6: #{tpu_custom_call.1} parent=1 // loop_footer
      %s16 = sadd.s32 1, %s12
    $region7: #{tpu_custom_call.1} parent=1 // loop_footer_branch
      %11 = sbr.rel target = $region3
    $region8: #{tpu_custom_call.1} parent=1 // loop_exit
      _
    %3409 = vsyncpa [#allocation3], 1
    %s3410 = scalar_lea.sflag [#allocation3], 1
    %3411 = vsyncpa %s3410, 1

</llo_original>
